<compile_context>
chip_gen: v6e
topology: v6e:2x2x1
jax: 0.10.0
libtpu: 0.0.40
codegen_flags: <defaults>
</compile_context>

<pallas_src>
import functools
import numpy as np
import jax
import jax.numpy as jnp
from jax.experimental import pallas as pl
from jax.experimental.pallas import tpu as pltpu


# ----------------------------- Pallas fused matmul + bias + ReLU -----------------------------

def _mm_bias_kernel(a_ref, b_ref, bias_ref, o_ref, *, apply_relu):
    # Single full-K block: one MXU matmul per grid cell, f32 accumulate,
    # f32 epilogue (bias + ReLU), cast only at the final store.
    acc = jnp.dot(a_ref[...], b_ref[...], preferred_element_type=jnp.float32)
    acc = acc + bias_ref[...]
    if apply_relu:
        acc = jnp.maximum(acc, 0.0)
    o_ref[...] = acc.astype(o_ref.dtype)


def _round_up(v, m):
    return -(-v // m) * m


def pallas_matmul_bias(a, b, bias, *, relu, bias_axis, out_dtype=jnp.float32,
                       tm_max=256, tn_max=256):
    """out = a @ b + bias (optional ReLU).

    a: (M, K), b: (K, N) -> (M, N). Operands are cast to bf16 (MXU-native);
    accumulation is f32. bias broadcasts along rows (bias_axis=0, shape (M,))
    or along columns (bias_axis=1, shape (N,)). K is a single full block.
    """
    M, K = a.shape
    K2, N = b.shape
    assert K == K2

    a = a.astype(jnp.bfloat16)
    b = b.astype(jnp.bfloat16)
    bias = bias.astype(jnp.float32)

    # Row tile: full rows rounded to the 8-sublane when small, else 256-row tiles.
    tm = _round_up(M, 8) if M <= tm_max else tm_max
    # Lane tile: full width rounded to 128 (lane-dense, unmasked stores) when
    # small, else 256-wide tiles (>=2 parallel blocks for megacore).
    tn = _round_up(N, 128) if N <= tn_max else tn_max
    Mp = _round_up(M, tm)
    Np = _round_up(N, tn)

    if Mp != M:
        a = jnp.pad(a, ((0, Mp - M), (0, 0)))
    if Np != N:
        b = jnp.pad(b, ((0, 0), (0, Np - N)))

    if bias_axis == 0:
        if Mp != M:
            bias = jnp.pad(bias, (0, Mp - M))
        bias2 = bias.reshape(Mp, 1)
        bias_spec = pl.BlockSpec((tm, 1), lambda i, j: (i, 0))
    else:
        if Np != N:
            bias = jnp.pad(bias, (0, Np - N))
        bias2 = bias.reshape(1, Np)
        bias_spec = pl.BlockSpec((1, tn), lambda i, j: (0, j))

    grid = (Mp // tm, Np // tn)
    kernel = functools.partial(_mm_bias_kernel, apply_relu=relu)

    # Largest double-buffered block here is the (1568, 256) bf16 Linear weight
    # tile (~0.8 MiB x2) -- far below the default scoped VMEM limit on all gens.
    out = pl.pallas_call(
        kernel,
        out_shape=jax.ShapeDtypeStruct((Mp, Np), out_dtype),
        grid=grid,
        in_specs=[
            pl.BlockSpec((tm, K), lambda i, j: (i, 0)),   # full-K row block
            pl.BlockSpec((K, tn), lambda i, j: (0, j)),   # full-K column block
            bias_spec,
        ],
        out_specs=pl.BlockSpec((tm, tn), lambda i, j: (i, j)),
        compiler_params=pltpu.CompilerParams(
            dimension_semantics=("parallel", "parallel")),
    )(a, b, bias2)

    if Mp != M or Np != N:
        out = out[:M, :N]
    return out


# ----------------------------- conv as transposed GEMM -----------------------------

def conv2d_relu(x, w_mat, bias, kh, kw, stride, lhs_spec):
    """Conv2d + ReLU, computed transposed: Y^T = W_mat @ patches^T.

    x layout is `lhs_spec` ('NCHW' for the network input, 'CNHW' afterwards).
    Returns activations in (OutC, N, OH, OW) ('CNHW'), bf16.
    """
    patches = jax.lax.conv_general_dilated_patches(
        x, filter_shape=(kh, kw), window_strides=(stride, stride),
        padding='VALID', dimension_numbers=(lhs_spec, 'HWIO', 'CNHW'))
    k, n, oh, ow = patches.shape             # feature dim ordered (C, KH, KW)
    pat = patches.reshape(k, n * oh * ow)    # (K, N*OH*OW) -- already "transposed"
    y = pallas_matmul_bias(w_mat, pat, bias, relu=True, bias_axis=0,
                           out_dtype=jnp.bfloat16)        # (OutC, N*OH*OW)
    return y.reshape(-1, n, oh, ow)


# ----------------------------- parameter init (deterministic, precomputed) -----------------------------

def _orthogonal(key, shape, gain=1.0):
    """Mimics nn.init.orthogonal_ on a weight of given shape (flattened to 2D)."""
    rows = shape[0]
    cols = int(np.prod(shape[1:]))
    big, small = max(rows, cols), min(rows, cols)
    a = jax.random.normal(key, (big, small), dtype=jnp.float32)
    q, r = jnp.linalg.qr(a)
    q = q * jnp.sign(jnp.diagonal(r))
    if rows < cols:
        q = q.T
    return (gain * q[:rows, :cols]).reshape(shape).astype(jnp.float32)


def make_params(num_inputs, hidden_size=512, seed=0):
    keys = jax.random.split(jax.random.PRNGKey(seed), 5)
    relu_gain = float(np.sqrt(2.0))  # nn.init.calculate_gain('relu')
    w1 = _orthogonal(keys[0], (32, num_inputs, 8, 8), relu_gain)
    w2 = _orthogonal(keys[1], (64, 32, 4, 4), relu_gain)
    w3 = _orthogonal(keys[2], (32, 64, 3, 3), relu_gain)
    wl = _orthogonal(keys[3], (hidden_size, 32 * 7 * 7), relu_gain)
    wc = _orthogonal(keys[4], (1, hidden_size), 1.0)
    return {
        # conv weights pre-reshaped to (OutC, InC*KH*KW), bf16; /255 folded into w1.
        "w1m": (w1 / 255.0).reshape(32, num_inputs * 8 * 8).astype(jnp.bfloat16),
        "b1": jnp.zeros((32,), jnp.float32),
        "w2m": w2.reshape(64, 32 * 4 * 4).astype(jnp.bfloat16),
        "b2": jnp.zeros((64,), jnp.float32),
        "w3m": w3.reshape(32, 64 * 3 * 3).astype(jnp.bfloat16),
        "b3": jnp.zeros((32,), jnp.float32),
        # hidden Linear pre-transposed to (K, hidden), bf16.
        "wlt": wl.T.astype(jnp.bfloat16),
        "bl": jnp.zeros((hidden_size,), jnp.float32),
        # critic head stays f32, pre-transposed to (hidden, 1).
        "wct": wc.T.astype(jnp.float32),
        "bc": jnp.zeros((1,), jnp.float32),
    }


# ----------------------------- CNNBase forward -----------------------------

def cnn_base_forward(params, inputs, rnn_hxs, masks):
    """Equivalent of CNNBase.forward (recurrent=False).
    inputs: (N, C, 84, 84) NCHW; returns (value (N,1), features (N,512), rnn_hxs)."""
    del masks  # only used by the recurrent path
    n = inputs.shape[0]
    x = inputs.astype(jnp.bfloat16)  # /255 is folded into w1m
    x = conv2d_relu(x, params["w1m"], params["b1"], 8, 8, 4, 'NCHW')   # (32, N, 20, 20)
    x = conv2d_relu(x, params["w2m"], params["b2"], 4, 4, 2, 'CNHW')   # (64, N, 9, 9)
    x = conv2d_relu(x, params["w3m"], params["b3"], 3, 3, 1, 'CNHW')   # (32, N, 7, 7)
    # Flatten per-sample in torch (C, H, W) order: (C, N, H, W) -> (N, C*H*W).
    c, _, oh, ow = x.shape
    x_flat = jnp.transpose(x, (1, 0, 2, 3)).reshape(n, c * oh * ow)
    feats = pallas_matmul_bias(x_flat, params["wlt"], params["bl"],
                               relu=True, bias_axis=1, out_dtype=jnp.float32)  # (N, 512)
    # Critic head (N,512)@(512,1): plain jnp GEMV, too tiny for a pallas_call.
    value = feats @ params["wct"] + params["bc"]                               # (N, 1)
    # TODO(synk): recurrent GRU path (_forward_gru) not implemented; CNNBase default is recurrent=False.
    return value, feats, rnn_hxs


if __name__ == "__main__":
    num_inputs = 4
    batch = 2
    hidden_size = 512
    # Spatial size must be 84 so the conv stack (8/4 -> 4/2 -> 3/1) yields 7x7,
    # matching Linear(32*7*7, hidden_size).
    key = jax.random.PRNGKey(0)
    k_in, _ = jax.random.split(key)
    inputs = jax.random.uniform(k_in, (batch, num_inputs, 84, 84),
                                dtype=jnp.float32, minval=0.0, maxval=255.0)
    rnn_hxs = jnp.zeros((batch, 1), jnp.float32)   # recurrent_hidden_state_size == 1
    masks = jnp.ones((batch, 1), jnp.float32)

    params = make_params(num_inputs, hidden_size)

    fwd = jax.jit(cnn_base_forward)
    value, feats, hxs_out = fwd(params, inputs, rnn_hxs, masks)
    jax.block_until_ready((value, feats, hxs_out))

    assert value.shape == (batch, 1)
    assert feats.shape == (batch, hidden_size)
    assert hxs_out.shape == rnn_hxs.shape
    assert bool(jnp.all(jnp.isfinite(value)))
    assert bool(jnp.all(jnp.isfinite(feats)))
    print("KERNEL_OK")
</pallas_src>

<mosaic_0001>
module attributes {stable_mosaic.version = 11 : i64} {
  func.func @_mm_bias_kernel(%arg0: i32, %arg1: i32, %arg2: memref<32x256xbf16, #tpu.memory_space<vmem>>, %arg3: memref<256x256xbf16, #tpu.memory_space<vmem>>, %arg4: memref<32x1xf32, #tpu.memory_space<vmem>>, %arg5: memref<32x256xbf16, #tpu.memory_space<vmem>>) attributes {dimension_semantics = [#tpu.dimension_semantics<parallel>, #tpu.dimension_semantics<parallel>], iteration_bounds = array<i64: 1, 4>, scalar_prefetch = 0 : i64, scratch_operands = 0 : i64, tpu.core_type = #tpu.core_type<tc>, window_params = [{transform_indices = @transform_0, window_bounds = array<i64: 32, 256>}, {transform_indices = @transform_1, window_bounds = array<i64: 256, 256>}, {transform_indices = @transform_2, window_bounds = array<i64: 32, 1>}, {transform_indices = @transform_3, window_bounds = array<i64: 32, 256>}]} {
    %c0 = arith.constant 0 : index
    %c0_0 = arith.constant 0 : index
    %0 = vector.load %arg2[%c0, %c0_0] : memref<32x256xbf16, #tpu.memory_space<vmem>>, vector<32x256xbf16>
    %c0_1 = arith.constant 0 : index
    %c0_2 = arith.constant 0 : index
    %1 = vector.load %arg3[%c0_1, %c0_2] : memref<256x256xbf16, #tpu.memory_space<vmem>>, vector<256x256xbf16>
    %cst = arith.constant dense<0.000000e+00> : vector<32x256xf32>
    %2 = tpu.matmul %0, %1, %cst {dimension_numbers = #tpu.dot_dimension_numbers<[1], [0], [0], [1], [0, 0, 1, 1], [], []>} : vector<32x256xbf16>, vector<256x256xbf16>, vector<32x256xf32> -> vector<32x256xf32>
    %c0_3 = arith.constant 0 : index
    %c0_4 = arith.constant 0 : index
    %3 = vector.load %arg4[%c0_3, %c0_4] : memref<32x1xf32, #tpu.memory_space<vmem>>, vector<32x1xf32>
    %4 = vector.broadcast %3 : vector<32x1xf32> to vector<32x256xf32>
    %5 = arith.addf %2, %4 : vector<32x256xf32>
    %cst_5 = arith.constant 0.000000e+00 : f32
    %6 = vector.broadcast %cst_5 : f32 to vector<32x256xf32>
    %7 = arith.maximumf %5, %6 : vector<32x256xf32>
    %8 = arith.truncf %7 : vector<32x256xf32> to vector<32x256xbf16>
    %c0_6 = arith.constant 0 : index
    %c0_7 = arith.constant 0 : index
    %9 = vector.load %arg5[%c0_6, %c0_7] : memref<32x256xbf16, #tpu.memory_space<vmem>>, vector<32x256xbf16>
    tpu.vector_store %arg5[%c0_6, %c0_7], %8 {strides = array<i32>} : memref<32x256xbf16, #tpu.memory_space<vmem>>, vector<32x256xbf16>,
    return
  }
  func.func @transform_0(%arg0: i32, %arg1: i32) -> (i32, i32) {
    %c0_i32 = arith.constant 0 : i32
    %c0_i32_0 = arith.constant 0 : i32
    return %arg0, %c0_i32 : i32, i32
  }
  func.func @transform_1(%arg0: i32, %arg1: i32) -> (i32, i32) {
    %c0_i32 = arith.constant 0 : i32
    %c0_i32_0 = arith.constant 0 : i32
    return %c0_i32, %arg1 : i32, i32
  }
  func.func @transform_2(%arg0: i32, %arg1: i32) -> (i32, i32) {
    %c0_i32 = arith.constant 0 : i32
    %c0_i32_0 = arith.constant 0 : i32
    return %arg0, %c0_i32 : i32, i32
  }
  func.func @transform_3(%arg0: i32, %arg1: i32) -> (i32, i32) {
    %c0_i32 = arith.constant 0 : i32
    return %arg0, %arg1 : i32, i32
  }
}

module attributes {stable_mosaic.version = 11 : i64} {
  func.func @_mm_bias_kernel(%arg0: i32, %arg1: i32, %arg2: memref<64x512xbf16, #tpu.memory_space<vmem>>, %arg3: memref<512x256xbf16, #tpu.memory_space<vmem>>, %arg4: memref<64x1xf32, #tpu.memory_space<vmem>>, %arg5: memref<64x256xbf16, #tpu.memory_space<vmem>>) attributes {dimension_semantics = [#tpu.dimension_semantics<parallel>, #tpu.dimension_semantics<parallel>], iteration_bounds = array<i64: 1, 1>, scalar_prefetch = 0 : i64, scratch_operands = 0 : i64, tpu.core_type = #tpu.core_type<tc>, window_params = [{transform_indices = @transform_0, window_bounds = array<i64: 64, 512>}, {transform_indices = @transform_1, window_bounds = array<i64: 512, 256>}, {transform_indices = @transform_2, window_bounds = array<i64: 64, 1>}, {transform_indices = @transform_3, window_bounds = array<i64: 64, 256>}]} {
    %c0 = arith.constant 0 : index
    %c0_0 = arith.constant 0 : index
    %0 = vector.load %arg2[%c0, %c0_0] : memref<64x512xbf16, #tpu.memory_space<vmem>>, vector<64x512xbf16>
    %c0_1 = arith.constant 0 : index
    %c0_2 = arith.constant 0 : index
    %1 = vector.load %arg3[%c0_1, %c0_2] : memref<512x256xbf16, #tpu.memory_space<vmem>>, vector<512x256xbf16>
    %cst = arith.constant dense<0.000000e+00> : vector<64x256xf32>
    %2 = tpu.matmul %0, %1, %cst {dimension_numbers = #tpu.dot_dimension_numbers<[1], [0], [0], [1], [0, 0, 1, 1], [], []>} : vector<64x512xbf16>, vector<512x256xbf16>, vector<64x256xf32> -> vector<64x256xf32>
    %c0_3 = arith.constant 0 : index
    %c0_4 = arith.constant 0 : index
    %3 = vector.load %arg4[%c0_3, %c0_4] : memref<64x1xf32, #tpu.memory_space<vmem>>, vector<64x1xf32>
    %4 = vector.broadcast %3 : vector<64x1xf32> to vector<64x256xf32>
    %5 = arith.addf %2, %4 : vector<64x256xf32>
    %cst_5 = arith.constant 0.000000e+00 : f32
    %6 = vector.broadcast %cst_5 : f32 to vector<64x256xf32>
    %7 = arith.maximumf %5, %6 : vector<64x256xf32>
    %8 = arith.truncf %7 : vector<64x256xf32> to vector<64x256xbf16>
    %c0_6 = arith.constant 0 : index
    %c0_7 = arith.constant 0 : index
    %9 = vector.load %arg5[%c0_6, %c0_7] : memref<64x256xbf16, #tpu.memory_space<vmem>>, vector<64x256xbf16>
    tpu.vector_store %arg5[%c0_6, %c0_7], %8 {strides = array<i32>} : memref<64x256xbf16, #tpu.memory_space<vmem>>, vector<64x256xbf16>,
    return
  }
  func.func @transform_0(%arg0: i32, %arg1: i32) -> (i32, i32) {
    %c0_i32 = arith.constant 0 : i32
    %c0_i32_0 = arith.constant 0 : i32
    return %arg0, %c0_i32 : i32, i32
  }
  func.func @transform_1(%arg0: i32, %arg1: i32) -> (i32, i32) {
    %c0_i32 = arith.constant 0 : i32
    %c0_i32_0 = arith.constant 0 : i32
    return %c0_i32, %arg1 : i32, i32
  }
  func.func @transform_2(%arg0: i32, %arg1: i32) -> (i32, i32) {
    %c0_i32 = arith.constant 0 : i32
    %c0_i32_0 = arith.constant 0 : i32
    return %arg0, %c0_i32 : i32, i32
  }
  func.func @transform_3(%arg0: i32, %arg1: i32) -> (i32, i32) {
    %c0_i32 = arith.constant 0 : i32
    return %arg0, %arg1 : i32, i32
  }
}

module attributes {stable_mosaic.version = 11 : i64} {
  func.func @_mm_bias_kernel(%arg0: i32, %arg1: i32, %arg2: memref<32x576xbf16, #tpu.memory_space<vmem>>, %arg3: memref<576x128xbf16, #tpu.memory_space<vmem>>, %arg4: memref<32x1xf32, #tpu.memory_space<vmem>>, %arg5: memref<32x128xbf16, #tpu.memory_space<vmem>>) attributes {dimension_semantics = [#tpu.dimension_semantics<parallel>, #tpu.dimension_semantics<parallel>], iteration_bounds = array<i64: 1, 1>, scalar_prefetch = 0 : i64, scratch_operands = 0 : i64, tpu.core_type = #tpu.core_type<tc>, window_params = [{transform_indices = @transform_0, window_bounds = array<i64: 32, 576>}, {transform_indices = @transform_1, window_bounds = array<i64: 576, 128>}, {transform_indices = @transform_2, window_bounds = array<i64: 32, 1>}, {transform_indices = @transform_3, window_bounds = array<i64: 32, 128>}]} {
    %c0 = arith.constant 0 : index
    %c0_0 = arith.constant 0 : index
    %0 = vector.load %arg2[%c0, %c0_0] : memref<32x576xbf16, #tpu.memory_space<vmem>>, vector<32x576xbf16>
    %c0_1 = arith.constant 0 : index
    %c0_2 = arith.constant 0 : index
    %1 = vector.load %arg3[%c0_1, %c0_2] : memref<576x128xbf16, #tpu.memory_space<vmem>>, vector<576x128xbf16>
    %cst = arith.constant dense<0.000000e+00> : vector<32x128xf32>
    %2 = tpu.matmul %0, %1, %cst {dimension_numbers = #tpu.dot_dimension_numbers<[1], [0], [0], [1], [0, 0, 1, 1], [], []>} : vector<32x576xbf16>, vector<576x128xbf16>, vector<32x128xf32> -> vector<32x128xf32>
    %c0_3 = arith.constant 0 : index
    %c0_4 = arith.constant 0 : index
    %3 = vector.load %arg4[%c0_3, %c0_4] : memref<32x1xf32, #tpu.memory_space<vmem>>, vector<32x1xf32>
    %4 = vector.broadcast %3 : vector<32x1xf32> to vector<32x128xf32>
    %5 = arith.addf %2, %4 : vector<32x128xf32>
    %cst_5 = arith.constant 0.000000e+00 : f32
    %6 = vector.broadcast %cst_5 : f32 to vector<32x128xf32>
    %7 = arith.maximumf %5, %6 : vector<32x128xf32>
    %8 = arith.truncf %7 : vector<32x128xf32> to vector<32x128xbf16>
    %c0_6 = arith.constant 0 : index
    %c0_7 = arith.constant 0 : index
    %9 = vector.load %arg5[%c0_6, %c0_7] : memref<32x128xbf16, #tpu.memory_space<vmem>>, vector<32x128xbf16>
    tpu.vector_store %arg5[%c0_6, %c0_7], %8 {strides = array<i32>} : memref<32x128xbf16, #tpu.memory_space<vmem>>, vector<32x128xbf16>,
    return
  }
  func.func @transform_0(%arg0: i32, %arg1: i32) -> (i32, i32) {
    %c0_i32 = arith.constant 0 : i32
    %c0_i32_0 = arith.constant 0 : i32
    return %arg0, %c0_i32 : i32, i32
  }
  func.func @transform_1(%arg0: i32, %arg1: i32) -> (i32, i32) {
    %c0_i32 = arith.constant 0 : i32
    %c0_i32_0 = arith.constant 0 : i32
    return %c0_i32, %arg1 : i32, i32
  }
  func.func @transform_2(%arg0: i32, %arg1: i32) -> (i32, i32) {
    %c0_i32 = arith.constant 0 : i32
    %c0_i32_0 = arith.constant 0 : i32
    return %arg0, %c0_i32 : i32, i32
  }
  func.func @transform_3(%arg0: i32, %arg1: i32) -> (i32, i32) {
    %c0_i32 = arith.constant 0 : i32
    return %arg0, %arg1 : i32, i32
  }
}

module attributes {stable_mosaic.version = 11 : i64} {
  func.func @_mm_bias_kernel(%arg0: i32, %arg1: i32, %arg2: memref<8x1568xbf16, #tpu.memory_space<vmem>>, %arg3: memref<1568x256xbf16, #tpu.memory_space<vmem>>, %arg4: memref<1x256xf32, #tpu.memory_space<vmem>>, %arg5: memref<8x256xf32, #tpu.memory_space<vmem>>) attributes {dimension_semantics = [#tpu.dimension_semantics<parallel>, #tpu.dimension_semantics<parallel>], iteration_bounds = array<i64: 1, 2>, scalar_prefetch = 0 : i64, scratch_operands = 0 : i64, tpu.core_type = #tpu.core_type<tc>, window_params = [{transform_indices = @transform_0, window_bounds = array<i64: 8, 1568>}, {transform_indices = @transform_1, window_bounds = array<i64: 1568, 256>}, {transform_indices = @transform_2, window_bounds = array<i64: 1, 256>}, {transform_indices = @transform_3, window_bounds = array<i64: 8, 256>}]} {
    %c0 = arith.constant 0 : index
    %c0_0 = arith.constant 0 : index
    %0 = vector.load %arg2[%c0, %c0_0] : memref<8x1568xbf16, #tpu.memory_space<vmem>>, vector<8x1568xbf16>
    %c0_1 = arith.constant 0 : index
    %c0_2 = arith.constant 0 : index
    %1 = vector.load %arg3[%c0_1, %c0_2] : memref<1568x256xbf16, #tpu.memory_space<vmem>>, vector<1568x256xbf16>
    %cst = arith.constant dense<0.000000e+00> : vector<8x256xf32>
    %2 = tpu.matmul %0, %1, %cst {dimension_numbers = #tpu.dot_dimension_numbers<[1], [0], [0], [1], [0, 0, 1, 1], [], []>} : vector<8x1568xbf16>, vector<1568x256xbf16>, vector<8x256xf32> -> vector<8x256xf32>
    %c0_3 = arith.constant 0 : index
    %c0_4 = arith.constant 0 : index
    %3 = vector.load %arg4[%c0_3, %c0_4] : memref<1x256xf32, #tpu.memory_space<vmem>>, vector<1x256xf32>
    %4 = vector.broadcast %3 : vector<1x256xf32> to vector<8x256xf32>
    %5 = arith.addf %2, %4 : vector<8x256xf32>
    %cst_5 = arith.constant 0.000000e+00 : f32
    %6 = vector.broadcast %cst_5 : f32 to vector<8x256xf32>
    %7 = arith.maximumf %5, %6 : vector<8x256xf32>
    %c0_6 = arith.constant 0 : index
    %c0_7 = arith.constant 0 : index
    %8 = vector.load %arg5[%c0_6, %c0_7] : memref<8x256xf32, #tpu.memory_space<vmem>>, vector<8x256xf32>
    tpu.vector_store %arg5[%c0_6, %c0_7], %7 {strides = array<i32>} : memref<8x256xf32, #tpu.memory_space<vmem>>, vector<8x256xf32>,
    return
  }
  func.func @transform_0(%arg0: i32, %arg1: i32) -> (i32, i32) {
    %c0_i32 = arith.constant 0 : i32
    %c0_i32_0 = arith.constant 0 : i32
    return %arg0, %c0_i32 : i32, i32
  }
  func.func @transform_1(%arg0: i32, %arg1: i32) -> (i32, i32) {
    %c0_i32 = arith.constant 0 : i32
    %c0_i32_0 = arith.constant 0 : i32
    return %c0_i32, %arg1 : i32, i32
  }
  func.func @transform_2(%arg0: i32, %arg1: i32) -> (i32, i32) {
    %c0_i32 = arith.constant 0 : i32
    %c0_i32_0 = arith.constant 0 : i32
    return %c0_i32, %arg1 : i32, i32
  }
  func.func @transform_3(%arg0: i32, %arg1: i32) -> (i32, i32) {
    %c0_i32 = arith.constant 0 : i32
    return %arg0, %arg1 : i32, i32
  }
}

</mosaic_0001>

<llo_original>
// kernel: cnn_base_forward.4
$region0: #{cnn_base_forward.4}
  #allocation0 [shape = 'u32[]', space=smem, size = 0x4, offset = 0x4, fixed_abs, tag = 'smem constant byte address 0x4 - core index']
  #allocation1 [shape = 'u32[144,128]{1,0:T(1,128)}', space=vmem, size = 0x12000, scoped, tag = 'internal scratch']
  %s0 = inlined_call_operand.vmem [shape: bf16[32,256], index: 0, kind: input, shape index: {}]
  %s1 = inlined_call_operand.vmem [shape: bf16[256,1024], index: 1, kind: input, shape index: {}]
  %s2 = inlined_call_operand.vmem [shape: f32[32,1], index: 2, kind: input, shape index: {}]
  %s3 = inlined_call_operand.vmem [shape: bf16[32,1024], index: 3, kind: output, shape index: {}]
  %s4 = sld [smem:[#allocation0]]
  $region117: #{cnn_base_forward.4} parent=0
    _
  %s6 = ssub.s32 1, %s4
  %s7 = scalar_select 0, %s6, %s4
  $region1: #{cnn_base_forward.4} parent=0
    #allocation2 [shape = 'u8[262144]{0}', space=vmem, size = 0x40000, scoped, tag = 'input window, operand 1']
    #allocation3 [shape = 'u8[32768]{0}', space=vmem, size = 0x8000, scoped, tag = 'output window, operand 0']
    loop: start=0, step=1, limit=6
    $region2: #{cnn_base_forward.4} parent=1 // loop_pre_header
      _
    $region3: #{cnn_base_forward.4} parent=1 // loop_header
      %s9 = sphi 0, %s13
      %p10 = scmp.ge.s32.totalorder %s9, 6
      %s16 = sphi 0, %s28
      %s17 = sphi 0, %s24
      %s18 = sphi 0, %s16
      %s19 = sphi 0, %s17
      %s20 = sphi 0, %s18
      %s21 = sphi 0, %s19
      %s31 = sphi 0, %s33
      %s34 = sphi 0, %s31
      %s35 = sphi 0, %s34
      %s51 = sphi 0, %s35
      %s57 = sphi 0, %s59
      %s60 = sphi 0, %s57
      %s61 = sphi 0, %s60
      %s77 = sphi 0, %s61
      %s83 = sphi 0, %s85
      %s86 = sphi 0, %s83
      %s87 = sphi 0, %s86
      %s103 = sphi 0, %s87
      %s111 = sphi 0, %s113
      %s114 = sphi 0, %s111
      %s115 = sphi 0, %s114
      %s131 = sphi 0, %s115
    $region4: #{cnn_base_forward.4} parent=1 // loop_header_branch
      %12 = sbr.rel (%p10) target = $region8
    $region5: #{cnn_base_forward.4} parent=1 // loop_body
      %s14 = ssub.s32 %s9, 1
      %s15 = ssub.s32 %s9, 2
      %s22 = sadd.s32 1, %s17
      %p23 = scmp.ge.s32.totalorder %s22, 4
      %s24 = scalar_select %p23, 0, %s22
      %s25 = sadd.s32 1, %s16
      %s26 = scalar_select %p23, %s25, %s16
      %p27 = scmp.ge.s32.totalorder %s26, 1
      %s28 = scalar_select %p27, 0, %s26
      %s29 = ssub.s32 %s16, %s28
      %p30 = scmp.eq.s32.totalorder %s29, 0
      %s32 = sadd.s32 %s31, 1
      %s33 = scalar_select %p30, %s31, %s32
      %p36 = pneg %p30
      %p37 = scmp.eq.s32.totalorder %s9, 3
      %p38 = por %p36, %p37
      %p39 = scmp.ne.s32.totalorder %s31, %s34
      %p40 = scmp.eq.s32.totalorder %s9, 0
      %p41 = por %p39, %p40
      %p42 = scmp.ne.s32.totalorder %s31, %s34
      %p43 = scmp.eq.s32.totalorder %s14, 3
      %p44 = por %p42, %p43
      %p45 = scmp.ne.s32.totalorder %s34, %s35
      %p46 = scmp.eq.s32.totalorder %s14, 0
      %p47 = por %p45, %p46
      %p48 = scmp.ne.s32.totalorder %s34, %s35
      %p49 = scmp.eq.s32.totalorder %s15, 3
      %p50 = por %p48, %p49
      %p52 = scmp.ne.s32.totalorder %s35, %s51
      %p53 = scmp.eq.s32.totalorder %s15, 0
      %p54 = por %p52, %p53
      %s55 = ssub.s32 %s17, %s24
      %p56 = scmp.eq.s32.totalorder %s55, 0
      %s58 = sadd.s32 %s57, 1
      %s59 = scalar_select %p56, %s57, %s58
      %p62 = pneg %p56
      %p63 = scmp.eq.s32.totalorder %s9, 3
      %p64 = por %p62, %p63
      %p65 = scmp.ne.s32.totalorder %s57, %s60
      %p66 = scmp.eq.s32.totalorder %s9, 0
      %p67 = por %p65, %p66
      %p68 = scmp.ne.s32.totalorder %s57, %s60
      %p69 = scmp.eq.s32.totalorder %s14, 3
      %p70 = por %p68, %p69
      %p71 = scmp.ne.s32.totalorder %s60, %s61
      %p72 = scmp.eq.s32.totalorder %s14, 0
      %p73 = por %p71, %p72
      %p74 = scmp.ne.s32.totalorder %s60, %s61
      %p75 = scmp.eq.s32.totalorder %s15, 3
      %p76 = por %p74, %p75
      %p78 = scmp.ne.s32.totalorder %s61, %s77
      %p79 = scmp.eq.s32.totalorder %s15, 0
      %p80 = por %p78, %p79
      %s81 = ssub.s32 %s16, %s28
      %p82 = scmp.eq.s32.totalorder %s81, 0
      %s84 = sadd.s32 %s83, 1
      %s85 = scalar_select %p82, %s83, %s84
      %p88 = pneg %p82
      %p89 = scmp.eq.s32.totalorder %s9, 3
      %p90 = por %p88, %p89
      %p91 = scmp.ne.s32.totalorder %s83, %s86
      %p92 = scmp.eq.s32.totalorder %s9, 0
      %p93 = por %p91, %p92
      %p94 = scmp.ne.s32.totalorder %s83, %s86
      %p95 = scmp.eq.s32.totalorder %s14, 3
      %p96 = por %p94, %p95
      %p97 = scmp.ne.s32.totalorder %s86, %s87
      %p98 = scmp.eq.s32.totalorder %s14, 0
      %p99 = por %p97, %p98
      %p100 = scmp.ne.s32.totalorder %s86, %s87
      %p101 = scmp.eq.s32.totalorder %s15, 3
      %p102 = por %p100, %p101
      %p104 = scmp.ne.s32.totalorder %s87, %s103
      %p105 = scmp.eq.s32.totalorder %s15, 0
      %p106 = por %p104, %p105
      %s107 = ssub.s32 %s16, %s28
      %s108 = ssub.s32 %s17, %s24
      %s109 = sor.u32 %s107, %s108
      %p110 = scmp.eq.s32.totalorder %s109, 0
      %s112 = sadd.s32 %s111, 1
      %s113 = scalar_select %p110, %s111, %s112
      %p116 = pneg %p110
      %p117 = scmp.eq.s32.totalorder %s9, 3
      %p118 = por %p116, %p117
      %p119 = scmp.ne.s32.totalorder %s111, %s114
      %p120 = scmp.eq.s32.totalorder %s9, 0
      %p121 = por %p119, %p120
      %p122 = scmp.ne.s32.totalorder %s111, %s114
      %p123 = scmp.eq.s32.totalorder %s14, 3
      %p124 = por %p122, %p123
      %p125 = scmp.ne.s32.totalorder %s114, %s115
      %p126 = scmp.eq.s32.totalorder %s14, 0
      %p127 = por %p125, %p126
      %p128 = scmp.ne.s32.totalorder %s114, %s115
      %p129 = scmp.eq.s32.totalorder %s15, 3
      %p130 = por %p128, %p129
      %p132 = scmp.ne.s32.totalorder %s115, %s131
      %p133 = scmp.eq.s32.totalorder %s15, 0
      %p134 = por %p132, %p133
      %p135 = scmp.le.s32.totalorder 1, %s9
      %p136 = scmp.lt.s32.totalorder %s9, 5
      %p137 = pnand %p135, %p136
      %p138 = pneg %p137
      // Predicated region
      $region9: #{cnn_base_forward.4} parent=5 // pred_check
        _
      $region10: #{cnn_base_forward.4} parent=5 // pred_check_branch
        %140 = sbr.rel (%p137) target = $region12
      $region11: #{cnn_base_forward.4} parent=5 // pred_region
        %s141 = ssub.s32 %s9, 1
        // Predicated region
        $region13: #{cnn_base_forward.4} parent=11 // pred_check
          %p142 = pneg %p47
        $region14: #{cnn_base_forward.4} parent=11 // pred_check_branch
          %144 = sbr.rel (%p142) target = $region16
        $region15: #{cnn_base_forward.4} parent=11 // pred_region
          %s145 = smul.u32 4, %s18
          %p146 = scmp.lt.s32.totalorder %s145, 3
          %s147 = scalar_select %p146, %s145, 3
          %s148 = smul.addr %s147, 2
          %s149 = smul.addr %s148, 4
          %s150 = scalar_lea.vmem %s0, %s149
          %s151 = smul.u32 4, %s18
        $region16: #{cnn_base_forward.4} parent=11 // pred_fallthru
          _
        // Predicated region
        $region17: #{cnn_base_forward.4} parent=11 // pred_check
          %p152 = pneg %p99
        $region18: #{cnn_base_forward.4} parent=11 // pred_check_branch
          %154 = sbr.rel (%p152) target = $region20
        $region19: #{cnn_base_forward.4} parent=11 // pred_region
          %s155 = smul.u32 4, %s18
          %p156 = scmp.lt.s32.totalorder %s155, 3
          %s157 = scalar_select %p156, %s155, 3
          %s158 = smul.addr %s157, 8
          %s159 = scalar_lea.vmem %s2, %s158
          %s160 = smul.u32 4, %s18
        $region20: #{cnn_base_forward.4} parent=11 // pred_fallthru
          _
      $region12: #{cnn_base_forward.4} parent=5 // pred_fallthru
        _
      %p161 = scmp.lt.s32.totalorder %s9, 4
      // Predicated region
      $region21: #{cnn_base_forward.4} parent=5 // pred_check
        %p162 = pneg %p161
      $region22: #{cnn_base_forward.4} parent=5 // pred_check_branch
        %164 = sbr.rel (%p162) target = $region24
      $region23: #{cnn_base_forward.4} parent=5 // pred_region
        // Predicated region
        $region25: #{cnn_base_forward.4} parent=23 // pred_check
          %p165 = pneg %p67
        $region26: #{cnn_base_forward.4} parent=23 // pred_check_branch
          %167 = sbr.rel (%p165) target = $region28
        $region27: #{cnn_base_forward.4} parent=23 // pred_region
          %s168 = sand.u32 %s57, 1
          %s169 = sand.u32 %s57, 1
          %s170 = smul.addr %s169, 256
          %s171 = scalar_lea.vmem [#allocation2], %s170
          %s172 = smul.u32 2, %s17
          %s173 = smul.addr %s172, 4
          %s174 = scalar_lea.vmem %s1, %s173
          // Predicated region
          $region29: #{cnn_base_forward.4} parent=27 // pred_check
            _
          $region30: #{cnn_base_forward.4} parent=27 // pred_check_branch
            %176 = sbr.rel (0) target = $region32
          $region31: #{cnn_base_forward.4} parent=27 // pred_region
            // Predicated region
            $region33: #{cnn_base_forward.4} parent=31 // pred_check
              _
            $region34: #{cnn_base_forward.4} parent=31 // pred_check_branch
              %178 = sbr.rel (0) target = $region36
            $region35: #{cnn_base_forward.4} parent=31 // pred_region
              // Predicated region
              $region48: #{cnn_base_forward.4} parent=35 // pred_check
                _
              $region49: #{cnn_base_forward.4} parent=35 // pred_check_branch
                %256 = sbr.rel (0) target = $region51
              $region50: #{cnn_base_forward.4} parent=35 // pred_region
                loop: start=0, step=1, limit=1
                $region52: #{cnn_base_forward.4} parent=50 // loop_pre_header
                  _
                $region53: #{cnn_base_forward.4} parent=50 // loop_header
                  %s258 = sphi 0, %s262
                  %p259 = scmp.ge.s32.totalorder %s258, 1
                  %s263 = sphi %s174, %s174
                  %s264 = sphi %s171, %s171
                $region54: #{cnn_base_forward.4} parent=50 // loop_header_branch
                  %261 = sbr.rel (%p259) target = $region58
                $region55: #{cnn_base_forward.4} parent=50 // loop_body
                  %v265 = vld [vmem:[%s263] sm:$0xff]
                  %266 = vst [vmem:[%s264] sm:$0xff] %v265
                  %v267 = vld [vmem:[%s263 + $0x20] sm:$0xff]
                  %268 = vst [vmem:[%s264 + $0x8] sm:$0xff] %v267
                  %v269 = vld [vmem:[%s263 + $0x40] sm:$0xff]
                  %270 = vst [vmem:[%s264 + $0x10] sm:$0xff] %v269
                  %v271 = vld [vmem:[%s263 + $0x60] sm:$0xff]
                  %272 = vst [vmem:[%s264 + $0x18] sm:$0xff] %v271
                  %v273 = vld [vmem:[%s263 + $0x80] sm:$0xff]
                  %274 = vst [vmem:[%s264 + $0x20] sm:$0xff] %v273
                  %v275 = vld [vmem:[%s263 + $0xa0] sm:$0xff]
                  %276 = vst [vmem:[%s264 + $0x28] sm:$0xff] %v275
                  %v277 = vld [vmem:[%s263 + $0xc0] sm:$0xff]
                  %278 = vst [vmem:[%s264 + $0x30] sm:$0xff] %v277
                  %v279 = vld [vmem:[%s263 + $0xe0] sm:$0xff]
                  %280 = vst [vmem:[%s264 + $0x38] sm:$0xff] %v279
                  %v281 = vld [vmem:[%s263 + $0x100] sm:$0xff]
                  %282 = vst [vmem:[%s264 + $0x40] sm:$0xff] %v281
                  %v283 = vld [vmem:[%s263 + $0x120] sm:$0xff]
                  %284 = vst [vmem:[%s264 + $0x48] sm:$0xff] %v283
                  %v285 = vld [vmem:[%s263 + $0x140] sm:$0xff]
                  %286 = vst [vmem:[%s264 + $0x50] sm:$0xff] %v285
                  %v287 = vld [vmem:[%s263 + $0x160] sm:$0xff]
                  %288 = vst [vmem:[%s264 + $0x58] sm:$0xff] %v287
                  %v289 = vld [vmem:[%s263 + $0x180] sm:$0xff]
                  %290 = vst [vmem:[%s264 + $0x60] sm:$0xff] %v289
                  %v291 = vld [vmem:[%s263 + $0x1a0] sm:$0xff]
                  %292 = vst [vmem:[%s264 + $0x68] sm:$0xff] %v291
                  %v293 = vld [vmem:[%s263 + $0x1c0] sm:$0xff]
                  %294 = vst [vmem:[%s264 + $0x70] sm:$0xff] %v293
                  %v295 = vld [vmem:[%s263 + $0x1e0] sm:$0xff]
                  %296 = vst [vmem:[%s264 + $0x78] sm:$0xff] %v295
                  %v297 = vld [vmem:[%s263 + $0x200] sm:$0xff]
                  %298 = vst [vmem:[%s264 + $0x80] sm:$0xff] %v297
                  %v299 = vld [vmem:[%s263 + $0x220] sm:$0xff]
                  %300 = vst [vmem:[%s264 + $0x88] sm:$0xff] %v299
                  %v301 = vld [vmem:[%s263 + $0x240] sm:$0xff]
                  %302 = vst [vmem:[%s264 + $0x90] sm:$0xff] %v301
                  %v303 = vld [vmem:[%s263 + $0x260] sm:$0xff]
                  %304 = vst [vmem:[%s264 + $0x98] sm:$0xff] %v303
                  %v305 = vld [vmem:[%s263 + $0x280] sm:$0xff]
                  %306 = vst [vmem:[%s264 + $0xa0] sm:$0xff] %v305
                  %v307 = vld [vmem:[%s263 + $0x2a0] sm:$0xff]
                  %308 = vst [vmem:[%s264 + $0xa8] sm:$0xff] %v307
                  %v309 = vld [vmem:[%s263 + $0x2c0] sm:$0xff]
                  %310 = vst [vmem:[%s264 + $0xb0] sm:$0xff] %v309
                  %v311 = vld [vmem:[%s263 + $0x2e0] sm:$0xff]
                  %312 = vst [vmem:[%s264 + $0xb8] sm:$0xff] %v311
                  %v313 = vld [vmem:[%s263 + $0x300] sm:$0xff]
                  %314 = vst [vmem:[%s264 + $0xc0] sm:$0xff] %v313
                  %v315 = vld [vmem:[%s263 + $0x320] sm:$0xff]
                  %316 = vst [vmem:[%s264 + $0xc8] sm:$0xff] %v315
                  %v317 = vld [vmem:[%s263 + $0x340] sm:$0xff]
                  %318 = vst [vmem:[%s264 + $0xd0] sm:$0xff] %v317
                  %v319 = vld [vmem:[%s263 + $0x360] sm:$0xff]
                  %320 = vst [vmem:[%s264 + $0xd8] sm:$0xff] %v319
                  %v321 = vld [vmem:[%s263 + $0x380] sm:$0xff]
                  %322 = vst [vmem:[%s264 + $0xe0] sm:$0xff] %v321
                  %v323 = vld [vmem:[%s263 + $0x3a0] sm:$0xff]
                  %324 = vst [vmem:[%s264 + $0xe8] sm:$0xff] %v323
                  %v325 = vld [vmem:[%s263 + $0x3c0] sm:$0xff]
                  %326 = vst [vmem:[%s264 + $0xf0] sm:$0xff] %v325
                  %v327 = vld [vmem:[%s263 + $0x3e0] sm:$0xff]
                  %328 = vst [vmem:[%s264 + $0xf8] sm:$0xff] %v327
                $region56: #{cnn_base_forward.4} parent=50 // loop_footer
                  %s262 = sadd.s32 1, %s258
                $region57: #{cnn_base_forward.4} parent=50 // loop_footer_branch
                  %257 = sbr.rel target = $region53
                $region58: #{cnn_base_forward.4} parent=50 // loop_exit
                  _
              $region51: #{cnn_base_forward.4} parent=35 // pred_fallthru
                _
              // Predicated region
              $region59: #{cnn_base_forward.4} parent=35 // pred_check
                _
              $region60: #{cnn_base_forward.4} parent=35 // pred_check_branch
                %330 = sbr.rel target = $region62
              $region61: #{cnn_base_forward.4} parent=35 // pred_region
                _
              $region62: #{cnn_base_forward.4} parent=35 // pred_fallthru
                _
            $region36: #{cnn_base_forward.4} parent=31 // pred_fallthru
              _
            // Predicated region
            $region37: #{cnn_base_forward.4} parent=31 // pred_check
              _
            $region38: #{cnn_base_forward.4} parent=31 // pred_check_branch
              %180 = sbr.rel target = $region40
            $region39: #{cnn_base_forward.4} parent=31 // pred_region
              %s182 = ssub.s32 256, 1
              loop: start=0, step=1, limit=1
              $region41: #{cnn_base_forward.4} parent=39 // loop_pre_header
                _
              $region42: #{cnn_base_forward.4} parent=39 // loop_header
                %s184 = sphi 0, %s188
                %p185 = scmp.ge.s32.totalorder %s184, 1
                %s189 = sphi %s174, %s174
                %s190 = sphi %s171, %s171
              $region43: #{cnn_base_forward.4} parent=39 // loop_header_branch
                %187 = sbr.rel (%p185) target = $region47
              $region44: #{cnn_base_forward.4} parent=39 // loop_body
                %v191 = vld [vmem:[%s189] sm:%s182]
                %192 = vst [vmem:[%s190] sm:%s182] %v191
                %v193 = vld [vmem:[%s189 + $0x20] sm:%s182]
                %194 = vst [vmem:[%s190 + $0x8] sm:%s182] %v193
                %v195 = vld [vmem:[%s189 + $0x40] sm:%s182]
                %196 = vst [vmem:[%s190 + $0x10] sm:%s182] %v195
                %v197 = vld [vmem:[%s189 + $0x60] sm:%s182]
                %198 = vst [vmem:[%s190 + $0x18] sm:%s182] %v197
                %v199 = vld [vmem:[%s189 + $0x80] sm:%s182]
                %200 = vst [vmem:[%s190 + $0x20] sm:%s182] %v199
                %v201 = vld [vmem:[%s189 + $0xa0] sm:%s182]
                %202 = vst [vmem:[%s190 + $0x28] sm:%s182] %v201
                %v203 = vld [vmem:[%s189 + $0xc0] sm:%s182]
                %204 = vst [vmem:[%s190 + $0x30] sm:%s182] %v203
                %v205 = vld [vmem:[%s189 + $0xe0] sm:%s182]
                %206 = vst [vmem:[%s190 + $0x38] sm:%s182] %v205
                %v207 = vld [vmem:[%s189 + $0x100] sm:%s182]
                %208 = vst [vmem:[%s190 + $0x40] sm:%s182] %v207
                %v209 = vld [vmem:[%s189 + $0x120] sm:%s182]
                %210 = vst [vmem:[%s190 + $0x48] sm:%s182] %v209
                %v211 = vld [vmem:[%s189 + $0x140] sm:%s182]
                %212 = vst [vmem:[%s190 + $0x50] sm:%s182] %v211
                %v213 = vld [vmem:[%s189 + $0x160] sm:%s182]
                %214 = vst [vmem:[%s190 + $0x58] sm:%s182] %v213
                %v215 = vld [vmem:[%s189 + $0x180] sm:%s182]
                %216 = vst [vmem:[%s190 + $0x60] sm:%s182] %v215
                %v217 = vld [vmem:[%s189 + $0x1a0] sm:%s182]
                %218 = vst [vmem:[%s190 + $0x68] sm:%s182] %v217
                %v219 = vld [vmem:[%s189 + $0x1c0] sm:%s182]
                %220 = vst [vmem:[%s190 + $0x70] sm:%s182] %v219
                %v221 = vld [vmem:[%s189 + $0x1e0] sm:%s182]
                %222 = vst [vmem:[%s190 + $0x78] sm:%s182] %v221
                %v223 = vld [vmem:[%s189 + $0x200] sm:%s182]
                %224 = vst [vmem:[%s190 + $0x80] sm:%s182] %v223
                %v225 = vld [vmem:[%s189 + $0x220] sm:%s182]
                %226 = vst [vmem:[%s190 + $0x88] sm:%s182] %v225
                %v227 = vld [vmem:[%s189 + $0x240] sm:%s182]
                %228 = vst [vmem:[%s190 + $0x90] sm:%s182] %v227
                %v229 = vld [vmem:[%s189 + $0x260] sm:%s182]
                %230 = vst [vmem:[%s190 + $0x98] sm:%s182] %v229
                %v231 = vld [vmem:[%s189 + $0x280] sm:%s182]
                %232 = vst [vmem:[%s190 + $0xa0] sm:%s182] %v231
                %v233 = vld [vmem:[%s189 + $0x2a0] sm:%s182]
                %234 = vst [vmem:[%s190 + $0xa8] sm:%s182] %v233
                %v235 = vld [vmem:[%s189 + $0x2c0] sm:%s182]
                %236 = vst [vmem:[%s190 + $0xb0] sm:%s182] %v235
                %v237 = vld [vmem:[%s189 + $0x2e0] sm:%s182]
                %238 = vst [vmem:[%s190 + $0xb8] sm:%s182] %v237
                %v239 = vld [vmem:[%s189 + $0x300] sm:%s182]
                %240 = vst [vmem:[%s190 + $0xc0] sm:%s182] %v239
                %v241 = vld [vmem:[%s189 + $0x320] sm:%s182]
                %242 = vst [vmem:[%s190 + $0xc8] sm:%s182] %v241
                %v243 = vld [vmem:[%s189 + $0x340] sm:%s182]
                %244 = vst [vmem:[%s190 + $0xd0] sm:%s182] %v243
                %v245 = vld [vmem:[%s189 + $0x360] sm:%s182]
                %246 = vst [vmem:[%s190 + $0xd8] sm:%s182] %v245
                %v247 = vld [vmem:[%s189 + $0x380] sm:%s182]
                %248 = vst [vmem:[%s190 + $0xe0] sm:%s182] %v247
                %v249 = vld [vmem:[%s189 + $0x3a0] sm:%s182]
                %250 = vst [vmem:[%s190 + $0xe8] sm:%s182] %v249
                %v251 = vld [vmem:[%s189 + $0x3c0] sm:%s182]
                %252 = vst [vmem:[%s190 + $0xf0] sm:%s182] %v251
                %v253 = vld [vmem:[%s189 + $0x3e0] sm:%s182]
                %254 = vst [vmem:[%s190 + $0xf8] sm:%s182] %v253
              $region45: #{cnn_base_forward.4} parent=39 // loop_footer
                %s188 = sadd.s32 1, %s184
              $region46: #{cnn_base_forward.4} parent=39 // loop_footer_branch
                %183 = sbr.rel target = $region42
              $region47: #{cnn_base_forward.4} parent=39 // loop_exit
                _
            $region40: #{cnn_base_forward.4} parent=31 // pred_fallthru
              _
          $region32: #{cnn_base_forward.4} parent=27 // pred_fallthru
            _
          %331 = vnop
        $region28: #{cnn_base_forward.4} parent=23 // pred_fallthru
          _
      $region24: #{cnn_base_forward.4} parent=5 // pred_fallthru
        _
      %p332 = scmp.le.s32.totalorder 1, %s9
      %p333 = scmp.lt.s32.totalorder %s9, 5
      %p334 = pnand %p332, %p333
      %p335 = pneg %p334
      // Predicated region
      $region63: #{cnn_base_forward.4} parent=5 // pred_check
        _
      $region64: #{cnn_base_forward.4} parent=5 // pred_check_branch
        %337 = sbr.rel (%p334) target = $region66
      $region65: #{cnn_base_forward.4} parent=5 // pred_region
        %s338 = ssub.s32 %s9, 1
        %s339 = sand.u32 %s60, 1
        %s340 = sand.u32 %s60, 1
        %s341 = smul.addr %s340, 256
        %s342 = scalar_lea.vmem [#allocation2], %s341
        // Predicated region
        $region67: #{cnn_base_forward.4} parent=65 // pred_check
          %p343 = pneg %p73
        $region68: #{cnn_base_forward.4} parent=65 // pred_check_branch
          %345 = sbr.rel (%p343) target = $region70
        $region69: #{cnn_base_forward.4} parent=65 // pred_region
          _
        $region70: #{cnn_base_forward.4} parent=65 // pred_fallthru
          _
        %s346 = smul.u32 4, %s18
        %p347 = scmp.lt.s32.totalorder %s346, 3
        %s348 = scalar_select %p347, %s346, 3
        %s349 = smul.addr %s348, 2
        %s350 = smul.addr %s349, 4
        %s351 = scalar_lea.vmem %s0, %s350
        %p352 = pneg %p47
        %p353 = pneg %p44
        %s354 = sand.u32 %s60, 1
        %s355 = sand.u32 %s60, 1
        %s356 = smul.addr %s355, 256
        %s357 = scalar_lea.vmem [#allocation2], %s356
        %p358 = pneg %p73
        %p359 = pneg %p70
        %s360 = smul.u32 4, %s18
        %p361 = scmp.lt.s32.totalorder %s360, 3
        %s362 = scalar_select %p361, %s360, 3
        %s363 = smul.addr %s362, 8
        %s364 = scalar_lea.vmem %s2, %s363
        %p365 = pneg %p99
        %p366 = pneg %p96
        %p367 = pneg %p127
        %p368 = pneg %p124
        %s369 = sand.u32 %s114, 1
        %s370 = sand.u32 %s114, 1
        %s371 = smul.addr %s370, 32
        %s372 = scalar_lea.vmem [#allocation3], %s371
        %s373 = smul.u32 4, %s18
        %p374 = scmp.lt.s32.totalorder %s373, 3
        %s375 = scalar_select %p374, %s373, 3
        %s376 = smul.addr %s375, 2
        %s377 = smul.addr %s376, 4
        %s378 = scalar_lea.vmem %s0, %s377
        %s379 = smul.u32 4, %s18
        %s380 = smul.u32 2, %s19
        %s381 = smul.u32 4, %s18
        %p382 = scmp.lt.s32.totalorder %s381, 3
        %s383 = scalar_select %p382, %s381, 3
        %s384 = smul.addr %s383, 8
        %s385 = scalar_lea.vmem %s2, %s384
        %s386 = smul.u32 4, %s18
        %s387 = smul.u32 4, %s18
        %s388 = smul.u32 2, %s19
        %v389 = vld [vmem:[%s378] sm:$0xff]
        %v390 = vld [vmem:[%s378 + $0x8] sm:$0xff]
        %v391 = vld [vmem:[%s378 + $0x10] sm:$0xff]
        %v392 = vld [vmem:[%s378 + $0x18] sm:$0xff]
        %v393 = vld [vmem:[%s342] sm:$0xff]
        %v394 = vld [vmem:[%s342 + $0x8] sm:$0xff]
        %v395 = vld [vmem:[%s342 + $0x10] sm:$0xff]
        %v396 = vld [vmem:[%s342 + $0x18] sm:$0xff]
        %v397 = vld [vmem:[%s342 + $0x20] sm:$0xff]
        %v398 = vld [vmem:[%s342 + $0x28] sm:$0xff]
        %v399 = vld [vmem:[%s342 + $0x30] sm:$0xff]
        %v400 = vld [vmem:[%s342 + $0x38] sm:$0xff]
        %v401 = vld [vmem:[%s342 + $0x40] sm:$0xff]
        %v402 = vld [vmem:[%s342 + $0x48] sm:$0xff]
        %v403 = vld [vmem:[%s342 + $0x50] sm:$0xff]
        %v404 = vld [vmem:[%s342 + $0x58] sm:$0xff]
        %v405 = vld [vmem:[%s342 + $0x60] sm:$0xff]
        %v406 = vld [vmem:[%s342 + $0x68] sm:$0xff]
        %v407 = vld [vmem:[%s342 + $0x70] sm:$0xff]
        %v408 = vld [vmem:[%s342 + $0x78] sm:$0xff]
        %v409 = vld [vmem:[%s342 + $0x80] sm:$0xff]
        %v410 = vld [vmem:[%s342 + $0x88] sm:$0xff]
        %v411 = vld [vmem:[%s342 + $0x90] sm:$0xff]
        %v412 = vld [vmem:[%s342 + $0x98] sm:$0xff]
        %v413 = vld [vmem:[%s342 + $0xa0] sm:$0xff]
        %v414 = vld [vmem:[%s342 + $0xa8] sm:$0xff]
        %v415 = vld [vmem:[%s342 + $0xb0] sm:$0xff]
        %v416 = vld [vmem:[%s342 + $0xb8] sm:$0xff]
        %v417 = vld [vmem:[%s342 + $0xc0] sm:$0xff]
        %v418 = vld [vmem:[%s342 + $0xc8] sm:$0xff]
        %v419 = vld [vmem:[%s342 + $0xd0] sm:$0xff]
        %v420 = vld [vmem:[%s342 + $0xd8] sm:$0xff]
        %v421 = vld [vmem:[%s342 + $0xe0] sm:$0xff]
        %v422 = vld [vmem:[%s342 + $0xe8] sm:$0xff]
        %v423 = vld [vmem:[%s342 + $0xf0] sm:$0xff]
        %v424 = vld [vmem:[%s342 + $0xf8] sm:$0xff]
        %v425 = vld [vmem:[%s385] sm:$0xff]
        %v426 = vld [vmem:[%s385 + $0x8] sm:$0xff]
        %v427 = vld [vmem:[%s385 + $0x10] sm:$0xff]
        %v428 = vld [vmem:[%s385 + $0x18] sm:$0xff]
        %430 = vset.pattern.permute.xlu0 0
        %431 = vperm.xlu0 %430, %v425
        %v432 = vpop.permute.xlu0 %431
        %435 = vset.pattern.permute.xlu0 0
        %436 = vperm.xlu0 %435, %v426
        %v437 = vpop.permute.xlu0 %436
        %440 = vset.pattern.permute.xlu0 0
        %441 = vperm.xlu0 %440, %v427
        %v442 = vpop.permute.xlu0 %441
        %445 = vset.pattern.permute.xlu0 0
        %446 = vperm.xlu0 %445, %v428
        %v447 = vpop.permute.xlu0 %446
        %v453 = vunpack.c.l.b16 %v389
        %v454 = vunpack.c.h.b16 %v389
        %v455 = vunpack.c.l.b16 %v390
        %v456 = vunpack.c.h.b16 %v390
        %v457 = vunpack.c.l.b16 %v391
        %v458 = vunpack.c.h.b16 %v391
        %v459 = vunpack.c.l.b16 %v392
        %v460 = vunpack.c.h.b16 %v392
        %v461 = vpack.c.b16 %v455, %v453
        %v462 = vpack.c.b16 %v456, %v454
        %v463 = vpack.c.b16 %v459, %v457
        %v464 = vpack.c.b16 %v460, %v458
        %v501 = vunpack.c.l.b16 %v393
        %v502 = vunpack.c.h.b16 %v393
        %v503 = vunpack.c.l.b16 %v394
        %v504 = vunpack.c.h.b16 %v394
        %v505 = vunpack.c.l.b16 %v395
        %v506 = vunpack.c.h.b16 %v395
        %v507 = vunpack.c.l.b16 %v396
        %v508 = vunpack.c.h.b16 %v396
        %v509 = vunpack.c.l.b16 %v397
        %v510 = vunpack.c.h.b16 %v397
        %v511 = vunpack.c.l.b16 %v398
        %v512 = vunpack.c.h.b16 %v398
        %v513 = vunpack.c.l.b16 %v399
        %v514 = vunpack.c.h.b16 %v399
        %v515 = vunpack.c.l.b16 %v400
        %v516 = vunpack.c.h.b16 %v400
        %v517 = vunpack.c.l.b16 %v401
        %v518 = vunpack.c.h.b16 %v401
        %v519 = vunpack.c.l.b16 %v402
        %v520 = vunpack.c.h.b16 %v402
        %v521 = vunpack.c.l.b16 %v403
        %v522 = vunpack.c.h.b16 %v403
        %v523 = vunpack.c.l.b16 %v404
        %v524 = vunpack.c.h.b16 %v404
        %v525 = vunpack.c.l.b16 %v405
        %v526 = vunpack.c.h.b16 %v405
        %v527 = vunpack.c.l.b16 %v406
        %v528 = vunpack.c.h.b16 %v406
        %v529 = vunpack.c.l.b16 %v407
        %v530 = vunpack.c.h.b16 %v407
        %v531 = vunpack.c.l.b16 %v408
        %v532 = vunpack.c.h.b16 %v408
        %v533 = vunpack.c.l.b16 %v409
        %v534 = vunpack.c.h.b16 %v409
        %v535 = vunpack.c.l.b16 %v410
        %v536 = vunpack.c.h.b16 %v410
        %v537 = vunpack.c.l.b16 %v411
        %v538 = vunpack.c.h.b16 %v411
        %v539 = vunpack.c.l.b16 %v412
        %v540 = vunpack.c.h.b16 %v412
        %v541 = vunpack.c.l.b16 %v413
        %v542 = vunpack.c.h.b16 %v413
        %v543 = vunpack.c.l.b16 %v414
        %v544 = vunpack.c.h.b16 %v414
        %v545 = vunpack.c.l.b16 %v415
        %v546 = vunpack.c.h.b16 %v415
        %v547 = vunpack.c.l.b16 %v416
        %v548 = vunpack.c.h.b16 %v416
        %v549 = vunpack.c.l.b16 %v417
        %v550 = vunpack.c.h.b16 %v417
        %v551 = vunpack.c.l.b16 %v418
        %v552 = vunpack.c.h.b16 %v418
        %v553 = vunpack.c.l.b16 %v419
        %v554 = vunpack.c.h.b16 %v419
        %v555 = vunpack.c.l.b16 %v420
        %v556 = vunpack.c.h.b16 %v420
        %v557 = vunpack.c.l.b16 %v421
        %v558 = vunpack.c.h.b16 %v421
        %v559 = vunpack.c.l.b16 %v422
        %v560 = vunpack.c.h.b16 %v422
        %v561 = vunpack.c.l.b16 %v423
        %v562 = vunpack.c.h.b16 %v423
        %v563 = vunpack.c.l.b16 %v424
        %v564 = vunpack.c.h.b16 %v424
        %v565 = vpack.c.b16 %v503, %v501
        %v566 = vpack.c.b16 %v504, %v502
        %v567 = vpack.c.b16 %v507, %v505
        %v568 = vpack.c.b16 %v508, %v506
        %v569 = vpack.c.b16 %v511, %v509
        %v570 = vpack.c.b16 %v512, %v510
        %v571 = vpack.c.b16 %v515, %v513
        %v572 = vpack.c.b16 %v516, %v514
        %v573 = vpack.c.b16 %v519, %v517
        %v574 = vpack.c.b16 %v520, %v518
        %v575 = vpack.c.b16 %v523, %v521
        %v576 = vpack.c.b16 %v524, %v522
        %v577 = vpack.c.b16 %v527, %v525
        %v578 = vpack.c.b16 %v528, %v526
        %v579 = vpack.c.b16 %v531, %v529
        %v580 = vpack.c.b16 %v532, %v530
        %v581 = vpack.c.b16 %v535, %v533
        %v582 = vpack.c.b16 %v536, %v534
        %v583 = vpack.c.b16 %v539, %v537
        %v584 = vpack.c.b16 %v540, %v538
        %v585 = vpack.c.b16 %v543, %v541
        %v586 = vpack.c.b16 %v544, %v542
        %v587 = vpack.c.b16 %v547, %v545
        %v588 = vpack.c.b16 %v548, %v546
        %v589 = vpack.c.b16 %v551, %v549
        %v590 = vpack.c.b16 %v552, %v550
        %v591 = vpack.c.b16 %v555, %v553
        %v592 = vpack.c.b16 %v556, %v554
        %v593 = vpack.c.b16 %v559, %v557
        %v594 = vpack.c.b16 %v560, %v558
        %v595 = vpack.c.b16 %v563, %v561
        %v596 = vpack.c.b16 %v564, %v562
        %629 = vmatprep.subr.bf16.mxu0 %v580
        %630 = vmatpush1.bf16.msra.mxu0 %v579
        %631 = vmatprep.subr.bf16.mxu0 %v578
        %632 = vmatpush1.bf16.msra.mxu0 %v577
        %633 = vmatprep.subr.bf16.mxu0 %v576
        %634 = vmatpush1.bf16.msra.mxu0 %v575
        %635 = vmatprep.subr.bf16.mxu0 %v574
        %636 = vmatpush1.bf16.msra.mxu0 %v573
        %637 = vmatprep.subr.bf16.mxu0 %v572
        %638 = vmatpush1.bf16.msra.mxu0 %v571
        %639 = vmatprep.subr.bf16.mxu0 %v570
        %640 = vmatpush1.bf16.msra.mxu0 %v569
        %641 = vmatprep.subr.bf16.mxu0 %v568
        %642 = vmatpush1.bf16.msra.mxu0 %v567
        %643 = vmatprep.subr.bf16.mxu0 %v566
        %644 = vmatpush1.bf16.msra.mxu0 %v565
        %645 = vmatprep.subr.bf16.mxu0 %v596
        %646 = vmatpush2.bf16.msra.mxu0 %v595
        %647 = vmatprep.subr.bf16.mxu0 %v594
        %648 = vmatpush2.bf16.msra.mxu0 %v593
        %649 = vmatprep.subr.bf16.mxu0 %v592
        %650 = vmatpush2.bf16.msra.mxu0 %v591
        %651 = vmatprep.subr.bf16.mxu0 %v590
        %652 = vmatpush2.bf16.msra.mxu0 %v589
        %653 = vmatprep.subr.bf16.mxu0 %v588
        %654 = vmatpush2.bf16.msra.mxu0 %v587
        %655 = vmatprep.subr.bf16.mxu0 %v586
        %656 = vmatpush2.bf16.msra.mxu0 %v585
        %657 = vmatprep.subr.bf16.mxu0 %v584
        %658 = vmatpush2.bf16.msra.mxu0 %v583
        %659 = vmatprep.subr.bf16.mxu0 %v582
        %660 = vmatpush2.bf16.msra.mxu0 %v581
        %661 = vmatprep.mubr.bf16.mxu0 %v462
        %662 = vmatmul.mubr.bf16.gmra.mxu0 %v461
        %v663 = vpop.f32.mrf.mxu0
        %v664 = vadd.f32 %v432, %v663
        %v665 = vpop.f32.mrf.mxu0
        %v666 = vadd.f32 %v432, %v665
        %v667 = vpop.f32.mrf.mxu0
        %v668 = vadd.f32 %v437, %v667
        %v669 = vpop.f32.mrf.mxu0
        %v670 = vadd.f32 %v437, %v669
        %671 = vmatprep.mubr.bf16.mxu0 %v464
        %672 = vmatmul.mubr.bf16.gmra.mxu0 %v463
        %v673 = vpop.f32.mrf.mxu0
        %v674 = vadd.f32 %v442, %v673
        %v675 = vpop.f32.mrf.mxu0
        %v676 = vadd.f32 %v442, %v675
        %v677 = vpop.f32.mrf.mxu0
        %v678 = vadd.f32 %v447, %v677
        %v679 = vpop.f32.mrf.mxu0
        %v680 = vadd.f32 %v447, %v679
        %681 = vdwg.mxu0
        %v682 = vmax.f32 %v664, 0.0
        %v683 = vmax.f32 %v666, 0.0
        %v684 = vmax.f32 %v668, 0.0
        %v685 = vmax.f32 %v670, 0.0
        %v686 = vmax.f32 %v674, 0.0
        %v687 = vmax.f32 %v676, 0.0
        %v688 = vmax.f32 %v678, 0.0
        %v689 = vmax.f32 %v680, 0.0
        %v690 = vpack.c.bf16 %v684, %v682
        %v691 = vpack.c.bf16 %v685, %v683
        %v692 = vpack.c.bf16 %v688, %v686
        %v693 = vpack.c.bf16 %v689, %v687
        %v698 = vunpack.c.l.b16 %v690
        %v699 = vunpack.c.l.b16 %v691
        %v700 = vunpack.c.h.b16 %v690
        %v701 = vunpack.c.h.b16 %v691
        %v702 = vunpack.c.l.b16 %v692
        %v703 = vunpack.c.l.b16 %v693
        %v704 = vunpack.c.h.b16 %v692
        %v705 = vunpack.c.h.b16 %v693
        %v706 = vpack.c.b16 %v699, %v698
        %v707 = vpack.c.b16 %v701, %v700
        %v708 = vpack.c.b16 %v703, %v702
        %v709 = vpack.c.b16 %v705, %v704
        %714 = vst [vmem:[%s372] sm:$0xff] %v706
        %715 = vst [vmem:[%s372 + $0x8] sm:$0xff] %v707
        %716 = vst [vmem:[%s372 + $0x10] sm:$0xff] %v708
        %717 = vst [vmem:[%s372 + $0x18] sm:$0xff] %v709
        %s718 = sand.u32 %s114, 1
        %s719 = sand.u32 %s114, 1
        %s720 = smul.addr %s719, 32
        %s721 = scalar_lea.vmem [#allocation3], %s720
        // Predicated region
        $region71: #{cnn_base_forward.4} parent=65 // pred_check
          %p722 = pneg %p124
        $region72: #{cnn_base_forward.4} parent=65 // pred_check_branch
          %724 = sbr.rel (%p722) target = $region74
        $region73: #{cnn_base_forward.4} parent=65 // pred_region
          %s725 = smul.u32 4, %s18
          %s726 = smul.u32 2, %s19
          %s727 = smul.addr %s725, 8
          %s728 = sadd.s32 %s726, %s727
          %s729 = smul.addr %s728, 4
          %s730 = scalar_lea.vmem %s3, %s729
          // Predicated region
          $region75: #{cnn_base_forward.4} parent=73 // pred_check
            _
          $region76: #{cnn_base_forward.4} parent=73 // pred_check_branch
            %732 = sbr.rel (0) target = $region78
          $region77: #{cnn_base_forward.4} parent=73 // pred_region
            // Predicated region
            $region79: #{cnn_base_forward.4} parent=77 // pred_check
              _
            $region80: #{cnn_base_forward.4} parent=77 // pred_check_branch
              %734 = sbr.rel (0) target = $region82
            $region81: #{cnn_base_forward.4} parent=77 // pred_region
              // Predicated region
              $region94: #{cnn_base_forward.4} parent=81 // pred_check
                _
              $region95: #{cnn_base_forward.4} parent=81 // pred_check_branch
                %756 = sbr.rel (0) target = $region97
              $region96: #{cnn_base_forward.4} parent=81 // pred_region
                loop: start=0, step=1, limit=1
                $region98: #{cnn_base_forward.4} parent=96 // loop_pre_header
                  _
                $region99: #{cnn_base_forward.4} parent=96 // loop_header
                  %s758 = sphi 0, %s762
                  %p759 = scmp.ge.s32.totalorder %s758, 1
                  %s763 = sphi %s721, %s721
                  %s764 = sphi %s730, %s730
                $region100: #{cnn_base_forward.4} parent=96 // loop_header_branch
                  %761 = sbr.rel (%p759) target = $region104
                $region101: #{cnn_base_forward.4} parent=96 // loop_body
                  %v765 = vld [vmem:[%s763] sm:$0xff]
                  %766 = vst [vmem:[%s764] sm:$0xff] %v765
                  %v767 = vld [vmem:[%s763 + $0x8] sm:$0xff]
                  %768 = vst [vmem:[%s764 + $0x20] sm:$0xff] %v767
                  %v769 = vld [vmem:[%s763 + $0x10] sm:$0xff]
                  %770 = vst [vmem:[%s764 + $0x40] sm:$0xff] %v769
                  %v771 = vld [vmem:[%s763 + $0x18] sm:$0xff]
                  %772 = vst [vmem:[%s764 + $0x60] sm:$0xff] %v771
                $region102: #{cnn_base_forward.4} parent=96 // loop_footer
                  %s762 = sadd.s32 1, %s758
                $region103: #{cnn_base_forward.4} parent=96 // loop_footer_branch
                  %757 = sbr.rel target = $region99
                $region104: #{cnn_base_forward.4} parent=96 // loop_exit
                  _
              $region97: #{cnn_base_forward.4} parent=81 // pred_fallthru
                _
              // Predicated region
              $region105: #{cnn_base_forward.4} parent=81 // pred_check
                _
              $region106: #{cnn_base_forward.4} parent=81 // pred_check_branch
                %774 = sbr.rel target = $region108
              $region107: #{cnn_base_forward.4} parent=81 // pred_region
                _
              $region108: #{cnn_base_forward.4} parent=81 // pred_fallthru
                _
            $region82: #{cnn_base_forward.4} parent=77 // pred_fallthru
              _
            // Predicated region
            $region83: #{cnn_base_forward.4} parent=77 // pred_check
              _
            $region84: #{cnn_base_forward.4} parent=77 // pred_check_branch
              %736 = sbr.rel target = $region86
            $region85: #{cnn_base_forward.4} parent=77 // pred_region
              %s738 = ssub.s32 256, 1
              loop: start=0, step=1, limit=1
              $region87: #{cnn_base_forward.4} parent=85 // loop_pre_header
                _
              $region88: #{cnn_base_forward.4} parent=85 // loop_header
                %s740 = sphi 0, %s744
                %p741 = scmp.ge.s32.totalorder %s740, 1
                %s745 = sphi %s721, %s721
                %s746 = sphi %s730, %s730
              $region89: #{cnn_base_forward.4} parent=85 // loop_header_branch
                %743 = sbr.rel (%p741) target = $region93
              $region90: #{cnn_base_forward.4} parent=85 // loop_body
                %v747 = vld [vmem:[%s745] sm:%s738]
                %748 = vst [vmem:[%s746] sm:%s738] %v747
                %v749 = vld [vmem:[%s745 + $0x8] sm:%s738]
                %750 = vst [vmem:[%s746 + $0x20] sm:%s738] %v749
                %v751 = vld [vmem:[%s745 + $0x10] sm:%s738]
                %752 = vst [vmem:[%s746 + $0x40] sm:%s738] %v751
                %v753 = vld [vmem:[%s745 + $0x18] sm:%s738]
                %754 = vst [vmem:[%s746 + $0x60] sm:%s738] %v753
              $region91: #{cnn_base_forward.4} parent=85 // loop_footer
                %s744 = sadd.s32 1, %s740
              $region92: #{cnn_base_forward.4} parent=85 // loop_footer_branch
                %739 = sbr.rel target = $region88
              $region93: #{cnn_base_forward.4} parent=85 // loop_exit
                _
            $region86: #{cnn_base_forward.4} parent=77 // pred_fallthru
              _
          $region78: #{cnn_base_forward.4} parent=73 // pred_fallthru
            _
          %775 = vnop
        $region74: #{cnn_base_forward.4} parent=65 // pred_fallthru
          _
      $region66: #{cnn_base_forward.4} parent=5 // pred_fallthru
        _
      %p776 = scmp.le.s32.totalorder 2, %s9
      // Predicated region
      $region109: #{cnn_base_forward.4} parent=5 // pred_check
        %p777 = pneg %p776
      $region110: #{cnn_base_forward.4} parent=5 // pred_check_branch
        %779 = sbr.rel (%p777) target = $region112
      $region111: #{cnn_base_forward.4} parent=5 // pred_region
        %s780 = ssub.s32 %s9, 2
        // Predicated region
        $region113: #{cnn_base_forward.4} parent=111 // pred_check
          %p781 = pneg %p130
        $region114: #{cnn_base_forward.4} parent=111 // pred_check_branch
          %783 = sbr.rel (%p781) target = $region116
        $region115: #{cnn_base_forward.4} parent=111 // pred_region
          %s784 = sand.u32 %s115, 1
          %s785 = sand.u32 %s115, 1
          %s786 = smul.addr %s785, 32
          %s787 = scalar_lea.vmem [#allocation3], %s786
        $region116: #{cnn_base_forward.4} parent=111 // pred_fallthru
          _
      $region112: #{cnn_base_forward.4} parent=5 // pred_fallthru
        _
    $region6: #{cnn_base_forward.4} parent=1 // loop_footer
      %s13 = sadd.s32 1, %s9
    $region7: #{cnn_base_forward.4} parent=1 // loop_footer_branch
      %8 = sbr.rel target = $region3
    $region8: #{cnn_base_forward.4} parent=1 // loop_exit
      _

// kernel: cnn_base_forward.5
$region0: #{cnn_base_forward.5}
  #allocation0 [shape = 'u32[]', space=smem, size = 0x4, offset = 0x4, fixed_abs, tag = 'smem constant byte address 0x4 - core index']
  #allocation1 [shape = 'u32[144,128]{1,0:T(1,128)}', space=vmem, size = 0x12000, scoped, tag = 'internal scratch']
  %s0 = inlined_call_operand.vmem [shape: bf16[64,512], index: 0, kind: input, shape index: {}]
  %s1 = inlined_call_operand.vmem [shape: bf16[512,256], index: 1, kind: input, shape index: {}]
  %s2 = inlined_call_operand.vmem [shape: f32[64,1], index: 2, kind: input, shape index: {}]
  %s3 = inlined_call_operand.vmem [shape: bf16[64,256], index: 3, kind: output, shape index: {}]
  %s4 = sld [smem:[#allocation0]]
  $region22: #{cnn_base_forward.5} parent=0
    _
  %s6 = ssub.s32 1, %s4
  %s7 = scalar_select 0, %s6, %s4
  // Predicated region
  $region2: #{cnn_base_forward.5} parent=0 // pred_check
    _
  $region3: #{cnn_base_forward.5} parent=0 // pred_check_branch
    %9 = sbr.rel (0) target = $region5
  $region4: #{cnn_base_forward.5} parent=0 // pred_region
    _
  $region5: #{cnn_base_forward.5} parent=0 // pred_fallthru
    _
  // Predicated region
  $region6: #{cnn_base_forward.5} parent=0 // pred_check
    _
  $region7: #{cnn_base_forward.5} parent=0 // pred_check_branch
    %11 = sbr.rel (0) target = $region9
  $region8: #{cnn_base_forward.5} parent=0 // pred_region
    _
  $region9: #{cnn_base_forward.5} parent=0 // pred_fallthru
    _
  // Predicated region
  $region10: #{cnn_base_forward.5} parent=0 // pred_check
    _
  $region11: #{cnn_base_forward.5} parent=0 // pred_check_branch
    %13 = sbr.rel (0) target = $region13
  $region12: #{cnn_base_forward.5} parent=0 // pred_region
    _
  $region13: #{cnn_base_forward.5} parent=0 // pred_fallthru
    _
  %v14 = vld [vmem:[%s0] sm:$0xff]
  %v15 = vld [vmem:[%s0 + $0x8] sm:$0xff]
  %v16 = vld [vmem:[%s0 + $0x10] sm:$0xff]
  %v17 = vld [vmem:[%s0 + $0x18] sm:$0xff]
  %v18 = vld [vmem:[%s0 + $0x20] sm:$0xff]
  %v19 = vld [vmem:[%s0 + $0x28] sm:$0xff]
  %v20 = vld [vmem:[%s0 + $0x30] sm:$0xff]
  %v21 = vld [vmem:[%s0 + $0x38] sm:$0xff]
  %v22 = vld [vmem:[%s0 + $0x40] sm:$0xff]
  %v23 = vld [vmem:[%s0 + $0x48] sm:$0xff]
  %v24 = vld [vmem:[%s0 + $0x50] sm:$0xff]
  %v25 = vld [vmem:[%s0 + $0x58] sm:$0xff]
  %v26 = vld [vmem:[%s0 + $0x60] sm:$0xff]
  %v27 = vld [vmem:[%s0 + $0x68] sm:$0xff]
  %v28 = vld [vmem:[%s0 + $0x70] sm:$0xff]
  %v29 = vld [vmem:[%s0 + $0x78] sm:$0xff]
  %v30 = vld [vmem:[%s1] sm:$0xff]
  %v31 = vld [vmem:[%s1 + $0x8] sm:$0xff]
  %v32 = vld [vmem:[%s1 + $0x10] sm:$0xff]
  %v33 = vld [vmem:[%s1 + $0x18] sm:$0xff]
  %v34 = vld [vmem:[%s1 + $0x20] sm:$0xff]
  %v35 = vld [vmem:[%s1 + $0x28] sm:$0xff]
  %v36 = vld [vmem:[%s1 + $0x30] sm:$0xff]
  %v37 = vld [vmem:[%s1 + $0x38] sm:$0xff]
  %v38 = vld [vmem:[%s1 + $0x40] sm:$0xff]
  %v39 = vld [vmem:[%s1 + $0x48] sm:$0xff]
  %v40 = vld [vmem:[%s1 + $0x50] sm:$0xff]
  %v41 = vld [vmem:[%s1 + $0x58] sm:$0xff]
  %v42 = vld [vmem:[%s1 + $0x60] sm:$0xff]
  %v43 = vld [vmem:[%s1 + $0x68] sm:$0xff]
  %v44 = vld [vmem:[%s1 + $0x70] sm:$0xff]
  %v45 = vld [vmem:[%s1 + $0x78] sm:$0xff]
  %v46 = vld [vmem:[%s1 + $0x80] sm:$0xff]
  %v47 = vld [vmem:[%s1 + $0x88] sm:$0xff]
  %v48 = vld [vmem:[%s1 + $0x90] sm:$0xff]
  %v49 = vld [vmem:[%s1 + $0x98] sm:$0xff]
  %v50 = vld [vmem:[%s1 + $0xa0] sm:$0xff]
  %v51 = vld [vmem:[%s1 + $0xa8] sm:$0xff]
  %v52 = vld [vmem:[%s1 + $0xb0] sm:$0xff]
  %v53 = vld [vmem:[%s1 + $0xb8] sm:$0xff]
  %v54 = vld [vmem:[%s1 + $0xc0] sm:$0xff]
  %v55 = vld [vmem:[%s1 + $0xc8] sm:$0xff]
  %v56 = vld [vmem:[%s1 + $0xd0] sm:$0xff]
  %v57 = vld [vmem:[%s1 + $0xd8] sm:$0xff]
  %v58 = vld [vmem:[%s1 + $0xe0] sm:$0xff]
  %v59 = vld [vmem:[%s1 + $0xe8] sm:$0xff]
  %v60 = vld [vmem:[%s1 + $0xf0] sm:$0xff]
  %v61 = vld [vmem:[%s1 + $0xf8] sm:$0xff]
  %v62 = vld [vmem:[%s1 + $0x100] sm:$0xff]
  %v63 = vld [vmem:[%s1 + $0x108] sm:$0xff]
  %v64 = vld [vmem:[%s1 + $0x110] sm:$0xff]
  %v65 = vld [vmem:[%s1 + $0x118] sm:$0xff]
  %v66 = vld [vmem:[%s1 + $0x120] sm:$0xff]
  %v67 = vld [vmem:[%s1 + $0x128] sm:$0xff]
  %v68 = vld [vmem:[%s1 + $0x130] sm:$0xff]
  %v69 = vld [vmem:[%s1 + $0x138] sm:$0xff]
  %v70 = vld [vmem:[%s1 + $0x140] sm:$0xff]
  %v71 = vld [vmem:[%s1 + $0x148] sm:$0xff]
  %v72 = vld [vmem:[%s1 + $0x150] sm:$0xff]
  %v73 = vld [vmem:[%s1 + $0x158] sm:$0xff]
  %v74 = vld [vmem:[%s1 + $0x160] sm:$0xff]
  %v75 = vld [vmem:[%s1 + $0x168] sm:$0xff]
  %v76 = vld [vmem:[%s1 + $0x170] sm:$0xff]
  %v77 = vld [vmem:[%s1 + $0x178] sm:$0xff]
  %v78 = vld [vmem:[%s1 + $0x180] sm:$0xff]
  %v79 = vld [vmem:[%s1 + $0x188] sm:$0xff]
  %v80 = vld [vmem:[%s1 + $0x190] sm:$0xff]
  %v81 = vld [vmem:[%s1 + $0x198] sm:$0xff]
  %v82 = vld [vmem:[%s1 + $0x1a0] sm:$0xff]
  %v83 = vld [vmem:[%s1 + $0x1a8] sm:$0xff]
  %v84 = vld [vmem:[%s1 + $0x1b0] sm:$0xff]
  %v85 = vld [vmem:[%s1 + $0x1b8] sm:$0xff]
  %v86 = vld [vmem:[%s1 + $0x1c0] sm:$0xff]
  %v87 = vld [vmem:[%s1 + $0x1c8] sm:$0xff]
  %v88 = vld [vmem:[%s1 + $0x1d0] sm:$0xff]
  %v89 = vld [vmem:[%s1 + $0x1d8] sm:$0xff]
  %v90 = vld [vmem:[%s1 + $0x1e0] sm:$0xff]
  %v91 = vld [vmem:[%s1 + $0x1e8] sm:$0xff]
  %v92 = vld [vmem:[%s1 + $0x1f0] sm:$0xff]
  %v93 = vld [vmem:[%s1 + $0x1f8] sm:$0xff]
  %v94 = vld [vmem:[%s2] sm:$0xff]
  %v95 = vld [vmem:[%s2 + $0x8] sm:$0xff]
  %v96 = vld [vmem:[%s2 + $0x10] sm:$0xff]
  %v97 = vld [vmem:[%s2 + $0x18] sm:$0xff]
  %v98 = vld [vmem:[%s2 + $0x20] sm:$0xff]
  %v99 = vld [vmem:[%s2 + $0x28] sm:$0xff]
  %v100 = vld [vmem:[%s2 + $0x30] sm:$0xff]
  %v101 = vld [vmem:[%s2 + $0x38] sm:$0xff]
  %103 = vset.pattern.permute.xlu0 0
  %104 = vperm.xlu0 %103, %v94
  %v105 = vpop.permute.xlu0 %104
  %108 = vset.pattern.permute.xlu0 0
  %109 = vperm.xlu0 %108, %v95
  %v110 = vpop.permute.xlu0 %109
  %113 = vset.pattern.permute.xlu0 0
  %114 = vperm.xlu0 %113, %v96
  %v115 = vpop.permute.xlu0 %114
  %118 = vset.pattern.permute.xlu0 0
  %119 = vperm.xlu0 %118, %v97
  %v120 = vpop.permute.xlu0 %119
  %123 = vset.pattern.permute.xlu0 0
  %124 = vperm.xlu0 %123, %v98
  %v125 = vpop.permute.xlu0 %124
  %128 = vset.pattern.permute.xlu0 0
  %129 = vperm.xlu0 %128, %v99
  %v130 = vpop.permute.xlu0 %129
  %133 = vset.pattern.permute.xlu0 0
  %134 = vperm.xlu0 %133, %v100
  %v135 = vpop.permute.xlu0 %134
  %138 = vset.pattern.permute.xlu0 0
  %139 = vperm.xlu0 %138, %v101
  %v140 = vpop.permute.xlu0 %139
  %v158 = vunpack.c.l.b16 %v14
  %v159 = vunpack.c.h.b16 %v14
  %v160 = vunpack.c.l.b16 %v15
  %v161 = vunpack.c.h.b16 %v15
  %v162 = vunpack.c.l.b16 %v16
  %v163 = vunpack.c.h.b16 %v16
  %v164 = vunpack.c.l.b16 %v17
  %v165 = vunpack.c.h.b16 %v17
  %v166 = vunpack.c.l.b16 %v18
  %v167 = vunpack.c.h.b16 %v18
  %v168 = vunpack.c.l.b16 %v19
  %v169 = vunpack.c.h.b16 %v19
  %v170 = vunpack.c.l.b16 %v20
  %v171 = vunpack.c.h.b16 %v20
  %v172 = vunpack.c.l.b16 %v21
  %v173 = vunpack.c.h.b16 %v21
  %v174 = vunpack.c.l.b16 %v22
  %v175 = vunpack.c.h.b16 %v22
  %v176 = vunpack.c.l.b16 %v23
  %v177 = vunpack.c.h.b16 %v23
  %v178 = vunpack.c.l.b16 %v24
  %v179 = vunpack.c.h.b16 %v24
  %v180 = vunpack.c.l.b16 %v25
  %v181 = vunpack.c.h.b16 %v25
  %v182 = vunpack.c.l.b16 %v26
  %v183 = vunpack.c.h.b16 %v26
  %v184 = vunpack.c.l.b16 %v27
  %v185 = vunpack.c.h.b16 %v27
  %v186 = vunpack.c.l.b16 %v28
  %v187 = vunpack.c.h.b16 %v28
  %v188 = vunpack.c.l.b16 %v29
  %v189 = vunpack.c.h.b16 %v29
  %v190 = vpack.c.b16 %v162, %v158
  %v191 = vpack.c.b16 %v163, %v159
  %v192 = vpack.c.b16 %v164, %v160
  %v193 = vpack.c.b16 %v165, %v161
  %v194 = vpack.c.b16 %v170, %v166
  %v195 = vpack.c.b16 %v171, %v167
  %v196 = vpack.c.b16 %v172, %v168
  %v197 = vpack.c.b16 %v173, %v169
  %v198 = vpack.c.b16 %v178, %v174
  %v199 = vpack.c.b16 %v179, %v175
  %v200 = vpack.c.b16 %v180, %v176
  %v201 = vpack.c.b16 %v181, %v177
  %v202 = vpack.c.b16 %v186, %v182
  %v203 = vpack.c.b16 %v187, %v183
  %v204 = vpack.c.b16 %v188, %v184
  %v205 = vpack.c.b16 %v189, %v185
  %v286 = vunpack.c.l.b16 %v30
  %v287 = vunpack.c.h.b16 %v30
  %v288 = vunpack.c.l.b16 %v31
  %v289 = vunpack.c.h.b16 %v31
  %v290 = vunpack.c.l.b16 %v32
  %v291 = vunpack.c.h.b16 %v32
  %v292 = vunpack.c.l.b16 %v33
  %v293 = vunpack.c.h.b16 %v33
  %v294 = vunpack.c.l.b16 %v34
  %v295 = vunpack.c.h.b16 %v34
  %v296 = vunpack.c.l.b16 %v35
  %v297 = vunpack.c.h.b16 %v35
  %v298 = vunpack.c.l.b16 %v36
  %v299 = vunpack.c.h.b16 %v36
  %v300 = vunpack.c.l.b16 %v37
  %v301 = vunpack.c.h.b16 %v37
  %v302 = vunpack.c.l.b16 %v38
  %v303 = vunpack.c.h.b16 %v38
  %v304 = vunpack.c.l.b16 %v39
  %v305 = vunpack.c.h.b16 %v39
  %v306 = vunpack.c.l.b16 %v40
  %v307 = vunpack.c.h.b16 %v40
  %v308 = vunpack.c.l.b16 %v41
  %v309 = vunpack.c.h.b16 %v41
  %v310 = vunpack.c.l.b16 %v42
  %v311 = vunpack.c.h.b16 %v42
  %v312 = vunpack.c.l.b16 %v43
  %v313 = vunpack.c.h.b16 %v43
  %v314 = vunpack.c.l.b16 %v44
  %v315 = vunpack.c.h.b16 %v44
  %v316 = vunpack.c.l.b16 %v45
  %v317 = vunpack.c.h.b16 %v45
  %v318 = vunpack.c.l.b16 %v46
  %v319 = vunpack.c.h.b16 %v46
  %v320 = vunpack.c.l.b16 %v47
  %v321 = vunpack.c.h.b16 %v47
  %v322 = vunpack.c.l.b16 %v48
  %v323 = vunpack.c.h.b16 %v48
  %v324 = vunpack.c.l.b16 %v49
  %v325 = vunpack.c.h.b16 %v49
  %v326 = vunpack.c.l.b16 %v50
  %v327 = vunpack.c.h.b16 %v50
  %v328 = vunpack.c.l.b16 %v51
  %v329 = vunpack.c.h.b16 %v51
  %v330 = vunpack.c.l.b16 %v52
  %v331 = vunpack.c.h.b16 %v52
  %v332 = vunpack.c.l.b16 %v53
  %v333 = vunpack.c.h.b16 %v53
  %v334 = vunpack.c.l.b16 %v54
  %v335 = vunpack.c.h.b16 %v54
  %v336 = vunpack.c.l.b16 %v55
  %v337 = vunpack.c.h.b16 %v55
  %v338 = vunpack.c.l.b16 %v56
  %v339 = vunpack.c.h.b16 %v56
  %v340 = vunpack.c.l.b16 %v57
  %v341 = vunpack.c.h.b16 %v57
  %v342 = vunpack.c.l.b16 %v58
  %v343 = vunpack.c.h.b16 %v58
  %v344 = vunpack.c.l.b16 %v59
  %v345 = vunpack.c.h.b16 %v59
  %v346 = vunpack.c.l.b16 %v60
  %v347 = vunpack.c.h.b16 %v60
  %v348 = vunpack.c.l.b16 %v61
  %v349 = vunpack.c.h.b16 %v61
  %v350 = vunpack.c.l.b16 %v62
  %v351 = vunpack.c.h.b16 %v62
  %v352 = vunpack.c.l.b16 %v63
  %v353 = vunpack.c.h.b16 %v63
  %v354 = vunpack.c.l.b16 %v64
  %v355 = vunpack.c.h.b16 %v64
  %v356 = vunpack.c.l.b16 %v65
  %v357 = vunpack.c.h.b16 %v65
  %v358 = vunpack.c.l.b16 %v66
  %v359 = vunpack.c.h.b16 %v66
  %v360 = vunpack.c.l.b16 %v67
  %v361 = vunpack.c.h.b16 %v67
  %v362 = vunpack.c.l.b16 %v68
  %v363 = vunpack.c.h.b16 %v68
  %v364 = vunpack.c.l.b16 %v69
  %v365 = vunpack.c.h.b16 %v69
  %v366 = vunpack.c.l.b16 %v70
  %v367 = vunpack.c.h.b16 %v70
  %v368 = vunpack.c.l.b16 %v71
  %v369 = vunpack.c.h.b16 %v71
  %v370 = vunpack.c.l.b16 %v72
  %v371 = vunpack.c.h.b16 %v72
  %v372 = vunpack.c.l.b16 %v73
  %v373 = vunpack.c.h.b16 %v73
  %v374 = vunpack.c.l.b16 %v74
  %v375 = vunpack.c.h.b16 %v74
  %v376 = vunpack.c.l.b16 %v75
  %v377 = vunpack.c.h.b16 %v75
  %v378 = vunpack.c.l.b16 %v76
  %v379 = vunpack.c.h.b16 %v76
  %v380 = vunpack.c.l.b16 %v77
  %v381 = vunpack.c.h.b16 %v77
  %v382 = vunpack.c.l.b16 %v78
  %v383 = vunpack.c.h.b16 %v78
  %v384 = vunpack.c.l.b16 %v79
  %v385 = vunpack.c.h.b16 %v79
  %v386 = vunpack.c.l.b16 %v80
  %v387 = vunpack.c.h.b16 %v80
  %v388 = vunpack.c.l.b16 %v81
  %v389 = vunpack.c.h.b16 %v81
  %v390 = vunpack.c.l.b16 %v82
  %v391 = vunpack.c.h.b16 %v82
  %v392 = vunpack.c.l.b16 %v83
  %v393 = vunpack.c.h.b16 %v83
  %v394 = vunpack.c.l.b16 %v84
  %v395 = vunpack.c.h.b16 %v84
  %v396 = vunpack.c.l.b16 %v85
  %v397 = vunpack.c.h.b16 %v85
  %v398 = vunpack.c.l.b16 %v86
  %v399 = vunpack.c.h.b16 %v86
  %v400 = vunpack.c.l.b16 %v87
  %v401 = vunpack.c.h.b16 %v87
  %v402 = vunpack.c.l.b16 %v88
  %v403 = vunpack.c.h.b16 %v88
  %v404 = vunpack.c.l.b16 %v89
  %v405 = vunpack.c.h.b16 %v89
  %v406 = vunpack.c.l.b16 %v90
  %v407 = vunpack.c.h.b16 %v90
  %v408 = vunpack.c.l.b16 %v91
  %v409 = vunpack.c.h.b16 %v91
  %v410 = vunpack.c.l.b16 %v92
  %v411 = vunpack.c.h.b16 %v92
  %v412 = vunpack.c.l.b16 %v93
  %v413 = vunpack.c.h.b16 %v93
  %v414 = vpack.c.b16 %v288, %v286
  %v415 = vpack.c.b16 %v289, %v287
  %v416 = vpack.c.b16 %v292, %v290
  %v417 = vpack.c.b16 %v293, %v291
  %v418 = vpack.c.b16 %v296, %v294
  %v419 = vpack.c.b16 %v297, %v295
  %v420 = vpack.c.b16 %v300, %v298
  %v421 = vpack.c.b16 %v301, %v299
  %v422 = vpack.c.b16 %v304, %v302
  %v423 = vpack.c.b16 %v305, %v303
  %v424 = vpack.c.b16 %v308, %v306
  %v425 = vpack.c.b16 %v309, %v307
  %v426 = vpack.c.b16 %v312, %v310
  %v427 = vpack.c.b16 %v313, %v311
  %v428 = vpack.c.b16 %v316, %v314
  %v429 = vpack.c.b16 %v317, %v315
  %v430 = vpack.c.b16 %v320, %v318
  %v431 = vpack.c.b16 %v321, %v319
  %v432 = vpack.c.b16 %v324, %v322
  %v433 = vpack.c.b16 %v325, %v323
  %v434 = vpack.c.b16 %v328, %v326
  %v435 = vpack.c.b16 %v329, %v327
  %v436 = vpack.c.b16 %v332, %v330
  %v437 = vpack.c.b16 %v333, %v331
  %v438 = vpack.c.b16 %v336, %v334
  %v439 = vpack.c.b16 %v337, %v335
  %v440 = vpack.c.b16 %v340, %v338
  %v441 = vpack.c.b16 %v341, %v339
  %v442 = vpack.c.b16 %v344, %v342
  %v443 = vpack.c.b16 %v345, %v343
  %v444 = vpack.c.b16 %v348, %v346
  %v445 = vpack.c.b16 %v349, %v347
  %v446 = vpack.c.b16 %v352, %v350
  %v447 = vpack.c.b16 %v353, %v351
  %v448 = vpack.c.b16 %v356, %v354
  %v449 = vpack.c.b16 %v357, %v355
  %v450 = vpack.c.b16 %v360, %v358
  %v451 = vpack.c.b16 %v361, %v359
  %v452 = vpack.c.b16 %v364, %v362
  %v453 = vpack.c.b16 %v365, %v363
  %v454 = vpack.c.b16 %v368, %v366
  %v455 = vpack.c.b16 %v369, %v367
  %v456 = vpack.c.b16 %v372, %v370
  %v457 = vpack.c.b16 %v373, %v371
  %v458 = vpack.c.b16 %v376, %v374
  %v459 = vpack.c.b16 %v377, %v375
  %v460 = vpack.c.b16 %v380, %v378
  %v461 = vpack.c.b16 %v381, %v379
  %v462 = vpack.c.b16 %v384, %v382
  %v463 = vpack.c.b16 %v385, %v383
  %v464 = vpack.c.b16 %v388, %v386
  %v465 = vpack.c.b16 %v389, %v387
  %v466 = vpack.c.b16 %v392, %v390
  %v467 = vpack.c.b16 %v393, %v391
  %v468 = vpack.c.b16 %v396, %v394
  %v469 = vpack.c.b16 %v397, %v395
  %v470 = vpack.c.b16 %v400, %v398
  %v471 = vpack.c.b16 %v401, %v399
  %v472 = vpack.c.b16 %v404, %v402
  %v473 = vpack.c.b16 %v405, %v403
  %v474 = vpack.c.b16 %v408, %v406
  %v475 = vpack.c.b16 %v409, %v407
  %v476 = vpack.c.b16 %v412, %v410
  %v477 = vpack.c.b16 %v413, %v411
  %542 = vmatprep.subr.bf16.mxu0 %v429
  %543 = vmatpush1.bf16.msra.mxu0 %v428
  %544 = vmatprep.subr.bf16.mxu0 %v427
  %545 = vmatpush1.bf16.msra.mxu0 %v426
  %546 = vmatprep.subr.bf16.mxu0 %v425
  %547 = vmatpush1.bf16.msra.mxu0 %v424
  %548 = vmatprep.subr.bf16.mxu0 %v423
  %549 = vmatpush1.bf16.msra.mxu0 %v422
  %550 = vmatprep.subr.bf16.mxu0 %v421
  %551 = vmatpush1.bf16.msra.mxu0 %v420
  %552 = vmatprep.subr.bf16.mxu0 %v419
  %553 = vmatpush1.bf16.msra.mxu0 %v418
  %554 = vmatprep.subr.bf16.mxu0 %v417
  %555 = vmatpush1.bf16.msra.mxu0 %v416
  %556 = vmatprep.subr.bf16.mxu0 %v415
  %557 = vmatpush1.bf16.msra.mxu0 %v414
  %558 = vmatprep.subr.bf16.mxu0 %v445
  %559 = vmatpush2.bf16.msra.mxu0 %v444
  %560 = vmatprep.subr.bf16.mxu0 %v443
  %561 = vmatpush2.bf16.msra.mxu0 %v442
  %562 = vmatprep.subr.bf16.mxu0 %v441
  %563 = vmatpush2.bf16.msra.mxu0 %v440
  %564 = vmatprep.subr.bf16.mxu0 %v439
  %565 = vmatpush2.bf16.msra.mxu0 %v438
  %566 = vmatprep.subr.bf16.mxu0 %v437
  %567 = vmatpush2.bf16.msra.mxu0 %v436
  %568 = vmatprep.subr.bf16.mxu0 %v435
  %569 = vmatpush2.bf16.msra.mxu0 %v434
  %570 = vmatprep.subr.bf16.mxu0 %v433
  %571 = vmatpush2.bf16.msra.mxu0 %v432
  %572 = vmatprep.subr.bf16.mxu0 %v431
  %573 = vmatpush2.bf16.msra.mxu0 %v430
  %574 = vmatprep.mubr.bf16.mxu0 %v191
  %575 = vmatmul.mubr.bf16.gmra.mxu0 %v190
  %v576 = vpop.f32.mrf.mxu0
  %v577 = vadd.f32 %v105, %v576
  %v578 = vpop.f32.mrf.mxu0
  %v579 = vadd.f32 %v105, %v578
  %v580 = vpop.f32.mrf.mxu0
  %v581 = vadd.f32 %v110, %v580
  %v582 = vpop.f32.mrf.mxu0
  %v583 = vadd.f32 %v110, %v582
  %584 = vmatprep.mubr.bf16.mxu0 %v195
  %585 = vmatmul.mubr.bf16.gmra.mxu0 %v194
  %v586 = vpop.f32.mrf.mxu0
  %v587 = vadd.f32 %v115, %v586
  %v588 = vpop.f32.mrf.mxu0
  %v589 = vadd.f32 %v115, %v588
  %v590 = vpop.f32.mrf.mxu0
  %v591 = vadd.f32 %v120, %v590
  %v592 = vpop.f32.mrf.mxu0
  %v593 = vadd.f32 %v120, %v592
  %594 = vmatprep.mubr.bf16.mxu0 %v199
  %595 = vmatmul.mubr.bf16.gmra.mxu0 %v198
  %v596 = vpop.f32.mrf.mxu0
  %v597 = vadd.f32 %v125, %v596
  %v598 = vpop.f32.mrf.mxu0
  %v599 = vadd.f32 %v125, %v598
  %v600 = vpop.f32.mrf.mxu0
  %v601 = vadd.f32 %v130, %v600
  %v602 = vpop.f32.mrf.mxu0
  %v603 = vadd.f32 %v130, %v602
  %604 = vmatprep.mubr.bf16.mxu0 %v203
  %605 = vmatmul.mubr.bf16.gmra.mxu0 %v202
  %v606 = vpop.f32.mrf.mxu0
  %v607 = vadd.f32 %v135, %v606
  %v608 = vpop.f32.mrf.mxu0
  %v609 = vadd.f32 %v135, %v608
  %v610 = vpop.f32.mrf.mxu0
  %v611 = vadd.f32 %v140, %v610
  %v612 = vpop.f32.mrf.mxu0
  %v613 = vadd.f32 %v140, %v612
  %614 = vdwg.mxu0
  %615 = vmatprep.subr.bf16.mxu0 %v461
  %616 = vmatpush1.bf16.msra.mxu0 %v460
  %617 = vmatprep.subr.bf16.mxu0 %v459
  %618 = vmatpush1.bf16.msra.mxu0 %v458
  %619 = vmatprep.subr.bf16.mxu0 %v457
  %620 = vmatpush1.bf16.msra.mxu0 %v456
  %621 = vmatprep.subr.bf16.mxu0 %v455
  %622 = vmatpush1.bf16.msra.mxu0 %v454
  %623 = vmatprep.subr.bf16.mxu0 %v453
  %624 = vmatpush1.bf16.msra.mxu0 %v452
  %625 = vmatprep.subr.bf16.mxu0 %v451
  %626 = vmatpush1.bf16.msra.mxu0 %v450
  %627 = vmatprep.subr.bf16.mxu0 %v449
  %628 = vmatpush1.bf16.msra.mxu0 %v448
  %629 = vmatprep.subr.bf16.mxu0 %v447
  %630 = vmatpush1.bf16.msra.mxu0 %v446
  %631 = vmatprep.subr.bf16.mxu0 %v477
  %632 = vmatpush2.bf16.msra.mxu0 %v476
  %633 = vmatprep.subr.bf16.mxu0 %v475
  %634 = vmatpush2.bf16.msra.mxu0 %v474
  %635 = vmatprep.subr.bf16.mxu0 %v473
  %636 = vmatpush2.bf16.msra.mxu0 %v472
  %637 = vmatprep.subr.bf16.mxu0 %v471
  %638 = vmatpush2.bf16.msra.mxu0 %v470
  %639 = vmatprep.subr.bf16.mxu0 %v469
  %640 = vmatpush2.bf16.msra.mxu0 %v468
  %641 = vmatprep.subr.bf16.mxu0 %v467
  %642 = vmatpush2.bf16.msra.mxu0 %v466
  %643 = vmatprep.subr.bf16.mxu0 %v465
  %644 = vmatpush2.bf16.msra.mxu0 %v464
  %645 = vmatprep.subr.bf16.mxu0 %v463
  %646 = vmatpush2.bf16.msra.mxu0 %v462
  %647 = vmatprep.mubr.bf16.mxu0 %v193
  %648 = vmatmul.mubr.bf16.gmra.mxu0 %v192
  %v649 = vpop.f32.mrf.mxu0
  %v650 = vadd.f32 %v577, %v649
  %v651 = vpop.f32.mrf.mxu0
  %v652 = vadd.f32 %v579, %v651
  %v653 = vpop.f32.mrf.mxu0
  %v654 = vadd.f32 %v581, %v653
  %v655 = vpop.f32.mrf.mxu0
  %v656 = vadd.f32 %v583, %v655
  %657 = vmatprep.mubr.bf16.mxu0 %v197
  %658 = vmatmul.mubr.bf16.gmra.mxu0 %v196
  %v659 = vpop.f32.mrf.mxu0
  %v660 = vadd.f32 %v587, %v659
  %v661 = vpop.f32.mrf.mxu0
  %v662 = vadd.f32 %v589, %v661
  %v663 = vpop.f32.mrf.mxu0
  %v664 = vadd.f32 %v591, %v663
  %v665 = vpop.f32.mrf.mxu0
  %v666 = vadd.f32 %v593, %v665
  %667 = vmatprep.mubr.bf16.mxu0 %v201
  %668 = vmatmul.mubr.bf16.gmra.mxu0 %v200
  %v669 = vpop.f32.mrf.mxu0
  %v670 = vadd.f32 %v597, %v669
  %v671 = vpop.f32.mrf.mxu0
  %v672 = vadd.f32 %v599, %v671
  %v673 = vpop.f32.mrf.mxu0
  %v674 = vadd.f32 %v601, %v673
  %v675 = vpop.f32.mrf.mxu0
  %v676 = vadd.f32 %v603, %v675
  %677 = vmatprep.mubr.bf16.mxu0 %v205
  %678 = vmatmul.mubr.bf16.gmra.mxu0 %v204
  %v679 = vpop.f32.mrf.mxu0
  %v680 = vadd.f32 %v607, %v679
  %v681 = vpop.f32.mrf.mxu0
  %v682 = vadd.f32 %v609, %v681
  %v683 = vpop.f32.mrf.mxu0
  %v684 = vadd.f32 %v611, %v683
  %v685 = vpop.f32.mrf.mxu0
  %v686 = vadd.f32 %v613, %v685
  %687 = vdwg.mxu0
  %v688 = vmax.f32 %v650, 0.0
  %v689 = vmax.f32 %v652, 0.0
  %v690 = vmax.f32 %v654, 0.0
  %v691 = vmax.f32 %v656, 0.0
  %v692 = vmax.f32 %v660, 0.0
  %v693 = vmax.f32 %v662, 0.0
  %v694 = vmax.f32 %v664, 0.0
  %v695 = vmax.f32 %v666, 0.0
  %v696 = vmax.f32 %v670, 0.0
  %v697 = vmax.f32 %v672, 0.0
  %v698 = vmax.f32 %v674, 0.0
  %v699 = vmax.f32 %v676, 0.0
  %v700 = vmax.f32 %v680, 0.0
  %v701 = vmax.f32 %v682, 0.0
  %v702 = vmax.f32 %v684, 0.0
  %v703 = vmax.f32 %v686, 0.0
  %v704 = vpack.c.bf16 %v690, %v688
  %v705 = vpack.c.bf16 %v691, %v689
  %v706 = vpack.c.bf16 %v694, %v692
  %v707 = vpack.c.bf16 %v695, %v693
  %v708 = vpack.c.bf16 %v698, %v696
  %v709 = vpack.c.bf16 %v699, %v697
  %v710 = vpack.c.bf16 %v702, %v700
  %v711 = vpack.c.bf16 %v703, %v701
  %v720 = vunpack.c.l.b16 %v704
  %v721 = vunpack.c.l.b16 %v705
  %v722 = vunpack.c.h.b16 %v704
  %v723 = vunpack.c.h.b16 %v705
  %v724 = vunpack.c.l.b16 %v706
  %v725 = vunpack.c.l.b16 %v707
  %v726 = vunpack.c.h.b16 %v706
  %v727 = vunpack.c.h.b16 %v707
  %v728 = vunpack.c.l.b16 %v708
  %v729 = vunpack.c.l.b16 %v709
  %v730 = vunpack.c.h.b16 %v708
  %v731 = vunpack.c.h.b16 %v709
  %v732 = vunpack.c.l.b16 %v710
  %v733 = vunpack.c.l.b16 %v711
  %v734 = vunpack.c.h.b16 %v710
  %v735 = vunpack.c.h.b16 %v711
  %v736 = vpack.c.b16 %v721, %v720
  %v737 = vpack.c.b16 %v723, %v722
  %v738 = vpack.c.b16 %v725, %v724
  %v739 = vpack.c.b16 %v727, %v726
  %v740 = vpack.c.b16 %v729, %v728
  %v741 = vpack.c.b16 %v731, %v730
  %v742 = vpack.c.b16 %v733, %v732
  %v743 = vpack.c.b16 %v735, %v734
  %752 = vst [vmem:[%s3] sm:$0xff] %v736
  %753 = vst [vmem:[%s3 + $0x8] sm:$0xff] %v737
  %754 = vst [vmem:[%s3 + $0x10] sm:$0xff] %v738
  %755 = vst [vmem:[%s3 + $0x18] sm:$0xff] %v739
  %756 = vst [vmem:[%s3 + $0x20] sm:$0xff] %v740
  %757 = vst [vmem:[%s3 + $0x28] sm:$0xff] %v741
  %758 = vst [vmem:[%s3 + $0x30] sm:$0xff] %v742
  %759 = vst [vmem:[%s3 + $0x38] sm:$0xff] %v743
  // Predicated region
  $region14: #{cnn_base_forward.5} parent=0 // pred_check
    _
  $region15: #{cnn_base_forward.5} parent=0 // pred_check_branch
    %761 = sbr.rel (0) target = $region17
  $region16: #{cnn_base_forward.5} parent=0 // pred_region
    _
  $region17: #{cnn_base_forward.5} parent=0 // pred_fallthru
    _
  // Predicated region
  $region18: #{cnn_base_forward.5} parent=0 // pred_check
    _
  $region19: #{cnn_base_forward.5} parent=0 // pred_check_branch
    %763 = sbr.rel (0) target = $region21
  $region20: #{cnn_base_forward.5} parent=0 // pred_region
    _
  $region21: #{cnn_base_forward.5} parent=0 // pred_fallthru
    _

// kernel: cnn_base_forward.6
$region0: #{cnn_base_forward.6}
  #allocation0 [shape = 'u32[]', space=smem, size = 0x4, offset = 0x4, fixed_abs, tag = 'smem constant byte address 0x4 - core index']
  #allocation1 [shape = 'u32[144,128]{1,0:T(1,128)}', space=vmem, size = 0x12000, scoped, tag = 'internal scratch']
  %s0 = inlined_call_operand.vmem [shape: bf16[32,576], index: 0, kind: input, shape index: {}]
  %s1 = inlined_call_operand.vmem [shape: bf16[576,128], index: 1, kind: input, shape index: {}]
  %s2 = inlined_call_operand.vmem [shape: f32[32,1], index: 2, kind: input, shape index: {}]
  %s3 = inlined_call_operand.vmem [shape: bf16[32,128], index: 3, kind: output, shape index: {}]
  %s4 = sld [smem:[#allocation0]]
  $region22: #{cnn_base_forward.6} parent=0
    _
  %s6 = ssub.s32 1, %s4
  %s7 = scalar_select 0, %s6, %s4
  // Predicated region
  $region2: #{cnn_base_forward.6} parent=0 // pred_check
    _
  $region3: #{cnn_base_forward.6} parent=0 // pred_check_branch
    %9 = sbr.rel (0) target = $region5
  $region4: #{cnn_base_forward.6} parent=0 // pred_region
    _
  $region5: #{cnn_base_forward.6} parent=0 // pred_fallthru
    _
  // Predicated region
  $region6: #{cnn_base_forward.6} parent=0 // pred_check
    _
  $region7: #{cnn_base_forward.6} parent=0 // pred_check_branch
    %11 = sbr.rel (0) target = $region9
  $region8: #{cnn_base_forward.6} parent=0 // pred_region
    _
  $region9: #{cnn_base_forward.6} parent=0 // pred_fallthru
    _
  // Predicated region
  $region10: #{cnn_base_forward.6} parent=0 // pred_check
    _
  $region11: #{cnn_base_forward.6} parent=0 // pred_check_branch
    %13 = sbr.rel (0) target = $region13
  $region12: #{cnn_base_forward.6} parent=0 // pred_region
    _
  $region13: #{cnn_base_forward.6} parent=0 // pred_fallthru
    _
  %v15 = vld [vmem:[%s0] sm:$0xff]
  %v16 = vld [vmem:[%s0 + $0x8] sm:$0xff]
  %v17 = vld [vmem:[%s0 + $0x10] sm:$0xf]
  %v18 = vld [vmem:[%s0 + $0x14] sm:$0xff]
  %v19 = vld [vmem:[%s0 + $0x1c] sm:$0xff]
  %v20 = vld [vmem:[%s0 + $0x24] sm:$0xf]
  %v21 = vld [vmem:[%s0 + $0x28] sm:$0xff]
  %v22 = vld [vmem:[%s0 + $0x30] sm:$0xff]
  %v23 = vld [vmem:[%s0 + $0x38] sm:$0xf]
  %v24 = vld [vmem:[%s0 + $0x3c] sm:$0xff]
  %v25 = vld [vmem:[%s0 + $0x44] sm:$0xff]
  %v26 = vld [vmem:[%s0 + $0x4c] sm:$0xf]
  %v27 = vld [vmem:[%s1] sm:$0xf]
  %v28 = vld [vmem:[%s1 + $0x4] sm:$0xf]
  %v29 = vld [vmem:[%s1 + $0x8] sm:$0xf]
  %v30 = vld [vmem:[%s1 + $0xc] sm:$0xf]
  %v31 = vld [vmem:[%s1 + $0x10] sm:$0xf]
  %v32 = vld [vmem:[%s1 + $0x14] sm:$0xf]
  %v33 = vld [vmem:[%s1 + $0x18] sm:$0xf]
  %v34 = vld [vmem:[%s1 + $0x1c] sm:$0xf]
  %v35 = vld [vmem:[%s1 + $0x20] sm:$0xf]
  %v36 = vld [vmem:[%s1 + $0x24] sm:$0xf]
  %v37 = vld [vmem:[%s1 + $0x28] sm:$0xf]
  %v38 = vld [vmem:[%s1 + $0x2c] sm:$0xf]
  %v39 = vld [vmem:[%s1 + $0x30] sm:$0xf]
  %v40 = vld [vmem:[%s1 + $0x34] sm:$0xf]
  %v41 = vld [vmem:[%s1 + $0x38] sm:$0xf]
  %v42 = vld [vmem:[%s1 + $0x3c] sm:$0xf]
  %v43 = vld [vmem:[%s1 + $0x40] sm:$0xf]
  %v44 = vld [vmem:[%s1 + $0x44] sm:$0xf]
  %v45 = vld [vmem:[%s1 + $0x48] sm:$0xf]
  %v46 = vld [vmem:[%s1 + $0x4c] sm:$0xf]
  %v47 = vld [vmem:[%s1 + $0x50] sm:$0xf]
  %v48 = vld [vmem:[%s1 + $0x54] sm:$0xf]
  %v49 = vld [vmem:[%s1 + $0x58] sm:$0xf]
  %v50 = vld [vmem:[%s1 + $0x5c] sm:$0xf]
  %v51 = vld [vmem:[%s1 + $0x60] sm:$0xf]
  %v52 = vld [vmem:[%s1 + $0x64] sm:$0xf]
  %v53 = vld [vmem:[%s1 + $0x68] sm:$0xf]
  %v54 = vld [vmem:[%s1 + $0x6c] sm:$0xf]
  %v55 = vld [vmem:[%s1 + $0x70] sm:$0xf]
  %v56 = vld [vmem:[%s1 + $0x74] sm:$0xf]
  %v57 = vld [vmem:[%s1 + $0x78] sm:$0xf]
  %v58 = vld [vmem:[%s1 + $0x7c] sm:$0xf]
  %v59 = vld [vmem:[%s1 + $0x80] sm:$0xf]
  %v60 = vld [vmem:[%s1 + $0x84] sm:$0xf]
  %v61 = vld [vmem:[%s1 + $0x88] sm:$0xf]
  %v62 = vld [vmem:[%s1 + $0x8c] sm:$0xf]
  %v63 = vld [vmem:[%s1 + $0x90] sm:$0xf]
  %v64 = vld [vmem:[%s1 + $0x94] sm:$0xf]
  %v65 = vld [vmem:[%s1 + $0x98] sm:$0xf]
  %v66 = vld [vmem:[%s1 + $0x9c] sm:$0xf]
  %v67 = vld [vmem:[%s1 + $0xa0] sm:$0xf]
  %v68 = vld [vmem:[%s1 + $0xa4] sm:$0xf]
  %v69 = vld [vmem:[%s1 + $0xa8] sm:$0xf]
  %v70 = vld [vmem:[%s1 + $0xac] sm:$0xf]
  %v71 = vld [vmem:[%s1 + $0xb0] sm:$0xf]
  %v72 = vld [vmem:[%s1 + $0xb4] sm:$0xf]
  %v73 = vld [vmem:[%s1 + $0xb8] sm:$0xf]
  %v74 = vld [vmem:[%s1 + $0xbc] sm:$0xf]
  %v75 = vld [vmem:[%s1 + $0xc0] sm:$0xf]
  %v76 = vld [vmem:[%s1 + $0xc4] sm:$0xf]
  %v77 = vld [vmem:[%s1 + $0xc8] sm:$0xf]
  %v78 = vld [vmem:[%s1 + $0xcc] sm:$0xf]
  %v79 = vld [vmem:[%s1 + $0xd0] sm:$0xf]
  %v80 = vld [vmem:[%s1 + $0xd4] sm:$0xf]
  %v81 = vld [vmem:[%s1 + $0xd8] sm:$0xf]
  %v82 = vld [vmem:[%s1 + $0xdc] sm:$0xf]
  %v83 = vld [vmem:[%s1 + $0xe0] sm:$0xf]
  %v84 = vld [vmem:[%s1 + $0xe4] sm:$0xf]
  %v85 = vld [vmem:[%s1 + $0xe8] sm:$0xf]
  %v86 = vld [vmem:[%s1 + $0xec] sm:$0xf]
  %v87 = vld [vmem:[%s1 + $0xf0] sm:$0xf]
  %v88 = vld [vmem:[%s1 + $0xf4] sm:$0xf]
  %v89 = vld [vmem:[%s1 + $0xf8] sm:$0xf]
  %v90 = vld [vmem:[%s1 + $0xfc] sm:$0xf]
  %v91 = vld [vmem:[%s1 + $0x100] sm:$0xf]
  %v92 = vld [vmem:[%s1 + $0x104] sm:$0xf]
  %v93 = vld [vmem:[%s1 + $0x108] sm:$0xf]
  %v94 = vld [vmem:[%s1 + $0x10c] sm:$0xf]
  %v95 = vld [vmem:[%s1 + $0x110] sm:$0xf]
  %v96 = vld [vmem:[%s1 + $0x114] sm:$0xf]
  %v97 = vld [vmem:[%s1 + $0x118] sm:$0xf]
  %v98 = vld [vmem:[%s1 + $0x11c] sm:$0xf]
  %v99 = vld [vmem:[%s2] sm:$0xff]
  %v100 = vld [vmem:[%s2 + $0x8] sm:$0xff]
  %v101 = vld [vmem:[%s2 + $0x10] sm:$0xff]
  %v102 = vld [vmem:[%s2 + $0x18] sm:$0xff]
  %104 = vset.pattern.permute.xlu0 0
  %105 = vperm.xlu0 %104, %v99
  %v106 = vpop.permute.xlu0 %105
  %109 = vset.pattern.permute.xlu0 0
  %110 = vperm.xlu0 %109, %v100
  %v111 = vpop.permute.xlu0 %110
  %114 = vset.pattern.permute.xlu0 0
  %115 = vperm.xlu0 %114, %v101
  %v116 = vpop.permute.xlu0 %115
  %119 = vset.pattern.permute.xlu0 0
  %120 = vperm.xlu0 %119, %v102
  %v121 = vpop.permute.xlu0 %120
  %v135 = vunpack.c.l.b16 %v15
  %v136 = vunpack.c.h.b16 %v15
  %v137 = vunpack.c.l.b16 %v16
  %v138 = vunpack.c.h.b16 %v16
  %v139 = vunpack.c.l.b16 %v17
  %v140 = vunpack.c.l.b16 %v18
  %v141 = vunpack.c.h.b16 %v18
  %v142 = vunpack.c.l.b16 %v19
  %v143 = vunpack.c.h.b16 %v19
  %v144 = vunpack.c.l.b16 %v20
  %v145 = vunpack.c.l.b16 %v21
  %v146 = vunpack.c.h.b16 %v21
  %v147 = vunpack.c.l.b16 %v22
  %v148 = vunpack.c.h.b16 %v22
  %v149 = vunpack.c.l.b16 %v23
  %v150 = vunpack.c.l.b16 %v24
  %v151 = vunpack.c.h.b16 %v24
  %v152 = vunpack.c.l.b16 %v25
  %v153 = vunpack.c.h.b16 %v25
  %v154 = vunpack.c.l.b16 %v26
  %v155 = vpack.c.b16 %v140, %v135
  %v156 = vpack.c.b16 %v141, %v136
  %v157 = vpack.c.b16 %v142, %v137
  %v158 = vpack.c.b16 %v143, %v138
  %v159 = vpack.c.b16 %v144, %v139
  %v160 = vpack.c.b16 %v150, %v145
  %v161 = vpack.c.b16 %v151, %v146
  %v162 = vpack.c.b16 %v152, %v147
  %v163 = vpack.c.b16 %v153, %v148
  %v164 = vpack.c.b16 %v154, %v149
  %v245 = vunpack.c.l.b16 %v27
  %v246 = vunpack.c.l.b16 %v28
  %v247 = vunpack.c.l.b16 %v29
  %v248 = vunpack.c.l.b16 %v30
  %v249 = vunpack.c.l.b16 %v31
  %v250 = vunpack.c.l.b16 %v32
  %v251 = vunpack.c.l.b16 %v33
  %v252 = vunpack.c.l.b16 %v34
  %v253 = vunpack.c.l.b16 %v35
  %v254 = vunpack.c.l.b16 %v36
  %v255 = vunpack.c.l.b16 %v37
  %v256 = vunpack.c.l.b16 %v38
  %v257 = vunpack.c.l.b16 %v39
  %v258 = vunpack.c.l.b16 %v40
  %v259 = vunpack.c.l.b16 %v41
  %v260 = vunpack.c.l.b16 %v42
  %v261 = vunpack.c.l.b16 %v43
  %v262 = vunpack.c.l.b16 %v44
  %v263 = vunpack.c.l.b16 %v45
  %v264 = vunpack.c.l.b16 %v46
  %v265 = vunpack.c.l.b16 %v47
  %v266 = vunpack.c.l.b16 %v48
  %v267 = vunpack.c.l.b16 %v49
  %v268 = vunpack.c.l.b16 %v50
  %v269 = vunpack.c.l.b16 %v51
  %v270 = vunpack.c.l.b16 %v52
  %v271 = vunpack.c.l.b16 %v53
  %v272 = vunpack.c.l.b16 %v54
  %v273 = vunpack.c.l.b16 %v55
  %v274 = vunpack.c.l.b16 %v56
  %v275 = vunpack.c.l.b16 %v57
  %v276 = vunpack.c.l.b16 %v58
  %v277 = vunpack.c.l.b16 %v59
  %v278 = vunpack.c.l.b16 %v60
  %v279 = vunpack.c.l.b16 %v61
  %v280 = vunpack.c.l.b16 %v62
  %v281 = vunpack.c.l.b16 %v63
  %v282 = vunpack.c.l.b16 %v64
  %v283 = vunpack.c.l.b16 %v65
  %v284 = vunpack.c.l.b16 %v66
  %v285 = vunpack.c.l.b16 %v67
  %v286 = vunpack.c.l.b16 %v68
  %v287 = vunpack.c.l.b16 %v69
  %v288 = vunpack.c.l.b16 %v70
  %v289 = vunpack.c.l.b16 %v71
  %v290 = vunpack.c.l.b16 %v72
  %v291 = vunpack.c.l.b16 %v73
  %v292 = vunpack.c.l.b16 %v74
  %v293 = vunpack.c.l.b16 %v75
  %v294 = vunpack.c.l.b16 %v76
  %v295 = vunpack.c.l.b16 %v77
  %v296 = vunpack.c.l.b16 %v78
  %v297 = vunpack.c.l.b16 %v79
  %v298 = vunpack.c.l.b16 %v80
  %v299 = vunpack.c.l.b16 %v81
  %v300 = vunpack.c.l.b16 %v82
  %v301 = vunpack.c.l.b16 %v83
  %v302 = vunpack.c.l.b16 %v84
  %v303 = vunpack.c.l.b16 %v85
  %v304 = vunpack.c.l.b16 %v86
  %v305 = vunpack.c.l.b16 %v87
  %v306 = vunpack.c.l.b16 %v88
  %v307 = vunpack.c.l.b16 %v89
  %v308 = vunpack.c.l.b16 %v90
  %v309 = vunpack.c.l.b16 %v91
  %v310 = vunpack.c.l.b16 %v92
  %v311 = vunpack.c.l.b16 %v93
  %v312 = vunpack.c.l.b16 %v94
  %v313 = vunpack.c.l.b16 %v95
  %v314 = vunpack.c.l.b16 %v96
  %v315 = vunpack.c.l.b16 %v97
  %v316 = vunpack.c.l.b16 %v98
  %v317 = vpack.c.b16 %v246, %v245
  %v318 = vpack.c.b16 %v248, %v247
  %v319 = vpack.c.b16 %v250, %v249
  %v320 = vpack.c.b16 %v252, %v251
  %v321 = vpack.c.b16 %v254, %v253
  %v322 = vpack.c.b16 %v256, %v255
  %v323 = vpack.c.b16 %v258, %v257
  %v324 = vpack.c.b16 %v260, %v259
  %v325 = vpack.c.b16 %v262, %v261
  %v326 = vpack.c.b16 %v264, %v263
  %v327 = vpack.c.b16 %v266, %v265
  %v328 = vpack.c.b16 %v268, %v267
  %v329 = vpack.c.b16 %v270, %v269
  %v330 = vpack.c.b16 %v272, %v271
  %v331 = vpack.c.b16 %v274, %v273
  %v332 = vpack.c.b16 %v276, %v275
  %v333 = vpack.c.b16 %v278, %v277
  %v334 = vpack.c.b16 %v280, %v279
  %v335 = vpack.c.b16 %v282, %v281
  %v336 = vpack.c.b16 %v284, %v283
  %v337 = vpack.c.b16 %v286, %v285
  %v338 = vpack.c.b16 %v288, %v287
  %v339 = vpack.c.b16 %v290, %v289
  %v340 = vpack.c.b16 %v292, %v291
  %v341 = vpack.c.b16 %v294, %v293
  %v342 = vpack.c.b16 %v296, %v295
  %v343 = vpack.c.b16 %v298, %v297
  %v344 = vpack.c.b16 %v300, %v299
  %v345 = vpack.c.b16 %v302, %v301
  %v346 = vpack.c.b16 %v304, %v303
  %v347 = vpack.c.b16 %v306, %v305
  %v348 = vpack.c.b16 %v308, %v307
  %v349 = vpack.c.b16 %v310, %v309
  %v350 = vpack.c.b16 %v312, %v311
  %v351 = vpack.c.b16 %v314, %v313
  %v352 = vpack.c.b16 %v316, %v315
  %vm389 = vcmask 523264
  %v391 = vsel %vm389, %v159, 0
  %v394 = vsel %vm389, %v164, 0
  %396 = vmatprep.subr.bf16.mxu0 0
  %397 = vmatpush1.bf16.msra.mxu0 %v324
  %398 = vmatprep.subr.bf16.mxu0 0
  %399 = vmatpush1.bf16.msra.mxu0 %v323
  %400 = vmatprep.subr.bf16.mxu0 0
  %401 = vmatpush1.bf16.msra.mxu0 %v322
  %402 = vmatprep.subr.bf16.mxu0 0
  %403 = vmatpush1.bf16.msra.mxu0 %v321
  %404 = vmatprep.subr.bf16.mxu0 0
  %405 = vmatpush1.bf16.msra.mxu0 %v320
  %406 = vmatprep.subr.bf16.mxu0 0
  %407 = vmatpush1.bf16.msra.mxu0 %v319
  %408 = vmatprep.subr.bf16.mxu0 0
  %409 = vmatpush1.bf16.msra.mxu0 %v318
  %410 = vmatprep.subr.bf16.mxu0 0
  %411 = vmatpush1.bf16.msra.mxu0 %v317
  %412 = vmatprep.subr.bf16.mxu0 0
  %413 = vmatpush2.bf16.msra.mxu0 %v332
  %414 = vmatprep.subr.bf16.mxu0 0
  %415 = vmatpush2.bf16.msra.mxu0 %v331
  %416 = vmatprep.subr.bf16.mxu0 0
  %417 = vmatpush2.bf16.msra.mxu0 %v330
  %418 = vmatprep.subr.bf16.mxu0 0
  %419 = vmatpush2.bf16.msra.mxu0 %v329
  %420 = vmatprep.subr.bf16.mxu0 0
  %421 = vmatpush2.bf16.msra.mxu0 %v328
  %422 = vmatprep.subr.bf16.mxu0 0
  %423 = vmatpush2.bf16.msra.mxu0 %v327
  %424 = vmatprep.subr.bf16.mxu0 0
  %425 = vmatpush2.bf16.msra.mxu0 %v326
  %426 = vmatprep.subr.bf16.mxu0 0
  %427 = vmatpush2.bf16.msra.mxu0 %v325
  %428 = vmatprep.mubr.bf16.mxu0 %v156
  %429 = vmatmul.mubr.bf16.gmra.mxu0 %v155
  %v430 = vpop.f32.mrf.mxu0
  %v431 = vadd.f32 %v106, %v430
  %v432 = vpop.f32.mrf.mxu0
  %v433 = vpop.f32.mrf.mxu0
  %v434 = vadd.f32 %v111, %v433
  %v435 = vpop.f32.mrf.mxu0
  %436 = vmatprep.mubr.bf16.mxu0 %v161
  %437 = vmatmul.mubr.bf16.gmra.mxu0 %v160
  %v438 = vpop.f32.mrf.mxu0
  %v439 = vadd.f32 %v116, %v438
  %v440 = vpop.f32.mrf.mxu0
  %v441 = vpop.f32.mrf.mxu0
  %v442 = vadd.f32 %v121, %v441
  %v443 = vpop.f32.mrf.mxu0
  %444 = vdwg.mxu0
  %445 = vmatprep.subr.bf16.mxu0 0
  %446 = vmatpush1.bf16.msra.mxu0 %v340
  %447 = vmatprep.subr.bf16.mxu0 0
  %448 = vmatpush1.bf16.msra.mxu0 %v339
  %449 = vmatprep.subr.bf16.mxu0 0
  %450 = vmatpush1.bf16.msra.mxu0 %v338
  %451 = vmatprep.subr.bf16.mxu0 0
  %452 = vmatpush1.bf16.msra.mxu0 %v337
  %453 = vmatprep.subr.bf16.mxu0 0
  %454 = vmatpush1.bf16.msra.mxu0 %v336
  %455 = vmatprep.subr.bf16.mxu0 0
  %456 = vmatpush1.bf16.msra.mxu0 %v335
  %457 = vmatprep.subr.bf16.mxu0 0
  %458 = vmatpush1.bf16.msra.mxu0 %v334
  %459 = vmatprep.subr.bf16.mxu0 0
  %460 = vmatpush1.bf16.msra.mxu0 %v333
  %461 = vmatprep.subr.bf16.mxu0 0
  %462 = vmatpush2.bf16.msra.mxu0 %v348
  %463 = vmatprep.subr.bf16.mxu0 0
  %464 = vmatpush2.bf16.msra.mxu0 %v347
  %465 = vmatprep.subr.bf16.mxu0 0
  %466 = vmatpush2.bf16.msra.mxu0 %v346
  %467 = vmatprep.subr.bf16.mxu0 0
  %468 = vmatpush2.bf16.msra.mxu0 %v345
  %469 = vmatprep.subr.bf16.mxu0 0
  %470 = vmatpush2.bf16.msra.mxu0 %v344
  %471 = vmatprep.subr.bf16.mxu0 0
  %472 = vmatpush2.bf16.msra.mxu0 %v343
  %473 = vmatprep.subr.bf16.mxu0 0
  %474 = vmatpush2.bf16.msra.mxu0 %v342
  %475 = vmatprep.subr.bf16.mxu0 0
  %476 = vmatpush2.bf16.msra.mxu0 %v341
  %477 = vmatprep.mubr.bf16.mxu0 %v158
  %478 = vmatmul.mubr.bf16.gmra.mxu0 %v157
  %v479 = vpop.f32.mrf.mxu0
  %v480 = vadd.f32 %v431, %v479
  %v481 = vpop.f32.mrf.mxu0
  %v482 = vpop.f32.mrf.mxu0
  %v483 = vadd.f32 %v434, %v482
  %v484 = vpop.f32.mrf.mxu0
  %485 = vmatprep.mubr.bf16.mxu0 %v163
  %486 = vmatmul.mubr.bf16.gmra.mxu0 %v162
  %v487 = vpop.f32.mrf.mxu0
  %v488 = vadd.f32 %v439, %v487
  %v489 = vpop.f32.mrf.mxu0
  %v490 = vpop.f32.mrf.mxu0
  %v491 = vadd.f32 %v442, %v490
  %v492 = vpop.f32.mrf.mxu0
  %493 = vdwg.mxu0
  %494 = vmatprep.subr.bf16.mxu0 0
  %495 = vmatpush1.bf16.msra.mxu0 0
  %496 = vmatprep.subr.bf16.mxu0 0
  %497 = vmatpush1.bf16.msra.mxu0 0
  %498 = vmatprep.subr.bf16.mxu0 0
  %499 = vmatpush1.bf16.msra.mxu0 0
  %500 = vmatprep.subr.bf16.mxu0 0
  %501 = vmatpush1.bf16.msra.mxu0 0
  %502 = vmatprep.subr.bf16.mxu0 0
  %503 = vmatpush1.bf16.msra.mxu0 %v352
  %504 = vmatprep.subr.bf16.mxu0 0
  %505 = vmatpush1.bf16.msra.mxu0 %v351
  %506 = vmatprep.subr.bf16.mxu0 0
  %507 = vmatpush1.bf16.msra.mxu0 %v350
  %508 = vmatprep.subr.bf16.mxu0 0
  %509 = vmatpush1.bf16.msra.mxu0 %v349
  %510 = vmatprep.subr.bf16.mxu0 0
  %511 = vmatpush2.bf16.msra.mxu0 0
  %512 = vmatprep.subr.bf16.mxu0 0
  %513 = vmatpush2.bf16.msra.mxu0 0
  %514 = vmatprep.subr.bf16.mxu0 0
  %515 = vmatpush2.bf16.msra.mxu0 0
  %516 = vmatprep.subr.bf16.mxu0 0
  %517 = vmatpush2.bf16.msra.mxu0 0
  %518 = vmatprep.subr.bf16.mxu0 0
  %519 = vmatpush2.bf16.msra.mxu0 0
  %520 = vmatprep.subr.bf16.mxu0 0
  %521 = vmatpush2.bf16.msra.mxu0 0
  %522 = vmatprep.subr.bf16.mxu0 0
  %523 = vmatpush2.bf16.msra.mxu0 0
  %524 = vmatprep.subr.bf16.mxu0 0
  %525 = vmatpush2.bf16.msra.mxu0 0
  %526 = vmatprep.mubr.bf16.mxu0 0
  %527 = vmatmul.mubr.bf16.gmra.mxu0 %v391
  %v528 = vpop.f32.mrf.mxu0
  %v529 = vadd.f32 %v480, %v528
  %v530 = vpop.f32.mrf.mxu0
  %v531 = vpop.f32.mrf.mxu0
  %v532 = vadd.f32 %v483, %v531
  %v533 = vpop.f32.mrf.mxu0
  %534 = vmatprep.mubr.bf16.mxu0 0
  %535 = vmatmul.mubr.bf16.gmra.mxu0 %v394
  %v536 = vpop.f32.mrf.mxu0
  %v537 = vadd.f32 %v488, %v536
  %v538 = vpop.f32.mrf.mxu0
  %v539 = vpop.f32.mrf.mxu0
  %v540 = vadd.f32 %v491, %v539
  %v541 = vpop.f32.mrf.mxu0
  %542 = vdwg.mxu0
  %v543 = vmax.f32 %v529, 0.0
  %v544 = vmax.f32 %v532, 0.0
  %v545 = vmax.f32 %v537, 0.0
  %v546 = vmax.f32 %v540, 0.0
  %v547 = vpack.c.bf16 %v544, %v543
  %v548 = vpack.c.bf16 %v546, %v545
  %v551 = vunpack.c.l.b16 %v547
  %v552 = vunpack.c.h.b16 %v547
  %v553 = vunpack.c.l.b16 %v548
  %v554 = vunpack.c.h.b16 %v548
  %v555 = vpack.c.b16 %v551, %v551
  %v556 = vpack.c.b16 %v552, %v552
  %v557 = vpack.c.b16 %v553, %v553
  %v558 = vpack.c.b16 %v554, %v554
  %563 = vst [vmem:[%s3] sm:$0xf] %v555
  %564 = vst [vmem:[%s3 + $0x4] sm:$0xf] %v556
  %565 = vst [vmem:[%s3 + $0x8] sm:$0xf] %v557
  %566 = vst [vmem:[%s3 + $0xc] sm:$0xf] %v558
  // Predicated region
  $region14: #{cnn_base_forward.6} parent=0 // pred_check
    _
  $region15: #{cnn_base_forward.6} parent=0 // pred_check_branch
    %568 = sbr.rel (0) target = $region17
  $region16: #{cnn_base_forward.6} parent=0 // pred_region
    _
  $region17: #{cnn_base_forward.6} parent=0 // pred_fallthru
    _
  // Predicated region
  $region18: #{cnn_base_forward.6} parent=0 // pred_check
    _
  $region19: #{cnn_base_forward.6} parent=0 // pred_check_branch
    %570 = sbr.rel (0) target = $region21
  $region20: #{cnn_base_forward.6} parent=0 // pred_region
    _
  $region21: #{cnn_base_forward.6} parent=0 // pred_fallthru
    _

// kernel: cnn_base_forward.7
$region0: #{cnn_base_forward.7}
  #allocation0 [shape = 'u32[]', space=smem, size = 0x4, offset = 0x4, fixed_abs, tag = 'smem constant byte address 0x4 - core index']
  #allocation1 [shape = 'u32[144,128]{1,0:T(1,128)}', space=vmem, size = 0x12000, scoped, tag = 'internal scratch']
  %s0 = inlined_call_operand.vmem [shape: bf16[8,1568], index: 0, kind: input, shape index: {}]
  %s1 = inlined_call_operand.vmem [shape: bf16[1568,512], index: 1, kind: input, shape index: {}]
  %s2 = inlined_call_operand.vmem [shape: f32[1,512], index: 2, kind: input, shape index: {}]
  %s3 = inlined_call_operand.vmem [shape: f32[8,512], index: 3, kind: output, shape index: {}]
  %s4 = sld [smem:[#allocation0]]
  $region83: #{cnn_base_forward.7} parent=0
    _
  %s6 = ssub.s32 1, %s4
  %s7 = scalar_select 0, %s6, %s4
  $region1: #{cnn_base_forward.7} parent=0
    #allocation2 [shape = 'u8[1605632]{0}', space=vmem, size = 0x188000, scoped, tag = 'input window, operand 1']
    loop: start=0, step=1, limit=4
    $region2: #{cnn_base_forward.7} parent=1 // loop_pre_header
      _
    $region3: #{cnn_base_forward.7} parent=1 // loop_header
      %s9 = sphi 0, %s13
      %p10 = scmp.ge.s32.totalorder %s9, 4
      %s16 = sphi 0, %s28
      %s17 = sphi 0, %s24
      %s18 = sphi 0, %s16
      %s19 = sphi 0, %s17
      %s20 = sphi 0, %s18
      %s21 = sphi 0, %s19
      %s31 = sphi 0, %s33
      %s34 = sphi 0, %s31
      %s35 = sphi 0, %s34
      %s51 = sphi 0, %s35
      %s57 = sphi 0, %s59
      %s60 = sphi 0, %s57
      %s61 = sphi 0, %s60
      %s77 = sphi 0, %s61
      %s83 = sphi 0, %s85
      %s86 = sphi 0, %s83
      %s87 = sphi 0, %s86
      %s103 = sphi 0, %s87
      %s111 = sphi 0, %s113
      %s114 = sphi 0, %s111
      %s115 = sphi 0, %s114
      %s131 = sphi 0, %s115
    $region4: #{cnn_base_forward.7} parent=1 // loop_header_branch
      %12 = sbr.rel (%p10) target = $region8
    $region5: #{cnn_base_forward.7} parent=1 // loop_body
      %s14 = ssub.s32 %s9, 1
      %s15 = ssub.s32 %s9, 2
      %s22 = sadd.s32 1, %s17
      %p23 = scmp.ge.s32.totalorder %s22, 2
      %s24 = scalar_select %p23, 0, %s22
      %s25 = sadd.s32 1, %s16
      %s26 = scalar_select %p23, %s25, %s16
      %p27 = scmp.ge.s32.totalorder %s26, 1
      %s28 = scalar_select %p27, 0, %s26
      %s29 = ssub.s32 %s16, %s28
      %p30 = scmp.eq.s32.totalorder %s29, 0
      %s32 = sadd.s32 %s31, 1
      %s33 = scalar_select %p30, %s31, %s32
      %p36 = pneg %p30
      %p37 = scmp.eq.s32.totalorder %s9, 1
      %p38 = por %p36, %p37
      %p39 = scmp.ne.s32.totalorder %s31, %s34
      %p40 = scmp.eq.s32.totalorder %s9, 0
      %p41 = por %p39, %p40
      %p42 = scmp.ne.s32.totalorder %s31, %s34
      %p43 = scmp.eq.s32.totalorder %s14, 1
      %p44 = por %p42, %p43
      %p45 = scmp.ne.s32.totalorder %s34, %s35
      %p46 = scmp.eq.s32.totalorder %s14, 0
      %p47 = por %p45, %p46
      %p48 = scmp.ne.s32.totalorder %s34, %s35
      %p49 = scmp.eq.s32.totalorder %s15, 1
      %p50 = por %p48, %p49
      %p52 = scmp.ne.s32.totalorder %s35, %s51
      %p53 = scmp.eq.s32.totalorder %s15, 0
      %p54 = por %p52, %p53
      %s55 = ssub.s32 %s17, %s24
      %p56 = scmp.eq.s32.totalorder %s55, 0
      %s58 = sadd.s32 %s57, 1
      %s59 = scalar_select %p56, %s57, %s58
      %p62 = pneg %p56
      %p63 = scmp.eq.s32.totalorder %s9, 1
      %p64 = por %p62, %p63
      %p65 = scmp.ne.s32.totalorder %s57, %s60
      %p66 = scmp.eq.s32.totalorder %s9, 0
      %p67 = por %p65, %p66
      %p68 = scmp.ne.s32.totalorder %s57, %s60
      %p69 = scmp.eq.s32.totalorder %s14, 1
      %p70 = por %p68, %p69
      %p71 = scmp.ne.s32.totalorder %s60, %s61
      %p72 = scmp.eq.s32.totalorder %s14, 0
      %p73 = por %p71, %p72
      %p74 = scmp.ne.s32.totalorder %s60, %s61
      %p75 = scmp.eq.s32.totalorder %s15, 1
      %p76 = por %p74, %p75
      %p78 = scmp.ne.s32.totalorder %s61, %s77
      %p79 = scmp.eq.s32.totalorder %s15, 0
      %p80 = por %p78, %p79
      %s81 = ssub.s32 %s17, %s24
      %p82 = scmp.eq.s32.totalorder %s81, 0
      %s84 = sadd.s32 %s83, 1
      %s85 = scalar_select %p82, %s83, %s84
      %p88 = pneg %p82
      %p89 = scmp.eq.s32.totalorder %s9, 1
      %p90 = por %p88, %p89
      %p91 = scmp.ne.s32.totalorder %s83, %s86
      %p92 = scmp.eq.s32.totalorder %s9, 0
      %p93 = por %p91, %p92
      %p94 = scmp.ne.s32.totalorder %s83, %s86
      %p95 = scmp.eq.s32.totalorder %s14, 1
      %p96 = por %p94, %p95
      %p97 = scmp.ne.s32.totalorder %s86, %s87
      %p98 = scmp.eq.s32.totalorder %s14, 0
      %p99 = por %p97, %p98
      %p100 = scmp.ne.s32.totalorder %s86, %s87
      %p101 = scmp.eq.s32.totalorder %s15, 1
      %p102 = por %p100, %p101
      %p104 = scmp.ne.s32.totalorder %s87, %s103
      %p105 = scmp.eq.s32.totalorder %s15, 0
      %p106 = por %p104, %p105
      %s107 = ssub.s32 %s16, %s28
      %s108 = ssub.s32 %s17, %s24
      %s109 = sor.u32 %s107, %s108
      %p110 = scmp.eq.s32.totalorder %s109, 0
      %s112 = sadd.s32 %s111, 1
      %s113 = scalar_select %p110, %s111, %s112
      %p116 = pneg %p110
      %p117 = scmp.eq.s32.totalorder %s9, 1
      %p118 = por %p116, %p117
      %p119 = scmp.ne.s32.totalorder %s111, %s114
      %p120 = scmp.eq.s32.totalorder %s9, 0
      %p121 = por %p119, %p120
      %p122 = scmp.ne.s32.totalorder %s111, %s114
      %p123 = scmp.eq.s32.totalorder %s14, 1
      %p124 = por %p122, %p123
      %p125 = scmp.ne.s32.totalorder %s114, %s115
      %p126 = scmp.eq.s32.totalorder %s14, 0
      %p127 = por %p125, %p126
      %p128 = scmp.ne.s32.totalorder %s114, %s115
      %p129 = scmp.eq.s32.totalorder %s15, 1
      %p130 = por %p128, %p129
      %p132 = scmp.ne.s32.totalorder %s115, %s131
      %p133 = scmp.eq.s32.totalorder %s15, 0
      %p134 = por %p132, %p133
      %p135 = scmp.le.s32.totalorder 1, %s9
      %p136 = scmp.lt.s32.totalorder %s9, 3
      %p137 = pnand %p135, %p136
      %p138 = pneg %p137
      // Predicated region
      $region9: #{cnn_base_forward.7} parent=5 // pred_check
        _
      $region10: #{cnn_base_forward.7} parent=5 // pred_check_branch
        %140 = sbr.rel (%p137) target = $region12
      $region11: #{cnn_base_forward.7} parent=5 // pred_region
        %s141 = ssub.s32 %s9, 1
        // Predicated region
        $region13: #{cnn_base_forward.7} parent=11 // pred_check
          %p142 = pneg %p47
        $region14: #{cnn_base_forward.7} parent=11 // pred_check_branch
          %144 = sbr.rel (%p142) target = $region16
        $region15: #{cnn_base_forward.7} parent=11 // pred_region
          %p145 = scmp.lt.s32.totalorder %s18, 0
          %s146 = scalar_select %p145, %s18, 0
          %s147 = smul.addr %s146, 13
          %s148 = smul.addr %s147, 4
          %s149 = scalar_lea.vmem %s0, %s148
        $region16: #{cnn_base_forward.7} parent=11 // pred_fallthru
          _
      $region12: #{cnn_base_forward.7} parent=5 // pred_fallthru
        _
      %p150 = scmp.lt.s32.totalorder %s9, 2
      // Predicated region
      $region17: #{cnn_base_forward.7} parent=5 // pred_check
        %p151 = pneg %p150
      $region18: #{cnn_base_forward.7} parent=5 // pred_check_branch
        %153 = sbr.rel (%p151) target = $region20
      $region19: #{cnn_base_forward.7} parent=5 // pred_region
        // Predicated region
        $region21: #{cnn_base_forward.7} parent=19 // pred_check
          %p154 = pneg %p67
        $region22: #{cnn_base_forward.7} parent=19 // pred_check_branch
          %156 = sbr.rel (%p154) target = $region24
        $region23: #{cnn_base_forward.7} parent=19 // pred_region
          %s157 = sand.u32 %s57, 1
          %s158 = sand.u32 %s57, 1
          %s159 = smul.addr %s158, 1568
          %s160 = scalar_lea.vmem [#allocation2], %s159
          %s161 = smul.u32 2, %s17
          %s162 = smul.addr %s161, 4
          %s163 = scalar_lea.vmem %s1, %s162
          // Predicated region
          $region25: #{cnn_base_forward.7} parent=23 // pred_check
            _
          $region26: #{cnn_base_forward.7} parent=23 // pred_check_branch
            %165 = sbr.rel (0) target = $region28
          $region27: #{cnn_base_forward.7} parent=23 // pred_region
            // Predicated region
            $region29: #{cnn_base_forward.7} parent=27 // pred_check
              _
            $region30: #{cnn_base_forward.7} parent=27 // pred_check_branch
              %167 = sbr.rel (0) target = $region32
            $region31: #{cnn_base_forward.7} parent=27 // pred_region
              // Predicated region
              $region44: #{cnn_base_forward.7} parent=31 // pred_check
                _
              $region45: #{cnn_base_forward.7} parent=31 // pred_check_branch
                %573 = sbr.rel (0) target = $region47
              $region46: #{cnn_base_forward.7} parent=31 // pred_region
                loop: start=0, step=1, limit=1
                $region48: #{cnn_base_forward.7} parent=46 // loop_pre_header
                  _
                $region49: #{cnn_base_forward.7} parent=46 // loop_header
                  %s575 = sphi 0, %s579
                  %p576 = scmp.ge.s32.totalorder %s575, 1
                  %s580 = sphi %s163, %s163
                  %s581 = sphi %s160, %s160
                $region50: #{cnn_base_forward.7} parent=46 // loop_header_branch
                  %578 = sbr.rel (%p576) target = $region54
                $region51: #{cnn_base_forward.7} parent=46 // loop_body
                  %v582 = vld [vmem:[%s580] sm:$0xff]
                  %583 = vst [vmem:[%s581] sm:$0xff] %v582
                  %v584 = vld [vmem:[%s580 + $0x10] sm:$0xff]
                  %585 = vst [vmem:[%s581 + $0x8] sm:$0xff] %v584
                  %v586 = vld [vmem:[%s580 + $0x20] sm:$0xff]
                  %587 = vst [vmem:[%s581 + $0x10] sm:$0xff] %v586
                  %v588 = vld [vmem:[%s580 + $0x30] sm:$0xff]
                  %589 = vst [vmem:[%s581 + $0x18] sm:$0xff] %v588
                  %v590 = vld [vmem:[%s580 + $0x40] sm:$0xff]
                  %591 = vst [vmem:[%s581 + $0x20] sm:$0xff] %v590
                  %v592 = vld [vmem:[%s580 + $0x50] sm:$0xff]
                  %593 = vst [vmem:[%s581 + $0x28] sm:$0xff] %v592
                  %v594 = vld [vmem:[%s580 + $0x60] sm:$0xff]
                  %595 = vst [vmem:[%s581 + $0x30] sm:$0xff] %v594
                  %v596 = vld [vmem:[%s580 + $0x70] sm:$0xff]
                  %597 = vst [vmem:[%s581 + $0x38] sm:$0xff] %v596
                  %v598 = vld [vmem:[%s580 + $0x80] sm:$0xff]
                  %599 = vst [vmem:[%s581 + $0x40] sm:$0xff] %v598
                  %v600 = vld [vmem:[%s580 + $0x90] sm:$0xff]
                  %601 = vst [vmem:[%s581 + $0x48] sm:$0xff] %v600
                  %v602 = vld [vmem:[%s580 + $0xa0] sm:$0xff]
                  %603 = vst [vmem:[%s581 + $0x50] sm:$0xff] %v602
                  %v604 = vld [vmem:[%s580 + $0xb0] sm:$0xff]
                  %605 = vst [vmem:[%s581 + $0x58] sm:$0xff] %v604
                  %v606 = vld [vmem:[%s580 + $0xc0] sm:$0xff]
                  %607 = vst [vmem:[%s581 + $0x60] sm:$0xff] %v606
                  %v608 = vld [vmem:[%s580 + $0xd0] sm:$0xff]
                  %609 = vst [vmem:[%s581 + $0x68] sm:$0xff] %v608
                  %v610 = vld [vmem:[%s580 + $0xe0] sm:$0xff]
                  %611 = vst [vmem:[%s581 + $0x70] sm:$0xff] %v610
                  %v612 = vld [vmem:[%s580 + $0xf0] sm:$0xff]
                  %613 = vst [vmem:[%s581 + $0x78] sm:$0xff] %v612
                  %v614 = vld [vmem:[%s580 + $0x100] sm:$0xff]
                  %615 = vst [vmem:[%s581 + $0x80] sm:$0xff] %v614
                  %v616 = vld [vmem:[%s580 + $0x110] sm:$0xff]
                  %617 = vst [vmem:[%s581 + $0x88] sm:$0xff] %v616
                  %v618 = vld [vmem:[%s580 + $0x120] sm:$0xff]
                  %619 = vst [vmem:[%s581 + $0x90] sm:$0xff] %v618
                  %v620 = vld [vmem:[%s580 + $0x130] sm:$0xff]
                  %621 = vst [vmem:[%s581 + $0x98] sm:$0xff] %v620
                  %v622 = vld [vmem:[%s580 + $0x140] sm:$0xff]
                  %623 = vst [vmem:[%s581 + $0xa0] sm:$0xff] %v622
                  %v624 = vld [vmem:[%s580 + $0x150] sm:$0xff]
                  %625 = vst [vmem:[%s581 + $0xa8] sm:$0xff] %v624
                  %v626 = vld [vmem:[%s580 + $0x160] sm:$0xff]
                  %627 = vst [vmem:[%s581 + $0xb0] sm:$0xff] %v626
                  %v628 = vld [vmem:[%s580 + $0x170] sm:$0xff]
                  %629 = vst [vmem:[%s581 + $0xb8] sm:$0xff] %v628
                  %v630 = vld [vmem:[%s580 + $0x180] sm:$0xff]
                  %631 = vst [vmem:[%s581 + $0xc0] sm:$0xff] %v630
                  %v632 = vld [vmem:[%s580 + $0x190] sm:$0xff]
                  %633 = vst [vmem:[%s581 + $0xc8] sm:$0xff] %v632
                  %v634 = vld [vmem:[%s580 + $0x1a0] sm:$0xff]
                  %635 = vst [vmem:[%s581 + $0xd0] sm:$0xff] %v634
                  %v636 = vld [vmem:[%s580 + $0x1b0] sm:$0xff]
                  %637 = vst [vmem:[%s581 + $0xd8] sm:$0xff] %v636
                  %v638 = vld [vmem:[%s580 + $0x1c0] sm:$0xff]
                  %639 = vst [vmem:[%s581 + $0xe0] sm:$0xff] %v638
                  %v640 = vld [vmem:[%s580 + $0x1d0] sm:$0xff]
                  %641 = vst [vmem:[%s581 + $0xe8] sm:$0xff] %v640
                  %v642 = vld [vmem:[%s580 + $0x1e0] sm:$0xff]
                  %643 = vst [vmem:[%s581 + $0xf0] sm:$0xff] %v642
                  %v644 = vld [vmem:[%s580 + $0x1f0] sm:$0xff]
                  %645 = vst [vmem:[%s581 + $0xf8] sm:$0xff] %v644
                  %v646 = vld [vmem:[%s580 + $0x200] sm:$0xff]
                  %647 = vst [vmem:[%s581 + $0x100] sm:$0xff] %v646
                  %v648 = vld [vmem:[%s580 + $0x210] sm:$0xff]
                  %649 = vst [vmem:[%s581 + $0x108] sm:$0xff] %v648
                  %v650 = vld [vmem:[%s580 + $0x220] sm:$0xff]
                  %651 = vst [vmem:[%s581 + $0x110] sm:$0xff] %v650
                  %v652 = vld [vmem:[%s580 + $0x230] sm:$0xff]
                  %653 = vst [vmem:[%s581 + $0x118] sm:$0xff] %v652
                  %v654 = vld [vmem:[%s580 + $0x240] sm:$0xff]
                  %655 = vst [vmem:[%s581 + $0x120] sm:$0xff] %v654
                  %v656 = vld [vmem:[%s580 + $0x250] sm:$0xff]
                  %657 = vst [vmem:[%s581 + $0x128] sm:$0xff] %v656
                  %v658 = vld [vmem:[%s580 + $0x260] sm:$0xff]
                  %659 = vst [vmem:[%s581 + $0x130] sm:$0xff] %v658
                  %v660 = vld [vmem:[%s580 + $0x270] sm:$0xff]
                  %661 = vst [vmem:[%s581 + $0x138] sm:$0xff] %v660
                  %v662 = vld [vmem:[%s580 + $0x280] sm:$0xff]
                  %663 = vst [vmem:[%s581 + $0x140] sm:$0xff] %v662
                  %v664 = vld [vmem:[%s580 + $0x290] sm:$0xff]
                  %665 = vst [vmem:[%s581 + $0x148] sm:$0xff] %v664
                  %v666 = vld [vmem:[%s580 + $0x2a0] sm:$0xff]
                  %667 = vst [vmem:[%s581 + $0x150] sm:$0xff] %v666
                  %v668 = vld [vmem:[%s580 + $0x2b0] sm:$0xff]
                  %669 = vst [vmem:[%s581 + $0x158] sm:$0xff] %v668
                  %v670 = vld [vmem:[%s580 + $0x2c0] sm:$0xff]
                  %671 = vst [vmem:[%s581 + $0x160] sm:$0xff] %v670
                  %v672 = vld [vmem:[%s580 + $0x2d0] sm:$0xff]
                  %673 = vst [vmem:[%s581 + $0x168] sm:$0xff] %v672
                  %v674 = vld [vmem:[%s580 + $0x2e0] sm:$0xff]
                  %675 = vst [vmem:[%s581 + $0x170] sm:$0xff] %v674
                  %v676 = vld [vmem:[%s580 + $0x2f0] sm:$0xff]
                  %677 = vst [vmem:[%s581 + $0x178] sm:$0xff] %v676
                  %v678 = vld [vmem:[%s580 + $0x300] sm:$0xff]
                  %679 = vst [vmem:[%s581 + $0x180] sm:$0xff] %v678
                  %v680 = vld [vmem:[%s580 + $0x310] sm:$0xff]
                  %681 = vst [vmem:[%s581 + $0x188] sm:$0xff] %v680
                  %v682 = vld [vmem:[%s580 + $0x320] sm:$0xff]
                  %683 = vst [vmem:[%s581 + $0x190] sm:$0xff] %v682
                  %v684 = vld [vmem:[%s580 + $0x330] sm:$0xff]
                  %685 = vst [vmem:[%s581 + $0x198] sm:$0xff] %v684
                  %v686 = vld [vmem:[%s580 + $0x340] sm:$0xff]
                  %687 = vst [vmem:[%s581 + $0x1a0] sm:$0xff] %v686
                  %v688 = vld [vmem:[%s580 + $0x350] sm:$0xff]
                  %689 = vst [vmem:[%s581 + $0x1a8] sm:$0xff] %v688
                  %v690 = vld [vmem:[%s580 + $0x360] sm:$0xff]
                  %691 = vst [vmem:[%s581 + $0x1b0] sm:$0xff] %v690
                  %v692 = vld [vmem:[%s580 + $0x370] sm:$0xff]
                  %693 = vst [vmem:[%s581 + $0x1b8] sm:$0xff] %v692
                  %v694 = vld [vmem:[%s580 + $0x380] sm:$0xff]
                  %695 = vst [vmem:[%s581 + $0x1c0] sm:$0xff] %v694
                  %v696 = vld [vmem:[%s580 + $0x390] sm:$0xff]
                  %697 = vst [vmem:[%s581 + $0x1c8] sm:$0xff] %v696
                  %v698 = vld [vmem:[%s580 + $0x3a0] sm:$0xff]
                  %699 = vst [vmem:[%s581 + $0x1d0] sm:$0xff] %v698
                  %v700 = vld [vmem:[%s580 + $0x3b0] sm:$0xff]
                  %701 = vst [vmem:[%s581 + $0x1d8] sm:$0xff] %v700
                  %v702 = vld [vmem:[%s580 + $0x3c0] sm:$0xff]
                  %703 = vst [vmem:[%s581 + $0x1e0] sm:$0xff] %v702
                  %v704 = vld [vmem:[%s580 + $0x3d0] sm:$0xff]
                  %705 = vst [vmem:[%s581 + $0x1e8] sm:$0xff] %v704
                  %v706 = vld [vmem:[%s580 + $0x3e0] sm:$0xff]
                  %707 = vst [vmem:[%s581 + $0x1f0] sm:$0xff] %v706
                  %v708 = vld [vmem:[%s580 + $0x3f0] sm:$0xff]
                  %709 = vst [vmem:[%s581 + $0x1f8] sm:$0xff] %v708
                  %v710 = vld [vmem:[%s580 + $0x400] sm:$0xff]
                  %711 = vst [vmem:[%s581 + $0x200] sm:$0xff] %v710
                  %v712 = vld [vmem:[%s580 + $0x410] sm:$0xff]
                  %713 = vst [vmem:[%s581 + $0x208] sm:$0xff] %v712
                  %v714 = vld [vmem:[%s580 + $0x420] sm:$0xff]
                  %715 = vst [vmem:[%s581 + $0x210] sm:$0xff] %v714
                  %v716 = vld [vmem:[%s580 + $0x430] sm:$0xff]
                  %717 = vst [vmem:[%s581 + $0x218] sm:$0xff] %v716
                  %v718 = vld [vmem:[%s580 + $0x440] sm:$0xff]
                  %719 = vst [vmem:[%s581 + $0x220] sm:$0xff] %v718
                  %v720 = vld [vmem:[%s580 + $0x450] sm:$0xff]
                  %721 = vst [vmem:[%s581 + $0x228] sm:$0xff] %v720
                  %v722 = vld [vmem:[%s580 + $0x460] sm:$0xff]
                  %723 = vst [vmem:[%s581 + $0x230] sm:$0xff] %v722
                  %v724 = vld [vmem:[%s580 + $0x470] sm:$0xff]
                  %725 = vst [vmem:[%s581 + $0x238] sm:$0xff] %v724
                  %v726 = vld [vmem:[%s580 + $0x480] sm:$0xff]
                  %727 = vst [vmem:[%s581 + $0x240] sm:$0xff] %v726
                  %v728 = vld [vmem:[%s580 + $0x490] sm:$0xff]
                  %729 = vst [vmem:[%s581 + $0x248] sm:$0xff] %v728
                  %v730 = vld [vmem:[%s580 + $0x4a0] sm:$0xff]
                  %731 = vst [vmem:[%s581 + $0x250] sm:$0xff] %v730
                  %v732 = vld [vmem:[%s580 + $0x4b0] sm:$0xff]
                  %733 = vst [vmem:[%s581 + $0x258] sm:$0xff] %v732
                  %v734 = vld [vmem:[%s580 + $0x4c0] sm:$0xff]
                  %735 = vst [vmem:[%s581 + $0x260] sm:$0xff] %v734
                  %v736 = vld [vmem:[%s580 + $0x4d0] sm:$0xff]
                  %737 = vst [vmem:[%s581 + $0x268] sm:$0xff] %v736
                  %v738 = vld [vmem:[%s580 + $0x4e0] sm:$0xff]
                  %739 = vst [vmem:[%s581 + $0x270] sm:$0xff] %v738
                  %v740 = vld [vmem:[%s580 + $0x4f0] sm:$0xff]
                  %741 = vst [vmem:[%s581 + $0x278] sm:$0xff] %v740
                  %v742 = vld [vmem:[%s580 + $0x500] sm:$0xff]
                  %743 = vst [vmem:[%s581 + $0x280] sm:$0xff] %v742
                  %v744 = vld [vmem:[%s580 + $0x510] sm:$0xff]
                  %745 = vst [vmem:[%s581 + $0x288] sm:$0xff] %v744
                  %v746 = vld [vmem:[%s580 + $0x520] sm:$0xff]
                  %747 = vst [vmem:[%s581 + $0x290] sm:$0xff] %v746
                  %v748 = vld [vmem:[%s580 + $0x530] sm:$0xff]
                  %749 = vst [vmem:[%s581 + $0x298] sm:$0xff] %v748
                  %v750 = vld [vmem:[%s580 + $0x540] sm:$0xff]
                  %751 = vst [vmem:[%s581 + $0x2a0] sm:$0xff] %v750
                  %v752 = vld [vmem:[%s580 + $0x550] sm:$0xff]
                  %753 = vst [vmem:[%s581 + $0x2a8] sm:$0xff] %v752
                  %v754 = vld [vmem:[%s580 + $0x560] sm:$0xff]
                  %755 = vst [vmem:[%s581 + $0x2b0] sm:$0xff] %v754
                  %v756 = vld [vmem:[%s580 + $0x570] sm:$0xff]
                  %757 = vst [vmem:[%s581 + $0x2b8] sm:$0xff] %v756
                  %v758 = vld [vmem:[%s580 + $0x580] sm:$0xff]
                  %759 = vst [vmem:[%s581 + $0x2c0] sm:$0xff] %v758
                  %v760 = vld [vmem:[%s580 + $0x590] sm:$0xff]
                  %761 = vst [vmem:[%s581 + $0x2c8] sm:$0xff] %v760
                  %v762 = vld [vmem:[%s580 + $0x5a0] sm:$0xff]
                  %763 = vst [vmem:[%s581 + $0x2d0] sm:$0xff] %v762
                  %v764 = vld [vmem:[%s580 + $0x5b0] sm:$0xff]
                  %765 = vst [vmem:[%s581 + $0x2d8] sm:$0xff] %v764
                  %v766 = vld [vmem:[%s580 + $0x5c0] sm:$0xff]
                  %767 = vst [vmem:[%s581 + $0x2e0] sm:$0xff] %v766
                  %v768 = vld [vmem:[%s580 + $0x5d0] sm:$0xff]
                  %769 = vst [vmem:[%s581 + $0x2e8] sm:$0xff] %v768
                  %v770 = vld [vmem:[%s580 + $0x5e0] sm:$0xff]
                  %771 = vst [vmem:[%s581 + $0x2f0] sm:$0xff] %v770
                  %v772 = vld [vmem:[%s580 + $0x5f0] sm:$0xff]
                  %773 = vst [vmem:[%s581 + $0x2f8] sm:$0xff] %v772
                  %v774 = vld [vmem:[%s580 + $0x600] sm:$0xff]
                  %775 = vst [vmem:[%s581 + $0x300] sm:$0xff] %v774
                  %v776 = vld [vmem:[%s580 + $0x610] sm:$0xff]
                  %777 = vst [vmem:[%s581 + $0x308] sm:$0xff] %v776
                  %v778 = vld [vmem:[%s580 + $0x620] sm:$0xff]
                  %779 = vst [vmem:[%s581 + $0x310] sm:$0xff] %v778
                  %v780 = vld [vmem:[%s580 + $0x630] sm:$0xff]
                  %781 = vst [vmem:[%s581 + $0x318] sm:$0xff] %v780
                  %v782 = vld [vmem:[%s580 + $0x640] sm:$0xff]
                  %783 = vst [vmem:[%s581 + $0x320] sm:$0xff] %v782
                  %v784 = vld [vmem:[%s580 + $0x650] sm:$0xff]
                  %785 = vst [vmem:[%s581 + $0x328] sm:$0xff] %v784
                  %v786 = vld [vmem:[%s580 + $0x660] sm:$0xff]
                  %787 = vst [vmem:[%s581 + $0x330] sm:$0xff] %v786
                  %v788 = vld [vmem:[%s580 + $0x670] sm:$0xff]
                  %789 = vst [vmem:[%s581 + $0x338] sm:$0xff] %v788
                  %v790 = vld [vmem:[%s580 + $0x680] sm:$0xff]
                  %791 = vst [vmem:[%s581 + $0x340] sm:$0xff] %v790
                  %v792 = vld [vmem:[%s580 + $0x690] sm:$0xff]
                  %793 = vst [vmem:[%s581 + $0x348] sm:$0xff] %v792
                  %v794 = vld [vmem:[%s580 + $0x6a0] sm:$0xff]
                  %795 = vst [vmem:[%s581 + $0x350] sm:$0xff] %v794
                  %v796 = vld [vmem:[%s580 + $0x6b0] sm:$0xff]
                  %797 = vst [vmem:[%s581 + $0x358] sm:$0xff] %v796
                  %v798 = vld [vmem:[%s580 + $0x6c0] sm:$0xff]
                  %799 = vst [vmem:[%s581 + $0x360] sm:$0xff] %v798
                  %v800 = vld [vmem:[%s580 + $0x6d0] sm:$0xff]
                  %801 = vst [vmem:[%s581 + $0x368] sm:$0xff] %v800
                  %v802 = vld [vmem:[%s580 + $0x6e0] sm:$0xff]
                  %803 = vst [vmem:[%s581 + $0x370] sm:$0xff] %v802
                  %v804 = vld [vmem:[%s580 + $0x6f0] sm:$0xff]
                  %805 = vst [vmem:[%s581 + $0x378] sm:$0xff] %v804
                  %v806 = vld [vmem:[%s580 + $0x700] sm:$0xff]
                  %807 = vst [vmem:[%s581 + $0x380] sm:$0xff] %v806
                  %v808 = vld [vmem:[%s580 + $0x710] sm:$0xff]
                  %809 = vst [vmem:[%s581 + $0x388] sm:$0xff] %v808
                  %v810 = vld [vmem:[%s580 + $0x720] sm:$0xff]
                  %811 = vst [vmem:[%s581 + $0x390] sm:$0xff] %v810
                  %v812 = vld [vmem:[%s580 + $0x730] sm:$0xff]
                  %813 = vst [vmem:[%s581 + $0x398] sm:$0xff] %v812
                  %v814 = vld [vmem:[%s580 + $0x740] sm:$0xff]
                  %815 = vst [vmem:[%s581 + $0x3a0] sm:$0xff] %v814
                  %v816 = vld [vmem:[%s580 + $0x750] sm:$0xff]
                  %817 = vst [vmem:[%s581 + $0x3a8] sm:$0xff] %v816
                  %v818 = vld [vmem:[%s580 + $0x760] sm:$0xff]
                  %819 = vst [vmem:[%s581 + $0x3b0] sm:$0xff] %v818
                  %v820 = vld [vmem:[%s580 + $0x770] sm:$0xff]
                  %821 = vst [vmem:[%s581 + $0x3b8] sm:$0xff] %v820
                  %v822 = vld [vmem:[%s580 + $0x780] sm:$0xff]
                  %823 = vst [vmem:[%s581 + $0x3c0] sm:$0xff] %v822
                  %v824 = vld [vmem:[%s580 + $0x790] sm:$0xff]
                  %825 = vst [vmem:[%s581 + $0x3c8] sm:$0xff] %v824
                  %v826 = vld [vmem:[%s580 + $0x7a0] sm:$0xff]
                  %827 = vst [vmem:[%s581 + $0x3d0] sm:$0xff] %v826
                  %v828 = vld [vmem:[%s580 + $0x7b0] sm:$0xff]
                  %829 = vst [vmem:[%s581 + $0x3d8] sm:$0xff] %v828
                  %v830 = vld [vmem:[%s580 + $0x7c0] sm:$0xff]
                  %831 = vst [vmem:[%s581 + $0x3e0] sm:$0xff] %v830
                  %v832 = vld [vmem:[%s580 + $0x7d0] sm:$0xff]
                  %833 = vst [vmem:[%s581 + $0x3e8] sm:$0xff] %v832
                  %v834 = vld [vmem:[%s580 + $0x7e0] sm:$0xff]
                  %835 = vst [vmem:[%s581 + $0x3f0] sm:$0xff] %v834
                  %v836 = vld [vmem:[%s580 + $0x7f0] sm:$0xff]
                  %837 = vst [vmem:[%s581 + $0x3f8] sm:$0xff] %v836
                  %v838 = vld [vmem:[%s580 + $0x800] sm:$0xff]
                  %839 = vst [vmem:[%s581 + $0x400] sm:$0xff] %v838
                  %v840 = vld [vmem:[%s580 + $0x810] sm:$0xff]
                  %841 = vst [vmem:[%s581 + $0x408] sm:$0xff] %v840
                  %v842 = vld [vmem:[%s580 + $0x820] sm:$0xff]
                  %843 = vst [vmem:[%s581 + $0x410] sm:$0xff] %v842
                  %v844 = vld [vmem:[%s580 + $0x830] sm:$0xff]
                  %845 = vst [vmem:[%s581 + $0x418] sm:$0xff] %v844
                  %v846 = vld [vmem:[%s580 + $0x840] sm:$0xff]
                  %847 = vst [vmem:[%s581 + $0x420] sm:$0xff] %v846
                  %v848 = vld [vmem:[%s580 + $0x850] sm:$0xff]
                  %849 = vst [vmem:[%s581 + $0x428] sm:$0xff] %v848
                  %v850 = vld [vmem:[%s580 + $0x860] sm:$0xff]
                  %851 = vst [vmem:[%s581 + $0x430] sm:$0xff] %v850
                  %v852 = vld [vmem:[%s580 + $0x870] sm:$0xff]
                  %853 = vst [vmem:[%s581 + $0x438] sm:$0xff] %v852
                  %v854 = vld [vmem:[%s580 + $0x880] sm:$0xff]
                  %855 = vst [vmem:[%s581 + $0x440] sm:$0xff] %v854
                  %v856 = vld [vmem:[%s580 + $0x890] sm:$0xff]
                  %857 = vst [vmem:[%s581 + $0x448] sm:$0xff] %v856
                  %v858 = vld [vmem:[%s580 + $0x8a0] sm:$0xff]
                  %859 = vst [vmem:[%s581 + $0x450] sm:$0xff] %v858
                  %v860 = vld [vmem:[%s580 + $0x8b0] sm:$0xff]
                  %861 = vst [vmem:[%s581 + $0x458] sm:$0xff] %v860
                  %v862 = vld [vmem:[%s580 + $0x8c0] sm:$0xff]
                  %863 = vst [vmem:[%s581 + $0x460] sm:$0xff] %v862
                  %v864 = vld [vmem:[%s580 + $0x8d0] sm:$0xff]
                  %865 = vst [vmem:[%s581 + $0x468] sm:$0xff] %v864
                  %v866 = vld [vmem:[%s580 + $0x8e0] sm:$0xff]
                  %867 = vst [vmem:[%s581 + $0x470] sm:$0xff] %v866
                  %v868 = vld [vmem:[%s580 + $0x8f0] sm:$0xff]
                  %869 = vst [vmem:[%s581 + $0x478] sm:$0xff] %v868
                  %v870 = vld [vmem:[%s580 + $0x900] sm:$0xff]
                  %871 = vst [vmem:[%s581 + $0x480] sm:$0xff] %v870
                  %v872 = vld [vmem:[%s580 + $0x910] sm:$0xff]
                  %873 = vst [vmem:[%s581 + $0x488] sm:$0xff] %v872
                  %v874 = vld [vmem:[%s580 + $0x920] sm:$0xff]
                  %875 = vst [vmem:[%s581 + $0x490] sm:$0xff] %v874
                  %v876 = vld [vmem:[%s580 + $0x930] sm:$0xff]
                  %877 = vst [vmem:[%s581 + $0x498] sm:$0xff] %v876
                  %v878 = vld [vmem:[%s580 + $0x940] sm:$0xff]
                  %879 = vst [vmem:[%s581 + $0x4a0] sm:$0xff] %v878
                  %v880 = vld [vmem:[%s580 + $0x950] sm:$0xff]
                  %881 = vst [vmem:[%s581 + $0x4a8] sm:$0xff] %v880
                  %v882 = vld [vmem:[%s580 + $0x960] sm:$0xff]
                  %883 = vst [vmem:[%s581 + $0x4b0] sm:$0xff] %v882
                  %v884 = vld [vmem:[%s580 + $0x970] sm:$0xff]
                  %885 = vst [vmem:[%s581 + $0x4b8] sm:$0xff] %v884
                  %v886 = vld [vmem:[%s580 + $0x980] sm:$0xff]
                  %887 = vst [vmem:[%s581 + $0x4c0] sm:$0xff] %v886
                  %v888 = vld [vmem:[%s580 + $0x990] sm:$0xff]
                  %889 = vst [vmem:[%s581 + $0x4c8] sm:$0xff] %v888
                  %v890 = vld [vmem:[%s580 + $0x9a0] sm:$0xff]
                  %891 = vst [vmem:[%s581 + $0x4d0] sm:$0xff] %v890
                  %v892 = vld [vmem:[%s580 + $0x9b0] sm:$0xff]
                  %893 = vst [vmem:[%s581 + $0x4d8] sm:$0xff] %v892
                  %v894 = vld [vmem:[%s580 + $0x9c0] sm:$0xff]
                  %895 = vst [vmem:[%s581 + $0x4e0] sm:$0xff] %v894
                  %v896 = vld [vmem:[%s580 + $0x9d0] sm:$0xff]
                  %897 = vst [vmem:[%s581 + $0x4e8] sm:$0xff] %v896
                  %v898 = vld [vmem:[%s580 + $0x9e0] sm:$0xff]
                  %899 = vst [vmem:[%s581 + $0x4f0] sm:$0xff] %v898
                  %v900 = vld [vmem:[%s580 + $0x9f0] sm:$0xff]
                  %901 = vst [vmem:[%s581 + $0x4f8] sm:$0xff] %v900
                  %v902 = vld [vmem:[%s580 + $0xa00] sm:$0xff]
                  %903 = vst [vmem:[%s581 + $0x500] sm:$0xff] %v902
                  %v904 = vld [vmem:[%s580 + $0xa10] sm:$0xff]
                  %905 = vst [vmem:[%s581 + $0x508] sm:$0xff] %v904
                  %v906 = vld [vmem:[%s580 + $0xa20] sm:$0xff]
                  %907 = vst [vmem:[%s581 + $0x510] sm:$0xff] %v906
                  %v908 = vld [vmem:[%s580 + $0xa30] sm:$0xff]
                  %909 = vst [vmem:[%s581 + $0x518] sm:$0xff] %v908
                  %v910 = vld [vmem:[%s580 + $0xa40] sm:$0xff]
                  %911 = vst [vmem:[%s581 + $0x520] sm:$0xff] %v910
                  %v912 = vld [vmem:[%s580 + $0xa50] sm:$0xff]
                  %913 = vst [vmem:[%s581 + $0x528] sm:$0xff] %v912
                  %v914 = vld [vmem:[%s580 + $0xa60] sm:$0xff]
                  %915 = vst [vmem:[%s581 + $0x530] sm:$0xff] %v914
                  %v916 = vld [vmem:[%s580 + $0xa70] sm:$0xff]
                  %917 = vst [vmem:[%s581 + $0x538] sm:$0xff] %v916
                  %v918 = vld [vmem:[%s580 + $0xa80] sm:$0xff]
                  %919 = vst [vmem:[%s581 + $0x540] sm:$0xff] %v918
                  %v920 = vld [vmem:[%s580 + $0xa90] sm:$0xff]
                  %921 = vst [vmem:[%s581 + $0x548] sm:$0xff] %v920
                  %v922 = vld [vmem:[%s580 + $0xaa0] sm:$0xff]
                  %923 = vst [vmem:[%s581 + $0x550] sm:$0xff] %v922
                  %v924 = vld [vmem:[%s580 + $0xab0] sm:$0xff]
                  %925 = vst [vmem:[%s581 + $0x558] sm:$0xff] %v924
                  %v926 = vld [vmem:[%s580 + $0xac0] sm:$0xff]
                  %927 = vst [vmem:[%s581 + $0x560] sm:$0xff] %v926
                  %v928 = vld [vmem:[%s580 + $0xad0] sm:$0xff]
                  %929 = vst [vmem:[%s581 + $0x568] sm:$0xff] %v928
                  %v930 = vld [vmem:[%s580 + $0xae0] sm:$0xff]
                  %931 = vst [vmem:[%s581 + $0x570] sm:$0xff] %v930
                  %v932 = vld [vmem:[%s580 + $0xaf0] sm:$0xff]
                  %933 = vst [vmem:[%s581 + $0x578] sm:$0xff] %v932
                  %v934 = vld [vmem:[%s580 + $0xb00] sm:$0xff]
                  %935 = vst [vmem:[%s581 + $0x580] sm:$0xff] %v934
                  %v936 = vld [vmem:[%s580 + $0xb10] sm:$0xff]
                  %937 = vst [vmem:[%s581 + $0x588] sm:$0xff] %v936
                  %v938 = vld [vmem:[%s580 + $0xb20] sm:$0xff]
                  %939 = vst [vmem:[%s581 + $0x590] sm:$0xff] %v938
                  %v940 = vld [vmem:[%s580 + $0xb30] sm:$0xff]
                  %941 = vst [vmem:[%s581 + $0x598] sm:$0xff] %v940
                  %v942 = vld [vmem:[%s580 + $0xb40] sm:$0xff]
                  %943 = vst [vmem:[%s581 + $0x5a0] sm:$0xff] %v942
                  %v944 = vld [vmem:[%s580 + $0xb50] sm:$0xff]
                  %945 = vst [vmem:[%s581 + $0x5a8] sm:$0xff] %v944
                  %v946 = vld [vmem:[%s580 + $0xb60] sm:$0xff]
                  %947 = vst [vmem:[%s581 + $0x5b0] sm:$0xff] %v946
                  %v948 = vld [vmem:[%s580 + $0xb70] sm:$0xff]
                  %949 = vst [vmem:[%s581 + $0x5b8] sm:$0xff] %v948
                  %v950 = vld [vmem:[%s580 + $0xb80] sm:$0xff]
                  %951 = vst [vmem:[%s581 + $0x5c0] sm:$0xff] %v950
                  %v952 = vld [vmem:[%s580 + $0xb90] sm:$0xff]
                  %953 = vst [vmem:[%s581 + $0x5c8] sm:$0xff] %v952
                  %v954 = vld [vmem:[%s580 + $0xba0] sm:$0xff]
                  %955 = vst [vmem:[%s581 + $0x5d0] sm:$0xff] %v954
                  %v956 = vld [vmem:[%s580 + $0xbb0] sm:$0xff]
                  %957 = vst [vmem:[%s581 + $0x5d8] sm:$0xff] %v956
                  %v958 = vld [vmem:[%s580 + $0xbc0] sm:$0xff]
                  %959 = vst [vmem:[%s581 + $0x5e0] sm:$0xff] %v958
                  %v960 = vld [vmem:[%s580 + $0xbd0] sm:$0xff]
                  %961 = vst [vmem:[%s581 + $0x5e8] sm:$0xff] %v960
                  %v962 = vld [vmem:[%s580 + $0xbe0] sm:$0xff]
                  %963 = vst [vmem:[%s581 + $0x5f0] sm:$0xff] %v962
                  %v964 = vld [vmem:[%s580 + $0xbf0] sm:$0xff]
                  %965 = vst [vmem:[%s581 + $0x5f8] sm:$0xff] %v964
                  %v966 = vld [vmem:[%s580 + $0xc00] sm:$0xff]
                  %967 = vst [vmem:[%s581 + $0x600] sm:$0xff] %v966
                  %v968 = vld [vmem:[%s580 + $0xc10] sm:$0xff]
                  %969 = vst [vmem:[%s581 + $0x608] sm:$0xff] %v968
                  %v970 = vld [vmem:[%s580 + $0xc20] sm:$0xff]
                  %971 = vst [vmem:[%s581 + $0x610] sm:$0xff] %v970
                  %v972 = vld [vmem:[%s580 + $0xc30] sm:$0xff]
                  %973 = vst [vmem:[%s581 + $0x618] sm:$0xff] %v972
                $region52: #{cnn_base_forward.7} parent=46 // loop_footer
                  %s579 = sadd.s32 1, %s575
                $region53: #{cnn_base_forward.7} parent=46 // loop_footer_branch
                  %574 = sbr.rel target = $region49
                $region54: #{cnn_base_forward.7} parent=46 // loop_exit
                  _
              $region47: #{cnn_base_forward.7} parent=31 // pred_fallthru
                _
              // Predicated region
              $region55: #{cnn_base_forward.7} parent=31 // pred_check
                _
              $region56: #{cnn_base_forward.7} parent=31 // pred_check_branch
                %975 = sbr.rel target = $region58
              $region57: #{cnn_base_forward.7} parent=31 // pred_region
                _
              $region58: #{cnn_base_forward.7} parent=31 // pred_fallthru
                _
            $region32: #{cnn_base_forward.7} parent=27 // pred_fallthru
              _
            // Predicated region
            $region33: #{cnn_base_forward.7} parent=27 // pred_check
              _
            $region34: #{cnn_base_forward.7} parent=27 // pred_check_branch
              %169 = sbr.rel target = $region36
            $region35: #{cnn_base_forward.7} parent=27 // pred_region
              %s171 = ssub.s32 256, 1
              loop: start=0, step=1, limit=1
              $region37: #{cnn_base_forward.7} parent=35 // loop_pre_header
                _
              $region38: #{cnn_base_forward.7} parent=35 // loop_header
                %s173 = sphi 0, %s177
                %p174 = scmp.ge.s32.totalorder %s173, 1
                %s178 = sphi %s163, %s163
                %s179 = sphi %s160, %s160
              $region39: #{cnn_base_forward.7} parent=35 // loop_header_branch
                %176 = sbr.rel (%p174) target = $region43
              $region40: #{cnn_base_forward.7} parent=35 // loop_body
                %v180 = vld [vmem:[%s178] sm:%s171]
                %181 = vst [vmem:[%s179] sm:%s171] %v180
                %v182 = vld [vmem:[%s178 + $0x10] sm:%s171]
                %183 = vst [vmem:[%s179 + $0x8] sm:%s171] %v182
                %v184 = vld [vmem:[%s178 + $0x20] sm:%s171]
                %185 = vst [vmem:[%s179 + $0x10] sm:%s171] %v184
                %v186 = vld [vmem:[%s178 + $0x30] sm:%s171]
                %187 = vst [vmem:[%s179 + $0x18] sm:%s171] %v186
                %v188 = vld [vmem:[%s178 + $0x40] sm:%s171]
                %189 = vst [vmem:[%s179 + $0x20] sm:%s171] %v188
                %v190 = vld [vmem:[%s178 + $0x50] sm:%s171]
                %191 = vst [vmem:[%s179 + $0x28] sm:%s171] %v190
                %v192 = vld [vmem:[%s178 + $0x60] sm:%s171]
                %193 = vst [vmem:[%s179 + $0x30] sm:%s171] %v192
                %v194 = vld [vmem:[%s178 + $0x70] sm:%s171]
                %195 = vst [vmem:[%s179 + $0x38] sm:%s171] %v194
                %v196 = vld [vmem:[%s178 + $0x80] sm:%s171]
                %197 = vst [vmem:[%s179 + $0x40] sm:%s171] %v196
                %v198 = vld [vmem:[%s178 + $0x90] sm:%s171]
                %199 = vst [vmem:[%s179 + $0x48] sm:%s171] %v198
                %v200 = vld [vmem:[%s178 + $0xa0] sm:%s171]
                %201 = vst [vmem:[%s179 + $0x50] sm:%s171] %v200
                %v202 = vld [vmem:[%s178 + $0xb0] sm:%s171]
                %203 = vst [vmem:[%s179 + $0x58] sm:%s171] %v202
                %v204 = vld [vmem:[%s178 + $0xc0] sm:%s171]
                %205 = vst [vmem:[%s179 + $0x60] sm:%s171] %v204
                %v206 = vld [vmem:[%s178 + $0xd0] sm:%s171]
                %207 = vst [vmem:[%s179 + $0x68] sm:%s171] %v206
                %v208 = vld [vmem:[%s178 + $0xe0] sm:%s171]
                %209 = vst [vmem:[%s179 + $0x70] sm:%s171] %v208
                %v210 = vld [vmem:[%s178 + $0xf0] sm:%s171]
                %211 = vst [vmem:[%s179 + $0x78] sm:%s171] %v210
                %v212 = vld [vmem:[%s178 + $0x100] sm:%s171]
                %213 = vst [vmem:[%s179 + $0x80] sm:%s171] %v212
                %v214 = vld [vmem:[%s178 + $0x110] sm:%s171]
                %215 = vst [vmem:[%s179 + $0x88] sm:%s171] %v214
                %v216 = vld [vmem:[%s178 + $0x120] sm:%s171]
                %217 = vst [vmem:[%s179 + $0x90] sm:%s171] %v216
                %v218 = vld [vmem:[%s178 + $0x130] sm:%s171]
                %219 = vst [vmem:[%s179 + $0x98] sm:%s171] %v218
                %v220 = vld [vmem:[%s178 + $0x140] sm:%s171]
                %221 = vst [vmem:[%s179 + $0xa0] sm:%s171] %v220
                %v222 = vld [vmem:[%s178 + $0x150] sm:%s171]
                %223 = vst [vmem:[%s179 + $0xa8] sm:%s171] %v222
                %v224 = vld [vmem:[%s178 + $0x160] sm:%s171]
                %225 = vst [vmem:[%s179 + $0xb0] sm:%s171] %v224
                %v226 = vld [vmem:[%s178 + $0x170] sm:%s171]
                %227 = vst [vmem:[%s179 + $0xb8] sm:%s171] %v226
                %v228 = vld [vmem:[%s178 + $0x180] sm:%s171]
                %229 = vst [vmem:[%s179 + $0xc0] sm:%s171] %v228
                %v230 = vld [vmem:[%s178 + $0x190] sm:%s171]
                %231 = vst [vmem:[%s179 + $0xc8] sm:%s171] %v230
                %v232 = vld [vmem:[%s178 + $0x1a0] sm:%s171]
                %233 = vst [vmem:[%s179 + $0xd0] sm:%s171] %v232
                %v234 = vld [vmem:[%s178 + $0x1b0] sm:%s171]
                %235 = vst [vmem:[%s179 + $0xd8] sm:%s171] %v234
                %v236 = vld [vmem:[%s178 + $0x1c0] sm:%s171]
                %237 = vst [vmem:[%s179 + $0xe0] sm:%s171] %v236
                %v238 = vld [vmem:[%s178 + $0x1d0] sm:%s171]
                %239 = vst [vmem:[%s179 + $0xe8] sm:%s171] %v238
                %v240 = vld [vmem:[%s178 + $0x1e0] sm:%s171]
                %241 = vst [vmem:[%s179 + $0xf0] sm:%s171] %v240
                %v242 = vld [vmem:[%s178 + $0x1f0] sm:%s171]
                %243 = vst [vmem:[%s179 + $0xf8] sm:%s171] %v242
                %v244 = vld [vmem:[%s178 + $0x200] sm:%s171]
                %245 = vst [vmem:[%s179 + $0x100] sm:%s171] %v244
                %v246 = vld [vmem:[%s178 + $0x210] sm:%s171]
                %247 = vst [vmem:[%s179 + $0x108] sm:%s171] %v246
                %v248 = vld [vmem:[%s178 + $0x220] sm:%s171]
                %249 = vst [vmem:[%s179 + $0x110] sm:%s171] %v248
                %v250 = vld [vmem:[%s178 + $0x230] sm:%s171]
                %251 = vst [vmem:[%s179 + $0x118] sm:%s171] %v250
                %v252 = vld [vmem:[%s178 + $0x240] sm:%s171]
                %253 = vst [vmem:[%s179 + $0x120] sm:%s171] %v252
                %v254 = vld [vmem:[%s178 + $0x250] sm:%s171]
                %255 = vst [vmem:[%s179 + $0x128] sm:%s171] %v254
                %v256 = vld [vmem:[%s178 + $0x260] sm:%s171]
                %257 = vst [vmem:[%s179 + $0x130] sm:%s171] %v256
                %v258 = vld [vmem:[%s178 + $0x270] sm:%s171]
                %259 = vst [vmem:[%s179 + $0x138] sm:%s171] %v258
                %v260 = vld [vmem:[%s178 + $0x280] sm:%s171]
                %261 = vst [vmem:[%s179 + $0x140] sm:%s171] %v260
                %v262 = vld [vmem:[%s178 + $0x290] sm:%s171]
                %263 = vst [vmem:[%s179 + $0x148] sm:%s171] %v262
                %v264 = vld [vmem:[%s178 + $0x2a0] sm:%s171]
                %265 = vst [vmem:[%s179 + $0x150] sm:%s171] %v264
                %v266 = vld [vmem:[%s178 + $0x2b0] sm:%s171]
                %267 = vst [vmem:[%s179 + $0x158] sm:%s171] %v266
                %v268 = vld [vmem:[%s178 + $0x2c0] sm:%s171]
                %269 = vst [vmem:[%s179 + $0x160] sm:%s171] %v268
                %v270 = vld [vmem:[%s178 + $0x2d0] sm:%s171]
                %271 = vst [vmem:[%s179 + $0x168] sm:%s171] %v270
                %v272 = vld [vmem:[%s178 + $0x2e0] sm:%s171]
                %273 = vst [vmem:[%s179 + $0x170] sm:%s171] %v272
                %v274 = vld [vmem:[%s178 + $0x2f0] sm:%s171]
                %275 = vst [vmem:[%s179 + $0x178] sm:%s171] %v274
                %v276 = vld [vmem:[%s178 + $0x300] sm:%s171]
                %277 = vst [vmem:[%s179 + $0x180] sm:%s171] %v276
                %v278 = vld [vmem:[%s178 + $0x310] sm:%s171]
                %279 = vst [vmem:[%s179 + $0x188] sm:%s171] %v278
                %v280 = vld [vmem:[%s178 + $0x320] sm:%s171]
                %281 = vst [vmem:[%s179 + $0x190] sm:%s171] %v280
                %v282 = vld [vmem:[%s178 + $0x330] sm:%s171]
                %283 = vst [vmem:[%s179 + $0x198] sm:%s171] %v282
                %v284 = vld [vmem:[%s178 + $0x340] sm:%s171]
                %285 = vst [vmem:[%s179 + $0x1a0] sm:%s171] %v284
                %v286 = vld [vmem:[%s178 + $0x350] sm:%s171]
                %287 = vst [vmem:[%s179 + $0x1a8] sm:%s171] %v286
                %v288 = vld [vmem:[%s178 + $0x360] sm:%s171]
                %289 = vst [vmem:[%s179 + $0x1b0] sm:%s171] %v288
                %v290 = vld [vmem:[%s178 + $0x370] sm:%s171]
                %291 = vst [vmem:[%s179 + $0x1b8] sm:%s171] %v290
                %v292 = vld [vmem:[%s178 + $0x380] sm:%s171]
                %293 = vst [vmem:[%s179 + $0x1c0] sm:%s171] %v292
                %v294 = vld [vmem:[%s178 + $0x390] sm:%s171]
                %295 = vst [vmem:[%s179 + $0x1c8] sm:%s171] %v294
                %v296 = vld [vmem:[%s178 + $0x3a0] sm:%s171]
                %297 = vst [vmem:[%s179 + $0x1d0] sm:%s171] %v296
                %v298 = vld [vmem:[%s178 + $0x3b0] sm:%s171]
                %299 = vst [vmem:[%s179 + $0x1d8] sm:%s171] %v298
                %v300 = vld [vmem:[%s178 + $0x3c0] sm:%s171]
                %301 = vst [vmem:[%s179 + $0x1e0] sm:%s171] %v300
                %v302 = vld [vmem:[%s178 + $0x3d0] sm:%s171]
                %303 = vst [vmem:[%s179 + $0x1e8] sm:%s171] %v302
                %v304 = vld [vmem:[%s178 + $0x3e0] sm:%s171]
                %305 = vst [vmem:[%s179 + $0x1f0] sm:%s171] %v304
                %v306 = vld [vmem:[%s178 + $0x3f0] sm:%s171]
                %307 = vst [vmem:[%s179 + $0x1f8] sm:%s171] %v306
                %v308 = vld [vmem:[%s178 + $0x400] sm:%s171]
                %309 = vst [vmem:[%s179 + $0x200] sm:%s171] %v308
                %v310 = vld [vmem:[%s178 + $0x410] sm:%s171]
                %311 = vst [vmem:[%s179 + $0x208] sm:%s171] %v310
                %v312 = vld [vmem:[%s178 + $0x420] sm:%s171]
                %313 = vst [vmem:[%s179 + $0x210] sm:%s171] %v312
                %v314 = vld [vmem:[%s178 + $0x430] sm:%s171]
                %315 = vst [vmem:[%s179 + $0x218] sm:%s171] %v314
                %v316 = vld [vmem:[%s178 + $0x440] sm:%s171]
                %317 = vst [vmem:[%s179 + $0x220] sm:%s171] %v316
                %v318 = vld [vmem:[%s178 + $0x450] sm:%s171]
                %319 = vst [vmem:[%s179 + $0x228] sm:%s171] %v318
                %v320 = vld [vmem:[%s178 + $0x460] sm:%s171]
                %321 = vst [vmem:[%s179 + $0x230] sm:%s171] %v320
                %v322 = vld [vmem:[%s178 + $0x470] sm:%s171]
                %323 = vst [vmem:[%s179 + $0x238] sm:%s171] %v322
                %v324 = vld [vmem:[%s178 + $0x480] sm:%s171]
                %325 = vst [vmem:[%s179 + $0x240] sm:%s171] %v324
                %v326 = vld [vmem:[%s178 + $0x490] sm:%s171]
                %327 = vst [vmem:[%s179 + $0x248] sm:%s171] %v326
                %v328 = vld [vmem:[%s178 + $0x4a0] sm:%s171]
                %329 = vst [vmem:[%s179 + $0x250] sm:%s171] %v328
                %v330 = vld [vmem:[%s178 + $0x4b0] sm:%s171]
                %331 = vst [vmem:[%s179 + $0x258] sm:%s171] %v330
                %v332 = vld [vmem:[%s178 + $0x4c0] sm:%s171]
                %333 = vst [vmem:[%s179 + $0x260] sm:%s171] %v332
                %v334 = vld [vmem:[%s178 + $0x4d0] sm:%s171]
                %335 = vst [vmem:[%s179 + $0x268] sm:%s171] %v334
                %v336 = vld [vmem:[%s178 + $0x4e0] sm:%s171]
                %337 = vst [vmem:[%s179 + $0x270] sm:%s171] %v336
                %v338 = vld [vmem:[%s178 + $0x4f0] sm:%s171]
                %339 = vst [vmem:[%s179 + $0x278] sm:%s171] %v338
                %v340 = vld [vmem:[%s178 + $0x500] sm:%s171]
                %341 = vst [vmem:[%s179 + $0x280] sm:%s171] %v340
                %v342 = vld [vmem:[%s178 + $0x510] sm:%s171]
                %343 = vst [vmem:[%s179 + $0x288] sm:%s171] %v342
                %v344 = vld [vmem:[%s178 + $0x520] sm:%s171]
                %345 = vst [vmem:[%s179 + $0x290] sm:%s171] %v344
                %v346 = vld [vmem:[%s178 + $0x530] sm:%s171]
                %347 = vst [vmem:[%s179 + $0x298] sm:%s171] %v346
                %v348 = vld [vmem:[%s178 + $0x540] sm:%s171]
                %349 = vst [vmem:[%s179 + $0x2a0] sm:%s171] %v348
                %v350 = vld [vmem:[%s178 + $0x550] sm:%s171]
                %351 = vst [vmem:[%s179 + $0x2a8] sm:%s171] %v350
                %v352 = vld [vmem:[%s178 + $0x560] sm:%s171]
                %353 = vst [vmem:[%s179 + $0x2b0] sm:%s171] %v352
                %v354 = vld [vmem:[%s178 + $0x570] sm:%s171]
                %355 = vst [vmem:[%s179 + $0x2b8] sm:%s171] %v354
                %v356 = vld [vmem:[%s178 + $0x580] sm:%s171]
                %357 = vst [vmem:[%s179 + $0x2c0] sm:%s171] %v356
                %v358 = vld [vmem:[%s178 + $0x590] sm:%s171]
                %359 = vst [vmem:[%s179 + $0x2c8] sm:%s171] %v358
                %v360 = vld [vmem:[%s178 + $0x5a0] sm:%s171]
                %361 = vst [vmem:[%s179 + $0x2d0] sm:%s171] %v360
                %v362 = vld [vmem:[%s178 + $0x5b0] sm:%s171]
                %363 = vst [vmem:[%s179 + $0x2d8] sm:%s171] %v362
                %v364 = vld [vmem:[%s178 + $0x5c0] sm:%s171]
                %365 = vst [vmem:[%s179 + $0x2e0] sm:%s171] %v364
                %v366 = vld [vmem:[%s178 + $0x5d0] sm:%s171]
                %367 = vst [vmem:[%s179 + $0x2e8] sm:%s171] %v366
                %v368 = vld [vmem:[%s178 + $0x5e0] sm:%s171]
                %369 = vst [vmem:[%s179 + $0x2f0] sm:%s171] %v368
                %v370 = vld [vmem:[%s178 + $0x5f0] sm:%s171]
                %371 = vst [vmem:[%s179 + $0x2f8] sm:%s171] %v370
                %v372 = vld [vmem:[%s178 + $0x600] sm:%s171]
                %373 = vst [vmem:[%s179 + $0x300] sm:%s171] %v372
                %v374 = vld [vmem:[%s178 + $0x610] sm:%s171]
                %375 = vst [vmem:[%s179 + $0x308] sm:%s171] %v374
                %v376 = vld [vmem:[%s178 + $0x620] sm:%s171]
                %377 = vst [vmem:[%s179 + $0x310] sm:%s171] %v376
                %v378 = vld [vmem:[%s178 + $0x630] sm:%s171]
                %379 = vst [vmem:[%s179 + $0x318] sm:%s171] %v378
                %v380 = vld [vmem:[%s178 + $0x640] sm:%s171]
                %381 = vst [vmem:[%s179 + $0x320] sm:%s171] %v380
                %v382 = vld [vmem:[%s178 + $0x650] sm:%s171]
                %383 = vst [vmem:[%s179 + $0x328] sm:%s171] %v382
                %v384 = vld [vmem:[%s178 + $0x660] sm:%s171]
                %385 = vst [vmem:[%s179 + $0x330] sm:%s171] %v384
                %v386 = vld [vmem:[%s178 + $0x670] sm:%s171]
                %387 = vst [vmem:[%s179 + $0x338] sm:%s171] %v386
                %v388 = vld [vmem:[%s178 + $0x680] sm:%s171]
                %389 = vst [vmem:[%s179 + $0x340] sm:%s171] %v388
                %v390 = vld [vmem:[%s178 + $0x690] sm:%s171]
                %391 = vst [vmem:[%s179 + $0x348] sm:%s171] %v390
                %v392 = vld [vmem:[%s178 + $0x6a0] sm:%s171]
                %393 = vst [vmem:[%s179 + $0x350] sm:%s171] %v392
                %v394 = vld [vmem:[%s178 + $0x6b0] sm:%s171]
                %395 = vst [vmem:[%s179 + $0x358] sm:%s171] %v394
                %v396 = vld [vmem:[%s178 + $0x6c0] sm:%s171]
                %397 = vst [vmem:[%s179 + $0x360] sm:%s171] %v396
                %v398 = vld [vmem:[%s178 + $0x6d0] sm:%s171]
                %399 = vst [vmem:[%s179 + $0x368] sm:%s171] %v398
                %v400 = vld [vmem:[%s178 + $0x6e0] sm:%s171]
                %401 = vst [vmem:[%s179 + $0x370] sm:%s171] %v400
                %v402 = vld [vmem:[%s178 + $0x6f0] sm:%s171]
                %403 = vst [vmem:[%s179 + $0x378] sm:%s171] %v402
                %v404 = vld [vmem:[%s178 + $0x700] sm:%s171]
                %405 = vst [vmem:[%s179 + $0x380] sm:%s171] %v404
                %v406 = vld [vmem:[%s178 + $0x710] sm:%s171]
                %407 = vst [vmem:[%s179 + $0x388] sm:%s171] %v406
                %v408 = vld [vmem:[%s178 + $0x720] sm:%s171]
                %409 = vst [vmem:[%s179 + $0x390] sm:%s171] %v408
                %v410 = vld [vmem:[%s178 + $0x730] sm:%s171]
                %411 = vst [vmem:[%s179 + $0x398] sm:%s171] %v410
                %v412 = vld [vmem:[%s178 + $0x740] sm:%s171]
                %413 = vst [vmem:[%s179 + $0x3a0] sm:%s171] %v412
                %v414 = vld [vmem:[%s178 + $0x750] sm:%s171]
                %415 = vst [vmem:[%s179 + $0x3a8] sm:%s171] %v414
                %v416 = vld [vmem:[%s178 + $0x760] sm:%s171]
                %417 = vst [vmem:[%s179 + $0x3b0] sm:%s171] %v416
                %v418 = vld [vmem:[%s178 + $0x770] sm:%s171]
                %419 = vst [vmem:[%s179 + $0x3b8] sm:%s171] %v418
                %v420 = vld [vmem:[%s178 + $0x780] sm:%s171]
                %421 = vst [vmem:[%s179 + $0x3c0] sm:%s171] %v420
                %v422 = vld [vmem:[%s178 + $0x790] sm:%s171]
                %423 = vst [vmem:[%s179 + $0x3c8] sm:%s171] %v422
                %v424 = vld [vmem:[%s178 + $0x7a0] sm:%s171]
                %425 = vst [vmem:[%s179 + $0x3d0] sm:%s171] %v424
                %v426 = vld [vmem:[%s178 + $0x7b0] sm:%s171]
                %427 = vst [vmem:[%s179 + $0x3d8] sm:%s171] %v426
                %v428 = vld [vmem:[%s178 + $0x7c0] sm:%s171]
                %429 = vst [vmem:[%s179 + $0x3e0] sm:%s171] %v428
                %v430 = vld [vmem:[%s178 + $0x7d0] sm:%s171]
                %431 = vst [vmem:[%s179 + $0x3e8] sm:%s171] %v430
                %v432 = vld [vmem:[%s178 + $0x7e0] sm:%s171]
                %433 = vst [vmem:[%s179 + $0x3f0] sm:%s171] %v432
                %v434 = vld [vmem:[%s178 + $0x7f0] sm:%s171]
                %435 = vst [vmem:[%s179 + $0x3f8] sm:%s171] %v434
                %v436 = vld [vmem:[%s178 + $0x800] sm:%s171]
                %437 = vst [vmem:[%s179 + $0x400] sm:%s171] %v436
                %v438 = vld [vmem:[%s178 + $0x810] sm:%s171]
                %439 = vst [vmem:[%s179 + $0x408] sm:%s171] %v438
                %v440 = vld [vmem:[%s178 + $0x820] sm:%s171]
                %441 = vst [vmem:[%s179 + $0x410] sm:%s171] %v440
                %v442 = vld [vmem:[%s178 + $0x830] sm:%s171]
                %443 = vst [vmem:[%s179 + $0x418] sm:%s171] %v442
                %v444 = vld [vmem:[%s178 + $0x840] sm:%s171]
                %445 = vst [vmem:[%s179 + $0x420] sm:%s171] %v444
                %v446 = vld [vmem:[%s178 + $0x850] sm:%s171]
                %447 = vst [vmem:[%s179 + $0x428] sm:%s171] %v446
                %v448 = vld [vmem:[%s178 + $0x860] sm:%s171]
                %449 = vst [vmem:[%s179 + $0x430] sm:%s171] %v448
                %v450 = vld [vmem:[%s178 + $0x870] sm:%s171]
                %451 = vst [vmem:[%s179 + $0x438] sm:%s171] %v450
                %v452 = vld [vmem:[%s178 + $0x880] sm:%s171]
                %453 = vst [vmem:[%s179 + $0x440] sm:%s171] %v452
                %v454 = vld [vmem:[%s178 + $0x890] sm:%s171]
                %455 = vst [vmem:[%s179 + $0x448] sm:%s171] %v454
                %v456 = vld [vmem:[%s178 + $0x8a0] sm:%s171]
                %457 = vst [vmem:[%s179 + $0x450] sm:%s171] %v456
                %v458 = vld [vmem:[%s178 + $0x8b0] sm:%s171]
                %459 = vst [vmem:[%s179 + $0x458] sm:%s171] %v458
                %v460 = vld [vmem:[%s178 + $0x8c0] sm:%s171]
                %461 = vst [vmem:[%s179 + $0x460] sm:%s171] %v460
                %v462 = vld [vmem:[%s178 + $0x8d0] sm:%s171]
                %463 = vst [vmem:[%s179 + $0x468] sm:%s171] %v462
                %v464 = vld [vmem:[%s178 + $0x8e0] sm:%s171]
                %465 = vst [vmem:[%s179 + $0x470] sm:%s171] %v464
                %v466 = vld [vmem:[%s178 + $0x8f0] sm:%s171]
                %467 = vst [vmem:[%s179 + $0x478] sm:%s171] %v466
                %v468 = vld [vmem:[%s178 + $0x900] sm:%s171]
                %469 = vst [vmem:[%s179 + $0x480] sm:%s171] %v468
                %v470 = vld [vmem:[%s178 + $0x910] sm:%s171]
                %471 = vst [vmem:[%s179 + $0x488] sm:%s171] %v470
                %v472 = vld [vmem:[%s178 + $0x920] sm:%s171]
                %473 = vst [vmem:[%s179 + $0x490] sm:%s171] %v472
                %v474 = vld [vmem:[%s178 + $0x930] sm:%s171]
                %475 = vst [vmem:[%s179 + $0x498] sm:%s171] %v474
                %v476 = vld [vmem:[%s178 + $0x940] sm:%s171]
                %477 = vst [vmem:[%s179 + $0x4a0] sm:%s171] %v476
                %v478 = vld [vmem:[%s178 + $0x950] sm:%s171]
                %479 = vst [vmem:[%s179 + $0x4a8] sm:%s171] %v478
                %v480 = vld [vmem:[%s178 + $0x960] sm:%s171]
                %481 = vst [vmem:[%s179 + $0x4b0] sm:%s171] %v480
                %v482 = vld [vmem:[%s178 + $0x970] sm:%s171]
                %483 = vst [vmem:[%s179 + $0x4b8] sm:%s171] %v482
                %v484 = vld [vmem:[%s178 + $0x980] sm:%s171]
                %485 = vst [vmem:[%s179 + $0x4c0] sm:%s171] %v484
                %v486 = vld [vmem:[%s178 + $0x990] sm:%s171]
                %487 = vst [vmem:[%s179 + $0x4c8] sm:%s171] %v486
                %v488 = vld [vmem:[%s178 + $0x9a0] sm:%s171]
                %489 = vst [vmem:[%s179 + $0x4d0] sm:%s171] %v488
                %v490 = vld [vmem:[%s178 + $0x9b0] sm:%s171]
                %491 = vst [vmem:[%s179 + $0x4d8] sm:%s171] %v490
                %v492 = vld [vmem:[%s178 + $0x9c0] sm:%s171]
                %493 = vst [vmem:[%s179 + $0x4e0] sm:%s171] %v492
                %v494 = vld [vmem:[%s178 + $0x9d0] sm:%s171]
                %495 = vst [vmem:[%s179 + $0x4e8] sm:%s171] %v494
                %v496 = vld [vmem:[%s178 + $0x9e0] sm:%s171]
                %497 = vst [vmem:[%s179 + $0x4f0] sm:%s171] %v496
                %v498 = vld [vmem:[%s178 + $0x9f0] sm:%s171]
                %499 = vst [vmem:[%s179 + $0x4f8] sm:%s171] %v498
                %v500 = vld [vmem:[%s178 + $0xa00] sm:%s171]
                %501 = vst [vmem:[%s179 + $0x500] sm:%s171] %v500
                %v502 = vld [vmem:[%s178 + $0xa10] sm:%s171]
                %503 = vst [vmem:[%s179 + $0x508] sm:%s171] %v502
                %v504 = vld [vmem:[%s178 + $0xa20] sm:%s171]
                %505 = vst [vmem:[%s179 + $0x510] sm:%s171] %v504
                %v506 = vld [vmem:[%s178 + $0xa30] sm:%s171]
                %507 = vst [vmem:[%s179 + $0x518] sm:%s171] %v506
                %v508 = vld [vmem:[%s178 + $0xa40] sm:%s171]
                %509 = vst [vmem:[%s179 + $0x520] sm:%s171] %v508
                %v510 = vld [vmem:[%s178 + $0xa50] sm:%s171]
                %511 = vst [vmem:[%s179 + $0x528] sm:%s171] %v510
                %v512 = vld [vmem:[%s178 + $0xa60] sm:%s171]
                %513 = vst [vmem:[%s179 + $0x530] sm:%s171] %v512
                %v514 = vld [vmem:[%s178 + $0xa70] sm:%s171]
                %515 = vst [vmem:[%s179 + $0x538] sm:%s171] %v514
                %v516 = vld [vmem:[%s178 + $0xa80] sm:%s171]
                %517 = vst [vmem:[%s179 + $0x540] sm:%s171] %v516
                %v518 = vld [vmem:[%s178 + $0xa90] sm:%s171]
                %519 = vst [vmem:[%s179 + $0x548] sm:%s171] %v518
                %v520 = vld [vmem:[%s178 + $0xaa0] sm:%s171]
                %521 = vst [vmem:[%s179 + $0x550] sm:%s171] %v520
                %v522 = vld [vmem:[%s178 + $0xab0] sm:%s171]
                %523 = vst [vmem:[%s179 + $0x558] sm:%s171] %v522
                %v524 = vld [vmem:[%s178 + $0xac0] sm:%s171]
                %525 = vst [vmem:[%s179 + $0x560] sm:%s171] %v524
                %v526 = vld [vmem:[%s178 + $0xad0] sm:%s171]
                %527 = vst [vmem:[%s179 + $0x568] sm:%s171] %v526
                %v528 = vld [vmem:[%s178 + $0xae0] sm:%s171]
                %529 = vst [vmem:[%s179 + $0x570] sm:%s171] %v528
                %v530 = vld [vmem:[%s178 + $0xaf0] sm:%s171]
                %531 = vst [vmem:[%s179 + $0x578] sm:%s171] %v530
                %v532 = vld [vmem:[%s178 + $0xb00] sm:%s171]
                %533 = vst [vmem:[%s179 + $0x580] sm:%s171] %v532
                %v534 = vld [vmem:[%s178 + $0xb10] sm:%s171]
                %535 = vst [vmem:[%s179 + $0x588] sm:%s171] %v534
                %v536 = vld [vmem:[%s178 + $0xb20] sm:%s171]
                %537 = vst [vmem:[%s179 + $0x590] sm:%s171] %v536
                %v538 = vld [vmem:[%s178 + $0xb30] sm:%s171]
                %539 = vst [vmem:[%s179 + $0x598] sm:%s171] %v538
                %v540 = vld [vmem:[%s178 + $0xb40] sm:%s171]
                %541 = vst [vmem:[%s179 + $0x5a0] sm:%s171] %v540
                %v542 = vld [vmem:[%s178 + $0xb50] sm:%s171]
                %543 = vst [vmem:[%s179 + $0x5a8] sm:%s171] %v542
                %v544 = vld [vmem:[%s178 + $0xb60] sm:%s171]
                %545 = vst [vmem:[%s179 + $0x5b0] sm:%s171] %v544
                %v546 = vld [vmem:[%s178 + $0xb70] sm:%s171]
                %547 = vst [vmem:[%s179 + $0x5b8] sm:%s171] %v546
                %v548 = vld [vmem:[%s178 + $0xb80] sm:%s171]
                %549 = vst [vmem:[%s179 + $0x5c0] sm:%s171] %v548
                %v550 = vld [vmem:[%s178 + $0xb90] sm:%s171]
                %551 = vst [vmem:[%s179 + $0x5c8] sm:%s171] %v550
                %v552 = vld [vmem:[%s178 + $0xba0] sm:%s171]
                %553 = vst [vmem:[%s179 + $0x5d0] sm:%s171] %v552
                %v554 = vld [vmem:[%s178 + $0xbb0] sm:%s171]
                %555 = vst [vmem:[%s179 + $0x5d8] sm:%s171] %v554
                %v556 = vld [vmem:[%s178 + $0xbc0] sm:%s171]
                %557 = vst [vmem:[%s179 + $0x5e0] sm:%s171] %v556
                %v558 = vld [vmem:[%s178 + $0xbd0] sm:%s171]
                %559 = vst [vmem:[%s179 + $0x5e8] sm:%s171] %v558
                %v560 = vld [vmem:[%s178 + $0xbe0] sm:%s171]
                %561 = vst [vmem:[%s179 + $0x5f0] sm:%s171] %v560
                %v562 = vld [vmem:[%s178 + $0xbf0] sm:%s171]
                %563 = vst [vmem:[%s179 + $0x5f8] sm:%s171] %v562
                %v564 = vld [vmem:[%s178 + $0xc00] sm:%s171]
                %565 = vst [vmem:[%s179 + $0x600] sm:%s171] %v564
                %v566 = vld [vmem:[%s178 + $0xc10] sm:%s171]
                %567 = vst [vmem:[%s179 + $0x608] sm:%s171] %v566
                %v568 = vld [vmem:[%s178 + $0xc20] sm:%s171]
                %569 = vst [vmem:[%s179 + $0x610] sm:%s171] %v568
                %v570 = vld [vmem:[%s178 + $0xc30] sm:%s171]
                %571 = vst [vmem:[%s179 + $0x618] sm:%s171] %v570
              $region41: #{cnn_base_forward.7} parent=35 // loop_footer
                %s177 = sadd.s32 1, %s173
              $region42: #{cnn_base_forward.7} parent=35 // loop_footer_branch
                %172 = sbr.rel target = $region38
              $region43: #{cnn_base_forward.7} parent=35 // loop_exit
                _
            $region36: #{cnn_base_forward.7} parent=27 // pred_fallthru
              _
          $region28: #{cnn_base_forward.7} parent=23 // pred_fallthru
            _
          %976 = vnop
        $region24: #{cnn_base_forward.7} parent=19 // pred_fallthru
          _
        // Predicated region
        $region59: #{cnn_base_forward.7} parent=19 // pred_check
          %p977 = pneg %p93
        $region60: #{cnn_base_forward.7} parent=19 // pred_check_branch
          %979 = sbr.rel (%p977) target = $region62
        $region61: #{cnn_base_forward.7} parent=19 // pred_region
          %s980 = smul.u32 2, %s17
          %p981 = scmp.lt.s32.totalorder %s980, 3
          %s982 = scalar_select %p981, %s980, 3
          %s983 = scalar_lea.vmem %s2, %s982
          %s984 = smul.u32 2, %s17
        $region62: #{cnn_base_forward.7} parent=19 // pred_fallthru
          _
      $region20: #{cnn_base_forward.7} parent=5 // pred_fallthru
        _
      %p985 = scmp.le.s32.totalorder 1, %s9
      %p986 = scmp.lt.s32.totalorder %s9, 3
      %p987 = pnand %p985, %p986
      %p988 = pneg %p987
      // Predicated region
      $region63: #{cnn_base_forward.7} parent=5 // pred_check
        _
      $region64: #{cnn_base_forward.7} parent=5 // pred_check_branch
        %990 = sbr.rel (%p987) target = $region66
      $region65: #{cnn_base_forward.7} parent=5 // pred_region
        %s991 = ssub.s32 %s9, 1
        %s992 = sand.u32 %s60, 1
        %s993 = sand.u32 %s60, 1
        %s994 = smul.addr %s993, 1568
        %s995 = scalar_lea.vmem [#allocation2], %s994
        // Predicated region
        $region67: #{cnn_base_forward.7} parent=65 // pred_check
          %p996 = pneg %p73
        $region68: #{cnn_base_forward.7} parent=65 // pred_check_branch
          %998 = sbr.rel (%p996) target = $region70
        $region69: #{cnn_base_forward.7} parent=65 // pred_region
          _
        $region70: #{cnn_base_forward.7} parent=65 // pred_fallthru
          _
        %p999 = scmp.lt.s32.totalorder %s18, 0
        %s1000 = scalar_select %p999, %s18, 0
        %s1001 = smul.addr %s1000, 13
        %s1002 = smul.addr %s1001, 4
        %s1003 = scalar_lea.vmem %s0, %s1002
        %p1004 = pneg %p47
        %p1005 = pneg %p44
        %s1006 = sand.u32 %s60, 1
        %s1007 = sand.u32 %s60, 1
        %s1008 = smul.addr %s1007, 1568
        %s1009 = scalar_lea.vmem [#allocation2], %s1008
        %p1010 = pneg %p73
        %p1011 = pneg %p70
        %s1012 = smul.u32 2, %s19
        %p1013 = scmp.lt.s32.totalorder %s1012, 3
        %s1014 = scalar_select %p1013, %s1012, 3
        %s1015 = scalar_lea.vmem %s2, %s1014
        %p1016 = pneg %p99
        %p1017 = pneg %p96
        %p1018 = pneg %p127
        %p1019 = pneg %p124
        %s1020 = smul.u32 2, %s19
        %p1021 = scmp.lt.s32.totalorder %s18, 0
        %s1022 = scalar_select %p1021, %s18, 0
        %p1023 = scmp.lt.s32.totalorder %s1020, 3
        %s1024 = scalar_select %p1023, %s1020, 3
        %s1025 = smul.addr %s1022, 4
        %s1026 = sadd.s32 %s1024, %s1025
        %s1027 = smul.addr %s1026, 8
        %s1028 = scalar_lea.vmem %s3, %s1027
        %p1029 = scmp.lt.s32.totalorder %s18, 0
        %s1030 = scalar_select %p1029, %s18, 0
        %s1031 = smul.addr %s1030, 13
        %s1032 = smul.addr %s1031, 4
        %s1033 = scalar_lea.vmem %s0, %s1032
        %s1034 = smul.u32 2, %s19
        %s1035 = smul.u32 2, %s19
        %p1036 = scmp.lt.s32.totalorder %s1035, 3
        %s1037 = scalar_select %p1036, %s1035, 3
        %s1038 = scalar_lea.vmem %s2, %s1037
        %s1039 = smul.u32 2, %s19
        %s1040 = smul.u32 2, %s19
        %p1041 = scmp.lt.s32.totalorder %s18, 0
        %s1042 = scalar_select %p1041, %s18, 0
        %p1043 = scmp.lt.s32.totalorder %s1040, 3
        %s1044 = scalar_select %p1043, %s1040, 3
        %s1045 = smul.addr %s1042, 4
        %s1046 = sadd.s32 %s1044, %s1045
        %s1047 = smul.addr %s1046, 8
        %s1048 = scalar_lea.vmem %s3, %s1047
        %s1049 = smul.u32 2, %s19
        %v1051 = vld [vmem:[%s1033] sm:$0xff]
        %v1052 = vld [vmem:[%s1033 + $0x8] sm:$0xff]
        %v1053 = vld [vmem:[%s1033 + $0x10] sm:$0xff]
        %v1054 = vld [vmem:[%s1033 + $0x18] sm:$0xff]
        %v1055 = vld [vmem:[%s1033 + $0x20] sm:$0xff]
        %v1056 = vld [vmem:[%s1033 + $0x28] sm:$0xff]
        %v1057 = vld [vmem:[%s1033 + $0x30] sm:$0xf]
        %v1058 = vld [vmem:[%s995] sm:$0xff]
        %v1059 = vld [vmem:[%s995 + $0x8] sm:$0xff]
        %v1060 = vld [vmem:[%s995 + $0x10] sm:$0xff]
        %v1061 = vld [vmem:[%s995 + $0x18] sm:$0xff]
        %v1062 = vld [vmem:[%s995 + $0x20] sm:$0xff]
        %v1063 = vld [vmem:[%s995 + $0x28] sm:$0xff]
        %v1064 = vld [vmem:[%s995 + $0x30] sm:$0xff]
        %v1065 = vld [vmem:[%s995 + $0x38] sm:$0xff]
        %v1066 = vld [vmem:[%s995 + $0x40] sm:$0xff]
        %v1067 = vld [vmem:[%s995 + $0x48] sm:$0xff]
        %v1068 = vld [vmem:[%s995 + $0x50] sm:$0xff]
        %v1069 = vld [vmem:[%s995 + $0x58] sm:$0xff]
        %v1070 = vld [vmem:[%s995 + $0x60] sm:$0xff]
        %v1071 = vld [vmem:[%s995 + $0x68] sm:$0xff]
        %v1072 = vld [vmem:[%s995 + $0x70] sm:$0xff]
        %v1073 = vld [vmem:[%s995 + $0x78] sm:$0xff]
        %v1074 = vld [vmem:[%s995 + $0x80] sm:$0xff]
        %v1075 = vld [vmem:[%s995 + $0x88] sm:$0xff]
        %v1076 = vld [vmem:[%s995 + $0x90] sm:$0xff]
        %v1077 = vld [vmem:[%s995 + $0x98] sm:$0xff]
        %v1078 = vld [vmem:[%s995 + $0xa0] sm:$0xff]
        %v1079 = vld [vmem:[%s995 + $0xa8] sm:$0xff]
        %v1080 = vld [vmem:[%s995 + $0xb0] sm:$0xff]
        %v1081 = vld [vmem:[%s995 + $0xb8] sm:$0xff]
        %v1082 = vld [vmem:[%s995 + $0xc0] sm:$0xff]
        %v1083 = vld [vmem:[%s995 + $0xc8] sm:$0xff]
        %v1084 = vld [vmem:[%s995 + $0xd0] sm:$0xff]
        %v1085 = vld [vmem:[%s995 + $0xd8] sm:$0xff]
        %v1086 = vld [vmem:[%s995 + $0xe0] sm:$0xff]
        %v1087 = vld [vmem:[%s995 + $0xe8] sm:$0xff]
        %v1088 = vld [vmem:[%s995 + $0xf0] sm:$0xff]
        %v1089 = vld [vmem:[%s995 + $0xf8] sm:$0xff]
        %v1090 = vld [vmem:[%s995 + $0x100] sm:$0xff]
        %v1091 = vld [vmem:[%s995 + $0x108] sm:$0xff]
        %v1092 = vld [vmem:[%s995 + $0x110] sm:$0xff]
        %v1093 = vld [vmem:[%s995 + $0x118] sm:$0xff]
        %v1094 = vld [vmem:[%s995 + $0x120] sm:$0xff]
        %v1095 = vld [vmem:[%s995 + $0x128] sm:$0xff]
        %v1096 = vld [vmem:[%s995 + $0x130] sm:$0xff]
        %v1097 = vld [vmem:[%s995 + $0x138] sm:$0xff]
        %v1098 = vld [vmem:[%s995 + $0x140] sm:$0xff]
        %v1099 = vld [vmem:[%s995 + $0x148] sm:$0xff]
        %v1100 = vld [vmem:[%s995 + $0x150] sm:$0xff]
        %v1101 = vld [vmem:[%s995 + $0x158] sm:$0xff]
        %v1102 = vld [vmem:[%s995 + $0x160] sm:$0xff]
        %v1103 = vld [vmem:[%s995 + $0x168] sm:$0xff]
        %v1104 = vld [vmem:[%s995 + $0x170] sm:$0xff]
        %v1105 = vld [vmem:[%s995 + $0x178] sm:$0xff]
        %v1106 = vld [vmem:[%s995 + $0x180] sm:$0xff]
        %v1107 = vld [vmem:[%s995 + $0x188] sm:$0xff]
        %v1108 = vld [vmem:[%s995 + $0x190] sm:$0xff]
        %v1109 = vld [vmem:[%s995 + $0x198] sm:$0xff]
        %v1110 = vld [vmem:[%s995 + $0x1a0] sm:$0xff]
        %v1111 = vld [vmem:[%s995 + $0x1a8] sm:$0xff]
        %v1112 = vld [vmem:[%s995 + $0x1b0] sm:$0xff]
        %v1113 = vld [vmem:[%s995 + $0x1b8] sm:$0xff]
        %v1114 = vld [vmem:[%s995 + $0x1c0] sm:$0xff]
        %v1115 = vld [vmem:[%s995 + $0x1c8] sm:$0xff]
        %v1116 = vld [vmem:[%s995 + $0x1d0] sm:$0xff]
        %v1117 = vld [vmem:[%s995 + $0x1d8] sm:$0xff]
        %v1118 = vld [vmem:[%s995 + $0x1e0] sm:$0xff]
        %v1119 = vld [vmem:[%s995 + $0x1e8] sm:$0xff]
        %v1120 = vld [vmem:[%s995 + $0x1f0] sm:$0xff]
        %v1121 = vld [vmem:[%s995 + $0x1f8] sm:$0xff]
        %v1122 = vld [vmem:[%s995 + $0x200] sm:$0xff]
        %v1123 = vld [vmem:[%s995 + $0x208] sm:$0xff]
        %v1124 = vld [vmem:[%s995 + $0x210] sm:$0xff]
        %v1125 = vld [vmem:[%s995 + $0x218] sm:$0xff]
        %v1126 = vld [vmem:[%s995 + $0x220] sm:$0xff]
        %v1127 = vld [vmem:[%s995 + $0x228] sm:$0xff]
        %v1128 = vld [vmem:[%s995 + $0x230] sm:$0xff]
        %v1129 = vld [vmem:[%s995 + $0x238] sm:$0xff]
        %v1130 = vld [vmem:[%s995 + $0x240] sm:$0xff]
        %v1131 = vld [vmem:[%s995 + $0x248] sm:$0xff]
        %v1132 = vld [vmem:[%s995 + $0x250] sm:$0xff]
        %v1133 = vld [vmem:[%s995 + $0x258] sm:$0xff]
        %v1134 = vld [vmem:[%s995 + $0x260] sm:$0xff]
        %v1135 = vld [vmem:[%s995 + $0x268] sm:$0xff]
        %v1136 = vld [vmem:[%s995 + $0x270] sm:$0xff]
        %v1137 = vld [vmem:[%s995 + $0x278] sm:$0xff]
        %v1138 = vld [vmem:[%s995 + $0x280] sm:$0xff]
        %v1139 = vld [vmem:[%s995 + $0x288] sm:$0xff]
        %v1140 = vld [vmem:[%s995 + $0x290] sm:$0xff]
        %v1141 = vld [vmem:[%s995 + $0x298] sm:$0xff]
        %v1142 = vld [vmem:[%s995 + $0x2a0] sm:$0xff]
        %v1143 = vld [vmem:[%s995 + $0x2a8] sm:$0xff]
        %v1144 = vld [vmem:[%s995 + $0x2b0] sm:$0xff]
        %v1145 = vld [vmem:[%s995 + $0x2b8] sm:$0xff]
        %v1146 = vld [vmem:[%s995 + $0x2c0] sm:$0xff]
        %v1147 = vld [vmem:[%s995 + $0x2c8] sm:$0xff]
        %v1148 = vld [vmem:[%s995 + $0x2d0] sm:$0xff]
        %v1149 = vld [vmem:[%s995 + $0x2d8] sm:$0xff]
        %v1150 = vld [vmem:[%s995 + $0x2e0] sm:$0xff]
        %v1151 = vld [vmem:[%s995 + $0x2e8] sm:$0xff]
        %v1152 = vld [vmem:[%s995 + $0x2f0] sm:$0xff]
        %v1153 = vld [vmem:[%s995 + $0x2f8] sm:$0xff]
        %v1154 = vld [vmem:[%s995 + $0x300] sm:$0xff]
        %v1155 = vld [vmem:[%s995 + $0x308] sm:$0xff]
        %v1156 = vld [vmem:[%s995 + $0x310] sm:$0xff]
        %v1157 = vld [vmem:[%s995 + $0x318] sm:$0xff]
        %v1158 = vld [vmem:[%s995 + $0x320] sm:$0xff]
        %v1159 = vld [vmem:[%s995 + $0x328] sm:$0xff]
        %v1160 = vld [vmem:[%s995 + $0x330] sm:$0xff]
        %v1161 = vld [vmem:[%s995 + $0x338] sm:$0xff]
        %v1162 = vld [vmem:[%s995 + $0x340] sm:$0xff]
        %v1163 = vld [vmem:[%s995 + $0x348] sm:$0xff]
        %v1164 = vld [vmem:[%s995 + $0x350] sm:$0xff]
        %v1165 = vld [vmem:[%s995 + $0x358] sm:$0xff]
        %v1166 = vld [vmem:[%s995 + $0x360] sm:$0xff]
        %v1167 = vld [vmem:[%s995 + $0x368] sm:$0xff]
        %v1168 = vld [vmem:[%s995 + $0x370] sm:$0xff]
        %v1169 = vld [vmem:[%s995 + $0x378] sm:$0xff]
        %v1170 = vld [vmem:[%s995 + $0x380] sm:$0xff]
        %v1171 = vld [vmem:[%s995 + $0x388] sm:$0xff]
        %v1172 = vld [vmem:[%s995 + $0x390] sm:$0xff]
        %v1173 = vld [vmem:[%s995 + $0x398] sm:$0xff]
        %v1174 = vld [vmem:[%s995 + $0x3a0] sm:$0xff]
        %v1175 = vld [vmem:[%s995 + $0x3a8] sm:$0xff]
        %v1176 = vld [vmem:[%s995 + $0x3b0] sm:$0xff]
        %v1177 = vld [vmem:[%s995 + $0x3b8] sm:$0xff]
        %v1178 = vld [vmem:[%s995 + $0x3c0] sm:$0xff]
        %v1179 = vld [vmem:[%s995 + $0x3c8] sm:$0xff]
        %v1180 = vld [vmem:[%s995 + $0x3d0] sm:$0xff]
        %v1181 = vld [vmem:[%s995 + $0x3d8] sm:$0xff]
        %v1182 = vld [vmem:[%s995 + $0x3e0] sm:$0xff]
        %v1183 = vld [vmem:[%s995 + $0x3e8] sm:$0xff]
        %v1184 = vld [vmem:[%s995 + $0x3f0] sm:$0xff]
        %v1185 = vld [vmem:[%s995 + $0x3f8] sm:$0xff]
        %v1186 = vld [vmem:[%s995 + $0x400] sm:$0xff]
        %v1187 = vld [vmem:[%s995 + $0x408] sm:$0xff]
        %v1188 = vld [vmem:[%s995 + $0x410] sm:$0xff]
        %v1189 = vld [vmem:[%s995 + $0x418] sm:$0xff]
        %v1190 = vld [vmem:[%s995 + $0x420] sm:$0xff]
        %v1191 = vld [vmem:[%s995 + $0x428] sm:$0xff]
        %v1192 = vld [vmem:[%s995 + $0x430] sm:$0xff]
        %v1193 = vld [vmem:[%s995 + $0x438] sm:$0xff]
        %v1194 = vld [vmem:[%s995 + $0x440] sm:$0xff]
        %v1195 = vld [vmem:[%s995 + $0x448] sm:$0xff]
        %v1196 = vld [vmem:[%s995 + $0x450] sm:$0xff]
        %v1197 = vld [vmem:[%s995 + $0x458] sm:$0xff]
        %v1198 = vld [vmem:[%s995 + $0x460] sm:$0xff]
        %v1199 = vld [vmem:[%s995 + $0x468] sm:$0xff]
        %v1200 = vld [vmem:[%s995 + $0x470] sm:$0xff]
        %v1201 = vld [vmem:[%s995 + $0x478] sm:$0xff]
        %v1202 = vld [vmem:[%s995 + $0x480] sm:$0xff]
        %v1203 = vld [vmem:[%s995 + $0x488] sm:$0xff]
        %v1204 = vld [vmem:[%s995 + $0x490] sm:$0xff]
        %v1205 = vld [vmem:[%s995 + $0x498] sm:$0xff]
        %v1206 = vld [vmem:[%s995 + $0x4a0] sm:$0xff]
        %v1207 = vld [vmem:[%s995 + $0x4a8] sm:$0xff]
        %v1208 = vld [vmem:[%s995 + $0x4b0] sm:$0xff]
        %v1209 = vld [vmem:[%s995 + $0x4b8] sm:$0xff]
        %v1210 = vld [vmem:[%s995 + $0x4c0] sm:$0xff]
        %v1211 = vld [vmem:[%s995 + $0x4c8] sm:$0xff]
        %v1212 = vld [vmem:[%s995 + $0x4d0] sm:$0xff]
        %v1213 = vld [vmem:[%s995 + $0x4d8] sm:$0xff]
        %v1214 = vld [vmem:[%s995 + $0x4e0] sm:$0xff]
        %v1215 = vld [vmem:[%s995 + $0x4e8] sm:$0xff]
        %v1216 = vld [vmem:[%s995 + $0x4f0] sm:$0xff]
        %v1217 = vld [vmem:[%s995 + $0x4f8] sm:$0xff]
        %v1218 = vld [vmem:[%s995 + $0x500] sm:$0xff]
        %v1219 = vld [vmem:[%s995 + $0x508] sm:$0xff]
        %v1220 = vld [vmem:[%s995 + $0x510] sm:$0xff]
        %v1221 = vld [vmem:[%s995 + $0x518] sm:$0xff]
        %v1222 = vld [vmem:[%s995 + $0x520] sm:$0xff]
        %v1223 = vld [vmem:[%s995 + $0x528] sm:$0xff]
        %v1224 = vld [vmem:[%s995 + $0x530] sm:$0xff]
        %v1225 = vld [vmem:[%s995 + $0x538] sm:$0xff]
        %v1226 = vld [vmem:[%s995 + $0x540] sm:$0xff]
        %v1227 = vld [vmem:[%s995 + $0x548] sm:$0xff]
        %v1228 = vld [vmem:[%s995 + $0x550] sm:$0xff]
        %v1229 = vld [vmem:[%s995 + $0x558] sm:$0xff]
        %v1230 = vld [vmem:[%s995 + $0x560] sm:$0xff]
        %v1231 = vld [vmem:[%s995 + $0x568] sm:$0xff]
        %v1232 = vld [vmem:[%s995 + $0x570] sm:$0xff]
        %v1233 = vld [vmem:[%s995 + $0x578] sm:$0xff]
        %v1234 = vld [vmem:[%s995 + $0x580] sm:$0xff]
        %v1235 = vld [vmem:[%s995 + $0x588] sm:$0xff]
        %v1236 = vld [vmem:[%s995 + $0x590] sm:$0xff]
        %v1237 = vld [vmem:[%s995 + $0x598] sm:$0xff]
        %v1238 = vld [vmem:[%s995 + $0x5a0] sm:$0xff]
        %v1239 = vld [vmem:[%s995 + $0x5a8] sm:$0xff]
        %v1240 = vld [vmem:[%s995 + $0x5b0] sm:$0xff]
        %v1241 = vld [vmem:[%s995 + $0x5b8] sm:$0xff]
        %v1242 = vld [vmem:[%s995 + $0x5c0] sm:$0xff]
        %v1243 = vld [vmem:[%s995 + $0x5c8] sm:$0xff]
        %v1244 = vld [vmem:[%s995 + $0x5d0] sm:$0xff]
        %v1245 = vld [vmem:[%s995 + $0x5d8] sm:$0xff]
        %v1246 = vld [vmem:[%s995 + $0x5e0] sm:$0xff]
        %v1247 = vld [vmem:[%s995 + $0x5e8] sm:$0xff]
        %v1248 = vld [vmem:[%s995 + $0x5f0] sm:$0xff]
        %v1249 = vld [vmem:[%s995 + $0x5f8] sm:$0xff]
        %v1250 = vld [vmem:[%s995 + $0x600] sm:$0xff]
        %v1251 = vld [vmem:[%s995 + $0x608] sm:$0xff]
        %v1252 = vld [vmem:[%s995 + $0x610] sm:$0xff]
        %v1253 = vld [vmem:[%s995 + $0x618] sm:$0xff]
        %v1254 = vld [vmem:[%s1038] sm:$0x3]
        %v1256 = vlaneseq
        %v1257 = vshrl.u32 %v1256, 7
        %v1258 = vsub.s32 0, %v1257
        %v1259 = vrot.slane %v1254, %v1258
        %v1260 = vlaneseq
        %v1261 = vshrl.u32 %v1260, 7
        %v1262 = vsub.s32 1, %v1261
        %v1263 = vrot.slane %v1254, %v1262
        %v1273 = vunpack.c.l.b16 %v1051
        %v1274 = vunpack.c.h.b16 %v1051
        %v1275 = vunpack.c.l.b16 %v1052
        %v1276 = vunpack.c.h.b16 %v1052
        %v1277 = vunpack.c.l.b16 %v1053
        %v1278 = vunpack.c.h.b16 %v1053
        %v1279 = vunpack.c.l.b16 %v1054
        %v1280 = vunpack.c.h.b16 %v1054
        %v1281 = vunpack.c.l.b16 %v1055
        %v1282 = vunpack.c.h.b16 %v1055
        %v1283 = vunpack.c.l.b16 %v1056
        %v1284 = vunpack.c.h.b16 %v1056
        %v1285 = vunpack.c.l.b16 %v1057
        %v1286 = vpack.c.b16 %v1273, %v1273
        %v1287 = vpack.c.b16 %v1274, %v1274
        %v1288 = vpack.c.b16 %v1275, %v1275
        %v1289 = vpack.c.b16 %v1276, %v1276
        %v1290 = vpack.c.b16 %v1277, %v1277
        %v1291 = vpack.c.b16 %v1278, %v1278
        %v1292 = vpack.c.b16 %v1279, %v1279
        %v1293 = vpack.c.b16 %v1280, %v1280
        %v1294 = vpack.c.b16 %v1281, %v1281
        %v1295 = vpack.c.b16 %v1282, %v1282
        %v1296 = vpack.c.b16 %v1283, %v1283
        %v1297 = vpack.c.b16 %v1284, %v1284
        %v1298 = vpack.c.b16 %v1285, %v1285
        %v1507 = vunpack.c.l.b16 %v1058
        %v1508 = vunpack.c.h.b16 %v1058
        %v1509 = vunpack.c.l.b16 %v1059
        %v1510 = vunpack.c.h.b16 %v1059
        %v1511 = vunpack.c.l.b16 %v1060
        %v1512 = vunpack.c.h.b16 %v1060
        %v1513 = vunpack.c.l.b16 %v1061
        %v1514 = vunpack.c.h.b16 %v1061
        %v1515 = vunpack.c.l.b16 %v1062
        %v1516 = vunpack.c.h.b16 %v1062
        %v1517 = vunpack.c.l.b16 %v1063
        %v1518 = vunpack.c.h.b16 %v1063
        %v1519 = vunpack.c.l.b16 %v1064
        %v1520 = vunpack.c.h.b16 %v1064
        %v1521 = vunpack.c.l.b16 %v1065
        %v1522 = vunpack.c.h.b16 %v1065
        %v1523 = vunpack.c.l.b16 %v1066
        %v1524 = vunpack.c.h.b16 %v1066
        %v1525 = vunpack.c.l.b16 %v1067
        %v1526 = vunpack.c.h.b16 %v1067
        %v1527 = vunpack.c.l.b16 %v1068
        %v1528 = vunpack.c.h.b16 %v1068
        %v1529 = vunpack.c.l.b16 %v1069
        %v1530 = vunpack.c.h.b16 %v1069
        %v1531 = vunpack.c.l.b16 %v1070
        %v1532 = vunpack.c.h.b16 %v1070
        %v1533 = vunpack.c.l.b16 %v1071
        %v1534 = vunpack.c.h.b16 %v1071
        %v1535 = vunpack.c.l.b16 %v1072
        %v1536 = vunpack.c.h.b16 %v1072
        %v1537 = vunpack.c.l.b16 %v1073
        %v1538 = vunpack.c.h.b16 %v1073
        %v1539 = vunpack.c.l.b16 %v1074
        %v1540 = vunpack.c.h.b16 %v1074
        %v1541 = vunpack.c.l.b16 %v1075
        %v1542 = vunpack.c.h.b16 %v1075
        %v1543 = vunpack.c.l.b16 %v1076
        %v1544 = vunpack.c.h.b16 %v1076
        %v1545 = vunpack.c.l.b16 %v1077
        %v1546 = vunpack.c.h.b16 %v1077
        %v1547 = vunpack.c.l.b16 %v1078
        %v1548 = vunpack.c.h.b16 %v1078
        %v1549 = vunpack.c.l.b16 %v1079
        %v1550 = vunpack.c.h.b16 %v1079
        %v1551 = vunpack.c.l.b16 %v1080
        %v1552 = vunpack.c.h.b16 %v1080
        %v1553 = vunpack.c.l.b16 %v1081
        %v1554 = vunpack.c.h.b16 %v1081
        %v1555 = vunpack.c.l.b16 %v1082
        %v1556 = vunpack.c.h.b16 %v1082
        %v1557 = vunpack.c.l.b16 %v1083
        %v1558 = vunpack.c.h.b16 %v1083
        %v1559 = vunpack.c.l.b16 %v1084
        %v1560 = vunpack.c.h.b16 %v1084
        %v1561 = vunpack.c.l.b16 %v1085
        %v1562 = vunpack.c.h.b16 %v1085
        %v1563 = vunpack.c.l.b16 %v1086
        %v1564 = vunpack.c.h.b16 %v1086
        %v1565 = vunpack.c.l.b16 %v1087
        %v1566 = vunpack.c.h.b16 %v1087
        %v1567 = vunpack.c.l.b16 %v1088
        %v1568 = vunpack.c.h.b16 %v1088
        %v1569 = vunpack.c.l.b16 %v1089
        %v1570 = vunpack.c.h.b16 %v1089
        %v1571 = vunpack.c.l.b16 %v1090
        %v1572 = vunpack.c.h.b16 %v1090
        %v1573 = vunpack.c.l.b16 %v1091
        %v1574 = vunpack.c.h.b16 %v1091
        %v1575 = vunpack.c.l.b16 %v1092
        %v1576 = vunpack.c.h.b16 %v1092
        %v1577 = vunpack.c.l.b16 %v1093
        %v1578 = vunpack.c.h.b16 %v1093
        %v1579 = vunpack.c.l.b16 %v1094
        %v1580 = vunpack.c.h.b16 %v1094
        %v1581 = vunpack.c.l.b16 %v1095
        %v1582 = vunpack.c.h.b16 %v1095
        %v1583 = vunpack.c.l.b16 %v1096
        %v1584 = vunpack.c.h.b16 %v1096
        %v1585 = vunpack.c.l.b16 %v1097
        %v1586 = vunpack.c.h.b16 %v1097
        %v1587 = vunpack.c.l.b16 %v1098
        %v1588 = vunpack.c.h.b16 %v1098
        %v1589 = vunpack.c.l.b16 %v1099
        %v1590 = vunpack.c.h.b16 %v1099
        %v1591 = vunpack.c.l.b16 %v1100
        %v1592 = vunpack.c.h.b16 %v1100
        %v1593 = vunpack.c.l.b16 %v1101
        %v1594 = vunpack.c.h.b16 %v1101
        %v1595 = vunpack.c.l.b16 %v1102
        %v1596 = vunpack.c.h.b16 %v1102
        %v1597 = vunpack.c.l.b16 %v1103
        %v1598 = vunpack.c.h.b16 %v1103
        %v1599 = vunpack.c.l.b16 %v1104
        %v1600 = vunpack.c.h.b16 %v1104
        %v1601 = vunpack.c.l.b16 %v1105
        %v1602 = vunpack.c.h.b16 %v1105
        %v1603 = vunpack.c.l.b16 %v1106
        %v1604 = vunpack.c.h.b16 %v1106
        %v1605 = vunpack.c.l.b16 %v1107
        %v1606 = vunpack.c.h.b16 %v1107
        %v1607 = vunpack.c.l.b16 %v1108
        %v1608 = vunpack.c.h.b16 %v1108
        %v1609 = vunpack.c.l.b16 %v1109
        %v1610 = vunpack.c.h.b16 %v1109
        %v1611 = vunpack.c.l.b16 %v1110
        %v1612 = vunpack.c.h.b16 %v1110
        %v1613 = vunpack.c.l.b16 %v1111
        %v1614 = vunpack.c.h.b16 %v1111
        %v1615 = vunpack.c.l.b16 %v1112
        %v1616 = vunpack.c.h.b16 %v1112
        %v1617 = vunpack.c.l.b16 %v1113
        %v1618 = vunpack.c.h.b16 %v1113
        %v1619 = vunpack.c.l.b16 %v1114
        %v1620 = vunpack.c.h.b16 %v1114
        %v1621 = vunpack.c.l.b16 %v1115
        %v1622 = vunpack.c.h.b16 %v1115
        %v1623 = vunpack.c.l.b16 %v1116
        %v1624 = vunpack.c.h.b16 %v1116
        %v1625 = vunpack.c.l.b16 %v1117
        %v1626 = vunpack.c.h.b16 %v1117
        %v1627 = vunpack.c.l.b16 %v1118
        %v1628 = vunpack.c.h.b16 %v1118
        %v1629 = vunpack.c.l.b16 %v1119
        %v1630 = vunpack.c.h.b16 %v1119
        %v1631 = vunpack.c.l.b16 %v1120
        %v1632 = vunpack.c.h.b16 %v1120
        %v1633 = vunpack.c.l.b16 %v1121
        %v1634 = vunpack.c.h.b16 %v1121
        %v1635 = vunpack.c.l.b16 %v1122
        %v1636 = vunpack.c.h.b16 %v1122
        %v1637 = vunpack.c.l.b16 %v1123
        %v1638 = vunpack.c.h.b16 %v1123
        %v1639 = vunpack.c.l.b16 %v1124
        %v1640 = vunpack.c.h.b16 %v1124
        %v1641 = vunpack.c.l.b16 %v1125
        %v1642 = vunpack.c.h.b16 %v1125
        %v1643 = vunpack.c.l.b16 %v1126
        %v1644 = vunpack.c.h.b16 %v1126
        %v1645 = vunpack.c.l.b16 %v1127
        %v1646 = vunpack.c.h.b16 %v1127
        %v1647 = vunpack.c.l.b16 %v1128
        %v1648 = vunpack.c.h.b16 %v1128
        %v1649 = vunpack.c.l.b16 %v1129
        %v1650 = vunpack.c.h.b16 %v1129
        %v1651 = vunpack.c.l.b16 %v1130
        %v1652 = vunpack.c.h.b16 %v1130
        %v1653 = vunpack.c.l.b16 %v1131
        %v1654 = vunpack.c.h.b16 %v1131
        %v1655 = vunpack.c.l.b16 %v1132
        %v1656 = vunpack.c.h.b16 %v1132
        %v1657 = vunpack.c.l.b16 %v1133
        %v1658 = vunpack.c.h.b16 %v1133
        %v1659 = vunpack.c.l.b16 %v1134
        %v1660 = vunpack.c.h.b16 %v1134
        %v1661 = vunpack.c.l.b16 %v1135
        %v1662 = vunpack.c.h.b16 %v1135
        %v1663 = vunpack.c.l.b16 %v1136
        %v1664 = vunpack.c.h.b16 %v1136
        %v1665 = vunpack.c.l.b16 %v1137
        %v1666 = vunpack.c.h.b16 %v1137
        %v1667 = vunpack.c.l.b16 %v1138
        %v1668 = vunpack.c.h.b16 %v1138
        %v1669 = vunpack.c.l.b16 %v1139
        %v1670 = vunpack.c.h.b16 %v1139
        %v1671 = vunpack.c.l.b16 %v1140
        %v1672 = vunpack.c.h.b16 %v1140
        %v1673 = vunpack.c.l.b16 %v1141
        %v1674 = vunpack.c.h.b16 %v1141
        %v1675 = vunpack.c.l.b16 %v1142
        %v1676 = vunpack.c.h.b16 %v1142
        %v1677 = vunpack.c.l.b16 %v1143
        %v1678 = vunpack.c.h.b16 %v1143
        %v1679 = vunpack.c.l.b16 %v1144
        %v1680 = vunpack.c.h.b16 %v1144
        %v1681 = vunpack.c.l.b16 %v1145
        %v1682 = vunpack.c.h.b16 %v1145
        %v1683 = vunpack.c.l.b16 %v1146
        %v1684 = vunpack.c.h.b16 %v1146
        %v1685 = vunpack.c.l.b16 %v1147
        %v1686 = vunpack.c.h.b16 %v1147
        %v1687 = vunpack.c.l.b16 %v1148
        %v1688 = vunpack.c.h.b16 %v1148
        %v1689 = vunpack.c.l.b16 %v1149
        %v1690 = vunpack.c.h.b16 %v1149
        %v1691 = vunpack.c.l.b16 %v1150
        %v1692 = vunpack.c.h.b16 %v1150
        %v1693 = vunpack.c.l.b16 %v1151
        %v1694 = vunpack.c.h.b16 %v1151
        %v1695 = vunpack.c.l.b16 %v1152
        %v1696 = vunpack.c.h.b16 %v1152
        %v1697 = vunpack.c.l.b16 %v1153
        %v1698 = vunpack.c.h.b16 %v1153
        %v1699 = vunpack.c.l.b16 %v1154
        %v1700 = vunpack.c.h.b16 %v1154
        %v1701 = vunpack.c.l.b16 %v1155
        %v1702 = vunpack.c.h.b16 %v1155
        %v1703 = vunpack.c.l.b16 %v1156
        %v1704 = vunpack.c.h.b16 %v1156
        %v1705 = vunpack.c.l.b16 %v1157
        %v1706 = vunpack.c.h.b16 %v1157
        %v1707 = vunpack.c.l.b16 %v1158
        %v1708 = vunpack.c.h.b16 %v1158
        %v1709 = vunpack.c.l.b16 %v1159
        %v1710 = vunpack.c.h.b16 %v1159
        %v1711 = vunpack.c.l.b16 %v1160
        %v1712 = vunpack.c.h.b16 %v1160
        %v1713 = vunpack.c.l.b16 %v1161
        %v1714 = vunpack.c.h.b16 %v1161
        %v1715 = vunpack.c.l.b16 %v1162
        %v1716 = vunpack.c.h.b16 %v1162
        %v1717 = vunpack.c.l.b16 %v1163
        %v1718 = vunpack.c.h.b16 %v1163
        %v1719 = vunpack.c.l.b16 %v1164
        %v1720 = vunpack.c.h.b16 %v1164
        %v1721 = vunpack.c.l.b16 %v1165
        %v1722 = vunpack.c.h.b16 %v1165
        %v1723 = vunpack.c.l.b16 %v1166
        %v1724 = vunpack.c.h.b16 %v1166
        %v1725 = vunpack.c.l.b16 %v1167
        %v1726 = vunpack.c.h.b16 %v1167
        %v1727 = vunpack.c.l.b16 %v1168
        %v1728 = vunpack.c.h.b16 %v1168
        %v1729 = vunpack.c.l.b16 %v1169
        %v1730 = vunpack.c.h.b16 %v1169
        %v1731 = vunpack.c.l.b16 %v1170
        %v1732 = vunpack.c.h.b16 %v1170
        %v1733 = vunpack.c.l.b16 %v1171
        %v1734 = vunpack.c.h.b16 %v1171
        %v1735 = vunpack.c.l.b16 %v1172
        %v1736 = vunpack.c.h.b16 %v1172
        %v1737 = vunpack.c.l.b16 %v1173
        %v1738 = vunpack.c.h.b16 %v1173
        %v1739 = vunpack.c.l.b16 %v1174
        %v1740 = vunpack.c.h.b16 %v1174
        %v1741 = vunpack.c.l.b16 %v1175
        %v1742 = vunpack.c.h.b16 %v1175
        %v1743 = vunpack.c.l.b16 %v1176
        %v1744 = vunpack.c.h.b16 %v1176
        %v1745 = vunpack.c.l.b16 %v1177
        %v1746 = vunpack.c.h.b16 %v1177
        %v1747 = vunpack.c.l.b16 %v1178
        %v1748 = vunpack.c.h.b16 %v1178
        %v1749 = vunpack.c.l.b16 %v1179
        %v1750 = vunpack.c.h.b16 %v1179
        %v1751 = vunpack.c.l.b16 %v1180
        %v1752 = vunpack.c.h.b16 %v1180
        %v1753 = vunpack.c.l.b16 %v1181
        %v1754 = vunpack.c.h.b16 %v1181
        %v1755 = vunpack.c.l.b16 %v1182
        %v1756 = vunpack.c.h.b16 %v1182
        %v1757 = vunpack.c.l.b16 %v1183
        %v1758 = vunpack.c.h.b16 %v1183
        %v1759 = vunpack.c.l.b16 %v1184
        %v1760 = vunpack.c.h.b16 %v1184
        %v1761 = vunpack.c.l.b16 %v1185
        %v1762 = vunpack.c.h.b16 %v1185
        %v1763 = vunpack.c.l.b16 %v1186
        %v1764 = vunpack.c.h.b16 %v1186
        %v1765 = vunpack.c.l.b16 %v1187
        %v1766 = vunpack.c.h.b16 %v1187
        %v1767 = vunpack.c.l.b16 %v1188
        %v1768 = vunpack.c.h.b16 %v1188
        %v1769 = vunpack.c.l.b16 %v1189
        %v1770 = vunpack.c.h.b16 %v1189
        %v1771 = vunpack.c.l.b16 %v1190
        %v1772 = vunpack.c.h.b16 %v1190
        %v1773 = vunpack.c.l.b16 %v1191
        %v1774 = vunpack.c.h.b16 %v1191
        %v1775 = vunpack.c.l.b16 %v1192
        %v1776 = vunpack.c.h.b16 %v1192
        %v1777 = vunpack.c.l.b16 %v1193
        %v1778 = vunpack.c.h.b16 %v1193
        %v1779 = vunpack.c.l.b16 %v1194
        %v1780 = vunpack.c.h.b16 %v1194
        %v1781 = vunpack.c.l.b16 %v1195
        %v1782 = vunpack.c.h.b16 %v1195
        %v1783 = vunpack.c.l.b16 %v1196
        %v1784 = vunpack.c.h.b16 %v1196
        %v1785 = vunpack.c.l.b16 %v1197
        %v1786 = vunpack.c.h.b16 %v1197
        %v1787 = vunpack.c.l.b16 %v1198
        %v1788 = vunpack.c.h.b16 %v1198
        %v1789 = vunpack.c.l.b16 %v1199
        %v1790 = vunpack.c.h.b16 %v1199
        %v1791 = vunpack.c.l.b16 %v1200
        %v1792 = vunpack.c.h.b16 %v1200
        %v1793 = vunpack.c.l.b16 %v1201
        %v1794 = vunpack.c.h.b16 %v1201
        %v1795 = vunpack.c.l.b16 %v1202
        %v1796 = vunpack.c.h.b16 %v1202
        %v1797 = vunpack.c.l.b16 %v1203
        %v1798 = vunpack.c.h.b16 %v1203
        %v1799 = vunpack.c.l.b16 %v1204
        %v1800 = vunpack.c.h.b16 %v1204
        %v1801 = vunpack.c.l.b16 %v1205
        %v1802 = vunpack.c.h.b16 %v1205
        %v1803 = vunpack.c.l.b16 %v1206
        %v1804 = vunpack.c.h.b16 %v1206
        %v1805 = vunpack.c.l.b16 %v1207
        %v1806 = vunpack.c.h.b16 %v1207
        %v1807 = vunpack.c.l.b16 %v1208
        %v1808 = vunpack.c.h.b16 %v1208
        %v1809 = vunpack.c.l.b16 %v1209
        %v1810 = vunpack.c.h.b16 %v1209
        %v1811 = vunpack.c.l.b16 %v1210
        %v1812 = vunpack.c.h.b16 %v1210
        %v1813 = vunpack.c.l.b16 %v1211
        %v1814 = vunpack.c.h.b16 %v1211
        %v1815 = vunpack.c.l.b16 %v1212
        %v1816 = vunpack.c.h.b16 %v1212
        %v1817 = vunpack.c.l.b16 %v1213
        %v1818 = vunpack.c.h.b16 %v1213
        %v1819 = vunpack.c.l.b16 %v1214
        %v1820 = vunpack.c.h.b16 %v1214
        %v1821 = vunpack.c.l.b16 %v1215
        %v1822 = vunpack.c.h.b16 %v1215
        %v1823 = vunpack.c.l.b16 %v1216
        %v1824 = vunpack.c.h.b16 %v1216
        %v1825 = vunpack.c.l.b16 %v1217
        %v1826 = vunpack.c.h.b16 %v1217
        %v1827 = vunpack.c.l.b16 %v1218
        %v1828 = vunpack.c.h.b16 %v1218
        %v1829 = vunpack.c.l.b16 %v1219
        %v1830 = vunpack.c.h.b16 %v1219
        %v1831 = vunpack.c.l.b16 %v1220
        %v1832 = vunpack.c.h.b16 %v1220
        %v1833 = vunpack.c.l.b16 %v1221
        %v1834 = vunpack.c.h.b16 %v1221
        %v1835 = vunpack.c.l.b16 %v1222
        %v1836 = vunpack.c.h.b16 %v1222
        %v1837 = vunpack.c.l.b16 %v1223
        %v1838 = vunpack.c.h.b16 %v1223
        %v1839 = vunpack.c.l.b16 %v1224
        %v1840 = vunpack.c.h.b16 %v1224
        %v1841 = vunpack.c.l.b16 %v1225
        %v1842 = vunpack.c.h.b16 %v1225
        %v1843 = vunpack.c.l.b16 %v1226
        %v1844 = vunpack.c.h.b16 %v1226
        %v1845 = vunpack.c.l.b16 %v1227
        %v1846 = vunpack.c.h.b16 %v1227
        %v1847 = vunpack.c.l.b16 %v1228
        %v1848 = vunpack.c.h.b16 %v1228
        %v1849 = vunpack.c.l.b16 %v1229
        %v1850 = vunpack.c.h.b16 %v1229
        %v1851 = vunpack.c.l.b16 %v1230
        %v1852 = vunpack.c.h.b16 %v1230
        %v1853 = vunpack.c.l.b16 %v1231
        %v1854 = vunpack.c.h.b16 %v1231
        %v1855 = vunpack.c.l.b16 %v1232
        %v1856 = vunpack.c.h.b16 %v1232
        %v1857 = vunpack.c.l.b16 %v1233
        %v1858 = vunpack.c.h.b16 %v1233
        %v1859 = vunpack.c.l.b16 %v1234
        %v1860 = vunpack.c.h.b16 %v1234
        %v1861 = vunpack.c.l.b16 %v1235
        %v1862 = vunpack.c.h.b16 %v1235
        %v1863 = vunpack.c.l.b16 %v1236
        %v1864 = vunpack.c.h.b16 %v1236
        %v1865 = vunpack.c.l.b16 %v1237
        %v1866 = vunpack.c.h.b16 %v1237
        %v1867 = vunpack.c.l.b16 %v1238
        %v1868 = vunpack.c.h.b16 %v1238
        %v1869 = vunpack.c.l.b16 %v1239
        %v1870 = vunpack.c.h.b16 %v1239
        %v1871 = vunpack.c.l.b16 %v1240
        %v1872 = vunpack.c.h.b16 %v1240
        %v1873 = vunpack.c.l.b16 %v1241
        %v1874 = vunpack.c.h.b16 %v1241
        %v1875 = vunpack.c.l.b16 %v1242
        %v1876 = vunpack.c.h.b16 %v1242
        %v1877 = vunpack.c.l.b16 %v1243
        %v1878 = vunpack.c.h.b16 %v1243
        %v1879 = vunpack.c.l.b16 %v1244
        %v1880 = vunpack.c.h.b16 %v1244
        %v1881 = vunpack.c.l.b16 %v1245
        %v1882 = vunpack.c.h.b16 %v1245
        %v1883 = vunpack.c.l.b16 %v1246
        %v1884 = vunpack.c.h.b16 %v1246
        %v1885 = vunpack.c.l.b16 %v1247
        %v1886 = vunpack.c.h.b16 %v1247
        %v1887 = vunpack.c.l.b16 %v1248
        %v1888 = vunpack.c.h.b16 %v1248
        %v1889 = vunpack.c.l.b16 %v1249
        %v1890 = vunpack.c.h.b16 %v1249
        %v1891 = vunpack.c.l.b16 %v1250
        %v1892 = vunpack.c.h.b16 %v1250
        %v1893 = vunpack.c.l.b16 %v1251
        %v1894 = vunpack.c.h.b16 %v1251
        %v1895 = vunpack.c.l.b16 %v1252
        %v1896 = vunpack.c.h.b16 %v1252
        %v1897 = vunpack.c.l.b16 %v1253
        %v1898 = vunpack.c.h.b16 %v1253
        %v1899 = vpack.c.b16 %v1509, %v1507
        %v1900 = vpack.c.b16 %v1510, %v1508
        %v1901 = vpack.c.b16 %v1513, %v1511
        %v1902 = vpack.c.b16 %v1514, %v1512
        %v1903 = vpack.c.b16 %v1517, %v1515
        %v1904 = vpack.c.b16 %v1518, %v1516
        %v1905 = vpack.c.b16 %v1521, %v1519
        %v1906 = vpack.c.b16 %v1522, %v1520
        %v1907 = vpack.c.b16 %v1525, %v1523
        %v1908 = vpack.c.b16 %v1526, %v1524
        %v1909 = vpack.c.b16 %v1529, %v1527
        %v1910 = vpack.c.b16 %v1530, %v1528
        %v1911 = vpack.c.b16 %v1533, %v1531
        %v1912 = vpack.c.b16 %v1534, %v1532
        %v1913 = vpack.c.b16 %v1537, %v1535
        %v1914 = vpack.c.b16 %v1538, %v1536
        %v1915 = vpack.c.b16 %v1541, %v1539
        %v1916 = vpack.c.b16 %v1542, %v1540
        %v1917 = vpack.c.b16 %v1545, %v1543
        %v1918 = vpack.c.b16 %v1546, %v1544
        %v1919 = vpack.c.b16 %v1549, %v1547
        %v1920 = vpack.c.b16 %v1550, %v1548
        %v1921 = vpack.c.b16 %v1553, %v1551
        %v1922 = vpack.c.b16 %v1554, %v1552
        %v1923 = vpack.c.b16 %v1557, %v1555
        %v1924 = vpack.c.b16 %v1558, %v1556
        %v1925 = vpack.c.b16 %v1561, %v1559
        %v1926 = vpack.c.b16 %v1562, %v1560
        %v1927 = vpack.c.b16 %v1565, %v1563
        %v1928 = vpack.c.b16 %v1566, %v1564
        %v1929 = vpack.c.b16 %v1569, %v1567
        %v1930 = vpack.c.b16 %v1570, %v1568
        %v1931 = vpack.c.b16 %v1573, %v1571
        %v1932 = vpack.c.b16 %v1574, %v1572
        %v1933 = vpack.c.b16 %v1577, %v1575
        %v1934 = vpack.c.b16 %v1578, %v1576
        %v1935 = vpack.c.b16 %v1581, %v1579
        %v1936 = vpack.c.b16 %v1582, %v1580
        %v1937 = vpack.c.b16 %v1585, %v1583
        %v1938 = vpack.c.b16 %v1586, %v1584
        %v1939 = vpack.c.b16 %v1589, %v1587
        %v1940 = vpack.c.b16 %v1590, %v1588
        %v1941 = vpack.c.b16 %v1593, %v1591
        %v1942 = vpack.c.b16 %v1594, %v1592
        %v1943 = vpack.c.b16 %v1597, %v1595
        %v1944 = vpack.c.b16 %v1598, %v1596
        %v1945 = vpack.c.b16 %v1601, %v1599
        %v1946 = vpack.c.b16 %v1602, %v1600
        %v1947 = vpack.c.b16 %v1605, %v1603
        %v1948 = vpack.c.b16 %v1606, %v1604
        %v1949 = vpack.c.b16 %v1609, %v1607
        %v1950 = vpack.c.b16 %v1610, %v1608
        %v1951 = vpack.c.b16 %v1613, %v1611
        %v1952 = vpack.c.b16 %v1614, %v1612
        %v1953 = vpack.c.b16 %v1617, %v1615
        %v1954 = vpack.c.b16 %v1618, %v1616
        %v1955 = vpack.c.b16 %v1621, %v1619
        %v1956 = vpack.c.b16 %v1622, %v1620
        %v1957 = vpack.c.b16 %v1625, %v1623
        %v1958 = vpack.c.b16 %v1626, %v1624
        %v1959 = vpack.c.b16 %v1629, %v1627
        %v1960 = vpack.c.b16 %v1630, %v1628
        %v1961 = vpack.c.b16 %v1633, %v1631
        %v1962 = vpack.c.b16 %v1634, %v1632
        %v1963 = vpack.c.b16 %v1637, %v1635
        %v1964 = vpack.c.b16 %v1638, %v1636
        %v1965 = vpack.c.b16 %v1641, %v1639
        %v1966 = vpack.c.b16 %v1642, %v1640
        %v1967 = vpack.c.b16 %v1645, %v1643
        %v1968 = vpack.c.b16 %v1646, %v1644
        %v1969 = vpack.c.b16 %v1649, %v1647
        %v1970 = vpack.c.b16 %v1650, %v1648
        %v1971 = vpack.c.b16 %v1653, %v1651
        %v1972 = vpack.c.b16 %v1654, %v1652
        %v1973 = vpack.c.b16 %v1657, %v1655
        %v1974 = vpack.c.b16 %v1658, %v1656
        %v1975 = vpack.c.b16 %v1661, %v1659
        %v1976 = vpack.c.b16 %v1662, %v1660
        %v1977 = vpack.c.b16 %v1665, %v1663
        %v1978 = vpack.c.b16 %v1666, %v1664
        %v1979 = vpack.c.b16 %v1669, %v1667
        %v1980 = vpack.c.b16 %v1670, %v1668
        %v1981 = vpack.c.b16 %v1673, %v1671
        %v1982 = vpack.c.b16 %v1674, %v1672
        %v1983 = vpack.c.b16 %v1677, %v1675
        %v1984 = vpack.c.b16 %v1678, %v1676
        %v1985 = vpack.c.b16 %v1681, %v1679
        %v1986 = vpack.c.b16 %v1682, %v1680
        %v1987 = vpack.c.b16 %v1685, %v1683
        %v1988 = vpack.c.b16 %v1686, %v1684
        %v1989 = vpack.c.b16 %v1689, %v1687
        %v1990 = vpack.c.b16 %v1690, %v1688
        %v1991 = vpack.c.b16 %v1693, %v1691
        %v1992 = vpack.c.b16 %v1694, %v1692
        %v1993 = vpack.c.b16 %v1697, %v1695
        %v1994 = vpack.c.b16 %v1698, %v1696
        %v1995 = vpack.c.b16 %v1701, %v1699
        %v1996 = vpack.c.b16 %v1702, %v1700
        %v1997 = vpack.c.b16 %v1705, %v1703
        %v1998 = vpack.c.b16 %v1706, %v1704
        %v1999 = vpack.c.b16 %v1709, %v1707
        %v2000 = vpack.c.b16 %v1710, %v1708
        %v2001 = vpack.c.b16 %v1713, %v1711
        %v2002 = vpack.c.b16 %v1714, %v1712
        %v2003 = vpack.c.b16 %v1717, %v1715
        %v2004 = vpack.c.b16 %v1718, %v1716
        %v2005 = vpack.c.b16 %v1721, %v1719
        %v2006 = vpack.c.b16 %v1722, %v1720
        %v2007 = vpack.c.b16 %v1725, %v1723
        %v2008 = vpack.c.b16 %v1726, %v1724
        %v2009 = vpack.c.b16 %v1729, %v1727
        %v2010 = vpack.c.b16 %v1730, %v1728
        %v2011 = vpack.c.b16 %v1733, %v1731
        %v2012 = vpack.c.b16 %v1734, %v1732
        %v2013 = vpack.c.b16 %v1737, %v1735
        %v2014 = vpack.c.b16 %v1738, %v1736
        %v2015 = vpack.c.b16 %v1741, %v1739
        %v2016 = vpack.c.b16 %v1742, %v1740
        %v2017 = vpack.c.b16 %v1745, %v1743
        %v2018 = vpack.c.b16 %v1746, %v1744
        %v2019 = vpack.c.b16 %v1749, %v1747
        %v2020 = vpack.c.b16 %v1750, %v1748
        %v2021 = vpack.c.b16 %v1753, %v1751
        %v2022 = vpack.c.b16 %v1754, %v1752
        %v2023 = vpack.c.b16 %v1757, %v1755
        %v2024 = vpack.c.b16 %v1758, %v1756
        %v2025 = vpack.c.b16 %v1761, %v1759
        %v2026 = vpack.c.b16 %v1762, %v1760
        %v2027 = vpack.c.b16 %v1765, %v1763
        %v2028 = vpack.c.b16 %v1766, %v1764
        %v2029 = vpack.c.b16 %v1769, %v1767
        %v2030 = vpack.c.b16 %v1770, %v1768
        %v2031 = vpack.c.b16 %v1773, %v1771
        %v2032 = vpack.c.b16 %v1774, %v1772
        %v2033 = vpack.c.b16 %v1777, %v1775
        %v2034 = vpack.c.b16 %v1778, %v1776
        %v2035 = vpack.c.b16 %v1781, %v1779
        %v2036 = vpack.c.b16 %v1782, %v1780
        %v2037 = vpack.c.b16 %v1785, %v1783
        %v2038 = vpack.c.b16 %v1786, %v1784
        %v2039 = vpack.c.b16 %v1789, %v1787
        %v2040 = vpack.c.b16 %v1790, %v1788
        %v2041 = vpack.c.b16 %v1793, %v1791
        %v2042 = vpack.c.b16 %v1794, %v1792
        %v2043 = vpack.c.b16 %v1797, %v1795
        %v2044 = vpack.c.b16 %v1798, %v1796
        %v2045 = vpack.c.b16 %v1801, %v1799
        %v2046 = vpack.c.b16 %v1802, %v1800
        %v2047 = vpack.c.b16 %v1805, %v1803
        %v2048 = vpack.c.b16 %v1806, %v1804
        %v2049 = vpack.c.b16 %v1809, %v1807
        %v2050 = vpack.c.b16 %v1810, %v1808
        %v2051 = vpack.c.b16 %v1813, %v1811
        %v2052 = vpack.c.b16 %v1814, %v1812
        %v2053 = vpack.c.b16 %v1817, %v1815
        %v2054 = vpack.c.b16 %v1818, %v1816
        %v2055 = vpack.c.b16 %v1821, %v1819
        %v2056 = vpack.c.b16 %v1822, %v1820
        %v2057 = vpack.c.b16 %v1825, %v1823
        %v2058 = vpack.c.b16 %v1826, %v1824
        %v2059 = vpack.c.b16 %v1829, %v1827
        %v2060 = vpack.c.b16 %v1830, %v1828
        %v2061 = vpack.c.b16 %v1833, %v1831
        %v2062 = vpack.c.b16 %v1834, %v1832
        %v2063 = vpack.c.b16 %v1837, %v1835
        %v2064 = vpack.c.b16 %v1838, %v1836
        %v2065 = vpack.c.b16 %v1841, %v1839
        %v2066 = vpack.c.b16 %v1842, %v1840
        %v2067 = vpack.c.b16 %v1845, %v1843
        %v2068 = vpack.c.b16 %v1846, %v1844
        %v2069 = vpack.c.b16 %v1849, %v1847
        %v2070 = vpack.c.b16 %v1850, %v1848
        %v2071 = vpack.c.b16 %v1853, %v1851
        %v2072 = vpack.c.b16 %v1854, %v1852
        %v2073 = vpack.c.b16 %v1857, %v1855
        %v2074 = vpack.c.b16 %v1858, %v1856
        %v2075 = vpack.c.b16 %v1861, %v1859
        %v2076 = vpack.c.b16 %v1862, %v1860
        %v2077 = vpack.c.b16 %v1865, %v1863
        %v2078 = vpack.c.b16 %v1866, %v1864
        %v2079 = vpack.c.b16 %v1869, %v1867
        %v2080 = vpack.c.b16 %v1870, %v1868
        %v2081 = vpack.c.b16 %v1873, %v1871
        %v2082 = vpack.c.b16 %v1874, %v1872
        %v2083 = vpack.c.b16 %v1877, %v1875
        %v2084 = vpack.c.b16 %v1878, %v1876
        %v2085 = vpack.c.b16 %v1881, %v1879
        %v2086 = vpack.c.b16 %v1882, %v1880
        %v2087 = vpack.c.b16 %v1885, %v1883
        %v2088 = vpack.c.b16 %v1886, %v1884
        %v2089 = vpack.c.b16 %v1889, %v1887
        %v2090 = vpack.c.b16 %v1890, %v1888
        %v2091 = vpack.c.b16 %v1893, %v1891
        %v2092 = vpack.c.b16 %v1894, %v1892
        %v2093 = vpack.c.b16 %v1897, %v1895
        %v2094 = vpack.c.b16 %v1898, %v1896
        %vm2291 = vcmask 261120
        %v2293 = vsel %vm2291, %v1298, 0
        %2295 = vmatprep.subr.bf16.mxu0 %v1914
        %2296 = vmatpush1.bf16.msra.mxu0 %v1913
        %2297 = vmatprep.subr.bf16.mxu0 %v1912
        %2298 = vmatpush1.bf16.msra.mxu0 %v1911
        %2299 = vmatprep.subr.bf16.mxu0 %v1910
        %2300 = vmatpush1.bf16.msra.mxu0 %v1909
        %2301 = vmatprep.subr.bf16.mxu0 %v1908
        %2302 = vmatpush1.bf16.msra.mxu0 %v1907
        %2303 = vmatprep.subr.bf16.mxu0 %v1906
        %2304 = vmatpush1.bf16.msra.mxu0 %v1905
        %2305 = vmatprep.subr.bf16.mxu0 %v1904
        %2306 = vmatpush1.bf16.msra.mxu0 %v1903
        %2307 = vmatprep.subr.bf16.mxu0 %v1902
        %2308 = vmatpush1.bf16.msra.mxu0 %v1901
        %2309 = vmatprep.subr.bf16.mxu0 %v1900
        %2310 = vmatpush1.bf16.msra.mxu0 %v1899
        %2311 = vmatprep.subr.bf16.mxu0 %v1930
        %2312 = vmatpush2.bf16.msra.mxu0 %v1929
        %2313 = vmatprep.subr.bf16.mxu0 %v1928
        %2314 = vmatpush2.bf16.msra.mxu0 %v1927
        %2315 = vmatprep.subr.bf16.mxu0 %v1926
        %2316 = vmatpush2.bf16.msra.mxu0 %v1925
        %2317 = vmatprep.subr.bf16.mxu0 %v1924
        %2318 = vmatpush2.bf16.msra.mxu0 %v1923
        %2319 = vmatprep.subr.bf16.mxu0 %v1922
        %2320 = vmatpush2.bf16.msra.mxu0 %v1921
        %2321 = vmatprep.subr.bf16.mxu0 %v1920
        %2322 = vmatpush2.bf16.msra.mxu0 %v1919
        %2323 = vmatprep.subr.bf16.mxu0 %v1918
        %2324 = vmatpush2.bf16.msra.mxu0 %v1917
        %2325 = vmatprep.subr.bf16.mxu0 %v1916
        %2326 = vmatpush2.bf16.msra.mxu0 %v1915
        %2327 = vmatprep.mubr.bf16.mxu0 %v1287
        %2328 = vmatmul.mubr.bf16.gmra.mxu0 %v1286
        %v2329 = vpop.f32.mrf.mxu0
        %v2330 = vadd.f32 %v1259, %v2329
        %v2331 = vpop.f32.mrf.mxu0
        %v2332 = vadd.f32 %v1263, %v2331
        %v2333 = vpop.f32.mrf.mxu0
        %v2334 = vpop.f32.mrf.mxu0
        %2335 = vdwg.mxu0
        %2336 = vmatprep.subr.bf16.mxu0 %v1946
        %2337 = vmatpush1.bf16.msra.mxu0 %v1945
        %2338 = vmatprep.subr.bf16.mxu0 %v1944
        %2339 = vmatpush1.bf16.msra.mxu0 %v1943
        %2340 = vmatprep.subr.bf16.mxu0 %v1942
        %2341 = vmatpush1.bf16.msra.mxu0 %v1941
        %2342 = vmatprep.subr.bf16.mxu0 %v1940
        %2343 = vmatpush1.bf16.msra.mxu0 %v1939
        %2344 = vmatprep.subr.bf16.mxu0 %v1938
        %2345 = vmatpush1.bf16.msra.mxu0 %v1937
        %2346 = vmatprep.subr.bf16.mxu0 %v1936
        %2347 = vmatpush1.bf16.msra.mxu0 %v1935
        %2348 = vmatprep.subr.bf16.mxu0 %v1934
        %2349 = vmatpush1.bf16.msra.mxu0 %v1933
        %2350 = vmatprep.subr.bf16.mxu0 %v1932
        %2351 = vmatpush1.bf16.msra.mxu0 %v1931
        %2352 = vmatprep.subr.bf16.mxu0 %v1962
        %2353 = vmatpush2.bf16.msra.mxu0 %v1961
        %2354 = vmatprep.subr.bf16.mxu0 %v1960
        %2355 = vmatpush2.bf16.msra.mxu0 %v1959
        %2356 = vmatprep.subr.bf16.mxu0 %v1958
        %2357 = vmatpush2.bf16.msra.mxu0 %v1957
        %2358 = vmatprep.subr.bf16.mxu0 %v1956
        %2359 = vmatpush2.bf16.msra.mxu0 %v1955
        %2360 = vmatprep.subr.bf16.mxu0 %v1954
        %2361 = vmatpush2.bf16.msra.mxu0 %v1953
        %2362 = vmatprep.subr.bf16.mxu0 %v1952
        %2363 = vmatpush2.bf16.msra.mxu0 %v1951
        %2364 = vmatprep.subr.bf16.mxu0 %v1950
        %2365 = vmatpush2.bf16.msra.mxu0 %v1949
        %2366 = vmatprep.subr.bf16.mxu0 %v1948
        %2367 = vmatpush2.bf16.msra.mxu0 %v1947
        %2368 = vmatprep.mubr.bf16.mxu0 %v1289
        %2369 = vmatmul.mubr.bf16.gmra.mxu0 %v1288
        %v2370 = vpop.f32.mrf.mxu0
        %v2371 = vadd.f32 %v2330, %v2370
        %v2372 = vpop.f32.mrf.mxu0
        %v2373 = vadd.f32 %v2332, %v2372
        %v2374 = vpop.f32.mrf.mxu0
        %v2375 = vpop.f32.mrf.mxu0
        %2376 = vdwg.mxu0
        %2377 = vmatprep.subr.bf16.mxu0 %v1978
        %2378 = vmatpush1.bf16.msra.mxu0 %v1977
        %2379 = vmatprep.subr.bf16.mxu0 %v1976
        %2380 = vmatpush1.bf16.msra.mxu0 %v1975
        %2381 = vmatprep.subr.bf16.mxu0 %v1974
        %2382 = vmatpush1.bf16.msra.mxu0 %v1973
        %2383 = vmatprep.subr.bf16.mxu0 %v1972
        %2384 = vmatpush1.bf16.msra.mxu0 %v1971
        %2385 = vmatprep.subr.bf16.mxu0 %v1970
        %2386 = vmatpush1.bf16.msra.mxu0 %v1969
        %2387 = vmatprep.subr.bf16.mxu0 %v1968
        %2388 = vmatpush1.bf16.msra.mxu0 %v1967
        %2389 = vmatprep.subr.bf16.mxu0 %v1966
        %2390 = vmatpush1.bf16.msra.mxu0 %v1965
        %2391 = vmatprep.subr.bf16.mxu0 %v1964
        %2392 = vmatpush1.bf16.msra.mxu0 %v1963
        %2393 = vmatprep.subr.bf16.mxu0 %v1994
        %2394 = vmatpush2.bf16.msra.mxu0 %v1993
        %2395 = vmatprep.subr.bf16.mxu0 %v1992
        %2396 = vmatpush2.bf16.msra.mxu0 %v1991
        %2397 = vmatprep.subr.bf16.mxu0 %v1990
        %2398 = vmatpush2.bf16.msra.mxu0 %v1989
        %2399 = vmatprep.subr.bf16.mxu0 %v1988
        %2400 = vmatpush2.bf16.msra.mxu0 %v1987
        %2401 = vmatprep.subr.bf16.mxu0 %v1986
        %2402 = vmatpush2.bf16.msra.mxu0 %v1985
        %2403 = vmatprep.subr.bf16.mxu0 %v1984
        %2404 = vmatpush2.bf16.msra.mxu0 %v1983
        %2405 = vmatprep.subr.bf16.mxu0 %v1982
        %2406 = vmatpush2.bf16.msra.mxu0 %v1981
        %2407 = vmatprep.subr.bf16.mxu0 %v1980
        %2408 = vmatpush2.bf16.msra.mxu0 %v1979
        %2409 = vmatprep.mubr.bf16.mxu0 %v1291
        %2410 = vmatmul.mubr.bf16.gmra.mxu0 %v1290
        %v2411 = vpop.f32.mrf.mxu0
        %v2412 = vadd.f32 %v2371, %v2411
        %v2413 = vpop.f32.mrf.mxu0
        %v2414 = vadd.f32 %v2373, %v2413
        %v2415 = vpop.f32.mrf.mxu0
        %v2416 = vpop.f32.mrf.mxu0
        %2417 = vdwg.mxu0
        %2418 = vmatprep.subr.bf16.mxu0 %v2010
        %2419 = vmatpush1.bf16.msra.mxu0 %v2009
        %2420 = vmatprep.subr.bf16.mxu0 %v2008
        %2421 = vmatpush1.bf16.msra.mxu0 %v2007
        %2422 = vmatprep.subr.bf16.mxu0 %v2006
        %2423 = vmatpush1.bf16.msra.mxu0 %v2005
        %2424 = vmatprep.subr.bf16.mxu0 %v2004
        %2425 = vmatpush1.bf16.msra.mxu0 %v2003
        %2426 = vmatprep.subr.bf16.mxu0 %v2002
        %2427 = vmatpush1.bf16.msra.mxu0 %v2001
        %2428 = vmatprep.subr.bf16.mxu0 %v2000
        %2429 = vmatpush1.bf16.msra.mxu0 %v1999
        %2430 = vmatprep.subr.bf16.mxu0 %v1998
        %2431 = vmatpush1.bf16.msra.mxu0 %v1997
        %2432 = vmatprep.subr.bf16.mxu0 %v1996
        %2433 = vmatpush1.bf16.msra.mxu0 %v1995
        %2434 = vmatprep.subr.bf16.mxu0 %v2026
        %2435 = vmatpush2.bf16.msra.mxu0 %v2025
        %2436 = vmatprep.subr.bf16.mxu0 %v2024
        %2437 = vmatpush2.bf16.msra.mxu0 %v2023
        %2438 = vmatprep.subr.bf16.mxu0 %v2022
        %2439 = vmatpush2.bf16.msra.mxu0 %v2021
        %2440 = vmatprep.subr.bf16.mxu0 %v2020
        %2441 = vmatpush2.bf16.msra.mxu0 %v2019
        %2442 = vmatprep.subr.bf16.mxu0 %v2018
        %2443 = vmatpush2.bf16.msra.mxu0 %v2017
        %2444 = vmatprep.subr.bf16.mxu0 %v2016
        %2445 = vmatpush2.bf16.msra.mxu0 %v2015
        %2446 = vmatprep.subr.bf16.mxu0 %v2014
        %2447 = vmatpush2.bf16.msra.mxu0 %v2013
        %2448 = vmatprep.subr.bf16.mxu0 %v2012
        %2449 = vmatpush2.bf16.msra.mxu0 %v2011
        %2450 = vmatprep.mubr.bf16.mxu0 %v1293
        %2451 = vmatmul.mubr.bf16.gmra.mxu0 %v1292
        %v2452 = vpop.f32.mrf.mxu0
        %v2453 = vadd.f32 %v2412, %v2452
        %v2454 = vpop.f32.mrf.mxu0
        %v2455 = vadd.f32 %v2414, %v2454
        %v2456 = vpop.f32.mrf.mxu0
        %v2457 = vpop.f32.mrf.mxu0
        %2458 = vdwg.mxu0
        %2459 = vmatprep.subr.bf16.mxu0 %v2042
        %2460 = vmatpush1.bf16.msra.mxu0 %v2041
        %2461 = vmatprep.subr.bf16.mxu0 %v2040
        %2462 = vmatpush1.bf16.msra.mxu0 %v2039
        %2463 = vmatprep.subr.bf16.mxu0 %v2038
        %2464 = vmatpush1.bf16.msra.mxu0 %v2037
        %2465 = vmatprep.subr.bf16.mxu0 %v2036
        %2466 = vmatpush1.bf16.msra.mxu0 %v2035
        %2467 = vmatprep.subr.bf16.mxu0 %v2034
        %2468 = vmatpush1.bf16.msra.mxu0 %v2033
        %2469 = vmatprep.subr.bf16.mxu0 %v2032
        %2470 = vmatpush1.bf16.msra.mxu0 %v2031
        %2471 = vmatprep.subr.bf16.mxu0 %v2030
        %2472 = vmatpush1.bf16.msra.mxu0 %v2029
        %2473 = vmatprep.subr.bf16.mxu0 %v2028
        %2474 = vmatpush1.bf16.msra.mxu0 %v2027
        %2475 = vmatprep.subr.bf16.mxu0 %v2058
        %2476 = vmatpush2.bf16.msra.mxu0 %v2057
        %2477 = vmatprep.subr.bf16.mxu0 %v2056
        %2478 = vmatpush2.bf16.msra.mxu0 %v2055
        %2479 = vmatprep.subr.bf16.mxu0 %v2054
        %2480 = vmatpush2.bf16.msra.mxu0 %v2053
        %2481 = vmatprep.subr.bf16.mxu0 %v2052
        %2482 = vmatpush2.bf16.msra.mxu0 %v2051
        %2483 = vmatprep.subr.bf16.mxu0 %v2050
        %2484 = vmatpush2.bf16.msra.mxu0 %v2049
        %2485 = vmatprep.subr.bf16.mxu0 %v2048
        %2486 = vmatpush2.bf16.msra.mxu0 %v2047
        %2487 = vmatprep.subr.bf16.mxu0 %v2046
        %2488 = vmatpush2.bf16.msra.mxu0 %v2045
        %2489 = vmatprep.subr.bf16.mxu0 %v2044
        %2490 = vmatpush2.bf16.msra.mxu0 %v2043
        %2491 = vmatprep.mubr.bf16.mxu0 %v1295
        %2492 = vmatmul.mubr.bf16.gmra.mxu0 %v1294
        %v2493 = vpop.f32.mrf.mxu0
        %v2494 = vadd.f32 %v2453, %v2493
        %v2495 = vpop.f32.mrf.mxu0
        %v2496 = vadd.f32 %v2455, %v2495
        %v2497 = vpop.f32.mrf.mxu0
        %v2498 = vpop.f32.mrf.mxu0
        %2499 = vdwg.mxu0
        %2500 = vmatprep.subr.bf16.mxu0 %v2074
        %2501 = vmatpush1.bf16.msra.mxu0 %v2073
        %2502 = vmatprep.subr.bf16.mxu0 %v2072
        %2503 = vmatpush1.bf16.msra.mxu0 %v2071
        %2504 = vmatprep.subr.bf16.mxu0 %v2070
        %2505 = vmatpush1.bf16.msra.mxu0 %v2069
        %2506 = vmatprep.subr.bf16.mxu0 %v2068
        %2507 = vmatpush1.bf16.msra.mxu0 %v2067
        %2508 = vmatprep.subr.bf16.mxu0 %v2066
        %2509 = vmatpush1.bf16.msra.mxu0 %v2065
        %2510 = vmatprep.subr.bf16.mxu0 %v2064
        %2511 = vmatpush1.bf16.msra.mxu0 %v2063
        %2512 = vmatprep.subr.bf16.mxu0 %v2062
        %2513 = vmatpush1.bf16.msra.mxu0 %v2061
        %2514 = vmatprep.subr.bf16.mxu0 %v2060
        %2515 = vmatpush1.bf16.msra.mxu0 %v2059
        %2516 = vmatprep.subr.bf16.mxu0 %v2090
        %2517 = vmatpush2.bf16.msra.mxu0 %v2089
        %2518 = vmatprep.subr.bf16.mxu0 %v2088
        %2519 = vmatpush2.bf16.msra.mxu0 %v2087
        %2520 = vmatprep.subr.bf16.mxu0 %v2086
        %2521 = vmatpush2.bf16.msra.mxu0 %v2085
        %2522 = vmatprep.subr.bf16.mxu0 %v2084
        %2523 = vmatpush2.bf16.msra.mxu0 %v2083
        %2524 = vmatprep.subr.bf16.mxu0 %v2082
        %2525 = vmatpush2.bf16.msra.mxu0 %v2081
        %2526 = vmatprep.subr.bf16.mxu0 %v2080
        %2527 = vmatpush2.bf16.msra.mxu0 %v2079
        %2528 = vmatprep.subr.bf16.mxu0 %v2078
        %2529 = vmatpush2.bf16.msra.mxu0 %v2077
        %2530 = vmatprep.subr.bf16.mxu0 %v2076
        %2531 = vmatpush2.bf16.msra.mxu0 %v2075
        %2532 = vmatprep.mubr.bf16.mxu0 %v1297
        %2533 = vmatmul.mubr.bf16.gmra.mxu0 %v1296
        %v2534 = vpop.f32.mrf.mxu0
        %v2535 = vadd.f32 %v2494, %v2534
        %v2536 = vpop.f32.mrf.mxu0
        %v2537 = vadd.f32 %v2496, %v2536
        %v2538 = vpop.f32.mrf.mxu0
        %v2539 = vpop.f32.mrf.mxu0
        %2540 = vdwg.mxu0
        %2541 = vmatprep.subr.bf16.mxu0 0
        %2542 = vmatpush1.bf16.msra.mxu0 0
        %2543 = vmatprep.subr.bf16.mxu0 0
        %2544 = vmatpush1.bf16.msra.mxu0 0
        %2545 = vmatprep.subr.bf16.mxu0 0
        %2546 = vmatpush1.bf16.msra.mxu0 0
        %2547 = vmatprep.subr.bf16.mxu0 0
        %2548 = vmatpush1.bf16.msra.mxu0 0
        %2549 = vmatprep.subr.bf16.mxu0 0
        %2550 = vmatpush1.bf16.msra.mxu0 0
        %2551 = vmatprep.subr.bf16.mxu0 0
        %2552 = vmatpush1.bf16.msra.mxu0 0
        %2553 = vmatprep.subr.bf16.mxu0 %v2094
        %2554 = vmatpush1.bf16.msra.mxu0 %v2093
        %2555 = vmatprep.subr.bf16.mxu0 %v2092
        %2556 = vmatpush1.bf16.msra.mxu0 %v2091
        %2557 = vmatprep.subr.bf16.mxu0 0
        %2558 = vmatpush2.bf16.msra.mxu0 0
        %2559 = vmatprep.subr.bf16.mxu0 0
        %2560 = vmatpush2.bf16.msra.mxu0 0
        %2561 = vmatprep.subr.bf16.mxu0 0
        %2562 = vmatpush2.bf16.msra.mxu0 0
        %2563 = vmatprep.subr.bf16.mxu0 0
        %2564 = vmatpush2.bf16.msra.mxu0 0
        %2565 = vmatprep.subr.bf16.mxu0 0
        %2566 = vmatpush2.bf16.msra.mxu0 0
        %2567 = vmatprep.subr.bf16.mxu0 0
        %2568 = vmatpush2.bf16.msra.mxu0 0
        %2569 = vmatprep.subr.bf16.mxu0 0
        %2570 = vmatpush2.bf16.msra.mxu0 0
        %2571 = vmatprep.subr.bf16.mxu0 0
        %2572 = vmatpush2.bf16.msra.mxu0 0
        %2573 = vmatprep.mubr.bf16.mxu0 0
        %2574 = vmatmul.mubr.bf16.gmra.mxu0 %v2293
        %v2575 = vpop.f32.mrf.mxu0
        %v2576 = vadd.f32 %v2535, %v2575
        %v2577 = vpop.f32.mrf.mxu0
        %v2578 = vadd.f32 %v2537, %v2577
        %v2579 = vpop.f32.mrf.mxu0
        %v2580 = vpop.f32.mrf.mxu0
        %2581 = vdwg.mxu0
        %v2582 = vmax.f32 %v2576, 0.0
        %v2583 = vmax.f32 %v2578, 0.0
        %2584 = vst [vmem:[%s1048] sm:$0xff] %v2582
        %2585 = vst [vmem:[%s1048 + $0x8] sm:$0xff] %v2583
        %s2586 = smul.u32 2, %s19
        %p2587 = scmp.lt.s32.totalorder %s18, 0
        %s2588 = scalar_select %p2587, %s18, 0
        %p2589 = scmp.lt.s32.totalorder %s2586, 3
        %s2590 = scalar_select %p2589, %s2586, 3
        %s2591 = smul.addr %s2588, 4
        %s2592 = sadd.s32 %s2590, %s2591
        %s2593 = smul.addr %s2592, 8
        %s2594 = scalar_lea.vmem %s3, %s2593
        // Predicated region
        $region71: #{cnn_base_forward.7} parent=65 // pred_check
          %p2595 = pneg %p124
        $region72: #{cnn_base_forward.7} parent=65 // pred_check_branch
          %2597 = sbr.rel (%p2595) target = $region74
        $region73: #{cnn_base_forward.7} parent=65 // pred_region
          %s2598 = smul.u32 2, %s19
        $region74: #{cnn_base_forward.7} parent=65 // pred_fallthru
          _
      $region66: #{cnn_base_forward.7} parent=5 // pred_fallthru
        _
      %p2599 = scmp.le.s32.totalorder 2, %s9
      // Predicated region
      $region75: #{cnn_base_forward.7} parent=5 // pred_check
        %p2600 = pneg %p2599
      $region76: #{cnn_base_forward.7} parent=5 // pred_check_branch
        %2602 = sbr.rel (%p2600) target = $region78
      $region77: #{cnn_base_forward.7} parent=5 // pred_region
        %s2603 = ssub.s32 %s9, 2
        // Predicated region
        $region79: #{cnn_base_forward.7} parent=77 // pred_check
          %p2604 = pneg %p130
        $region80: #{cnn_base_forward.7} parent=77 // pred_check_branch
          %2606 = sbr.rel (%p2604) target = $region82
        $region81: #{cnn_base_forward.7} parent=77 // pred_region
          %s2607 = smul.u32 2, %s21
          %p2608 = scmp.lt.s32.totalorder %s20, 0
          %s2609 = scalar_select %p2608, %s20, 0
          %p2610 = scmp.lt.s32.totalorder %s2607, 3
          %s2611 = scalar_select %p2610, %s2607, 3
          %s2612 = smul.addr %s2609, 4
          %s2613 = sadd.s32 %s2611, %s2612
          %s2614 = smul.addr %s2613, 8
          %s2615 = scalar_lea.vmem %s3, %s2614
        $region82: #{cnn_base_forward.7} parent=77 // pred_fallthru
          _
      $region78: #{cnn_base_forward.7} parent=5 // pred_fallthru
        _
    $region6: #{cnn_base_forward.7} parent=1 // loop_footer
      %s13 = sadd.s32 1, %s9
    $region7: #{cnn_base_forward.7} parent=1 // loop_footer_branch
      %8 = sbr.rel target = $region3
    $region8: #{cnn_base_forward.7} parent=1 // loop_exit
      _

</llo_original>
